<compile_context>
chip_gen: v5e
topology: v5e:2x2
jax: 0.10.0
libtpu: 0.0.40
codegen_flags: <defaults>
</compile_context>

<pallas_src>
import jax
import jax.numpy as jnp
from jax.experimental import pallas as pl
from jax.experimental.pallas import tpu as pltpu

_CP = 128  # lane-dense padded per-encoder feature width


# ----------------------- fused q+k backbone kernel ---------------------------

def _backbone_kernel(p_ref, w1_ref, b1_ref, w2_ref, b2_ref, o_ref, pad_ref):
    """One grid step = `nb` images through BOTH encoders (q and k).

    p_ref  : (nb*H*W, 9*Cin)        bf16  conv1 im2col patches (built in XLA)
    w1_ref : (9*Cin, 2*C1)          bf16  [q | k] conv1 weights (out-chan stack)
    b1_ref : (1, 2*C1)              f32
    w2_ref : (9*2*C1, 2*128)        bf16  block-diag conv2 weights, rows per tap
    b2_ref : (1, 2*128)             f32
    o_ref  : (1, nb, 2*128)         f32   [q feats | k feats], global-avg-pooled
    pad_ref: (nb, OH+2, OW+2, 2*C1) f32   scratch (zero border, live interior)
    """
    nb = pad_ref.shape[0]
    oh = pad_ref.shape[1] - 2
    ow = pad_ref.shape[2] - 2
    cc = pad_ref.shape[3]                 # 2*C1
    h = 2 * oh
    cp2 = w2_ref.shape[1]                 # 2*128
    m2 = nb * oh * ow

    # ---- conv1 (3x3, pad=1): one lane-contiguous matmul + bias + ReLU -------
    y1 = jnp.dot(p_ref[...], w1_ref[...], preferred_element_type=jnp.float32)
    y1 = jnp.maximum(y1 + b1_ref[...], 0.0)                     # (nb*H*W, 2*C1)

    # ---- 2x2 max pool entirely on values (no scratch / strided loads) -------
    y1 = jnp.max(y1.reshape(nb * h * ow, 2, cc), axis=1)        # pool along W
    pooled = jnp.max(y1.reshape(nb * oh, 2, ow, cc), axis=1)    # pool along H
    pooled = pooled.reshape(nb, oh, ow, cc)

    # ---- conv2 spatial zero-pad via scratch: zero ONLY the 1-px border ------
    pad_ref[:, 0:1, :, :] = jnp.zeros((nb, 1, ow + 2, cc), jnp.float32)
    pad_ref[:, oh + 1:oh + 2, :, :] = jnp.zeros((nb, 1, ow + 2, cc), jnp.float32)
    pad_ref[:, :, 0:1, :] = jnp.zeros((nb, oh + 2, 1, cc), jnp.float32)
    pad_ref[:, :, ow + 1:ow + 2, :] = jnp.zeros((nb, oh + 2, 1, cc), jnp.float32)
    pad_ref[:, 1:1 + oh, 1:1 + ow, :] = pooled

    # ---- conv2 (3x3, pad=1) as 9 accumulated matmuls (no lane concat) -------
    acc = jnp.zeros((m2, cp2), jnp.float32)
    for t in range(9):
        di, dj = t // 3, t % 3
        patch = pad_ref[:, di:di + oh, dj:dj + ow, :].reshape(m2, cc)
        acc = acc + jnp.dot(patch.astype(jnp.bfloat16),
                            w2_ref[t * cc:(t + 1) * cc, :],
                            preferred_element_type=jnp.float32)
    y2 = jnp.maximum(acc + b2_ref[...], 0.0)                    # (m2, 2*128)

    # ---- global average pool -> per-image [q | k] features (lane-dense) -----
    o_ref[...] = jnp.mean(y2.reshape(nb, oh * ow, cp2), axis=1).reshape(1, nb, cp2)


def _prep_backbone_weights(enc_q, enc_k):
    c1, cin = enc_q["conv1_w"].shape[0], enc_q["conv1_w"].shape[1]
    c2 = enc_q["conv2_w"].shape[0]
    assert c2 <= _CP, "conv2 out-channels must fit the 128-lane padding"

    def w1mat(p):   # (C1, Cin, 3, 3) -> (9*Cin, C1), rows ordered (kh, kw, ci)
        return p.transpose(2, 3, 1, 0).reshape(9 * cin, c1)

    w1 = jnp.concatenate([w1mat(enc_q["conv1_w"]), w1mat(enc_k["conv1_w"])],
                         axis=1).astype(jnp.bfloat16)              # (9*Cin, 2*C1)
    b1 = jnp.concatenate([enc_q["conv1_b"], enc_k["conv1_b"]]
                         ).reshape(1, 2 * c1).astype(jnp.float32)

    def w2tap(p):   # (C2, C1, 3, 3) -> (3, 3, C1, 128)
        return jnp.pad(p.transpose(2, 3, 1, 0),
                       ((0, 0), (0, 0), (0, 0), (0, _CP - c2)))

    wq, wk = w2tap(enc_q["conv2_w"]), w2tap(enc_k["conv2_w"])
    zeros = jnp.zeros_like(wq)
    # Per-tap block-diagonal weight: q channels feed q output lanes only, etc.
    w2 = jnp.concatenate([jnp.concatenate([wq, zeros], axis=-1),
                          jnp.concatenate([zeros, wk], axis=-1)], axis=2)
    w2 = w2.reshape(9 * 2 * c1, 2 * _CP).astype(jnp.bfloat16)      # (288, 256)
    b2 = jnp.concatenate([jnp.pad(enc_q["conv2_b"], (0, _CP - c2)),
                          jnp.pad(enc_k["conv2_b"], (0, _CP - c2))]
                         ).reshape(1, 2 * _CP).astype(jnp.float32)
    return w1, b1, w2, b2


def backbone_forward_qk(enc_q, enc_k, patches, h, w, *, block_images=8):
    """patches: (B, H*W, 9*Cin) bf16 conv1 im2col patches.
    Returns (B, 256) f32: cols [0:128] = encoder_q feats, [128:256] = encoder_k
    feats (per-encoder columns >= C2 are exactly zero)."""
    b, hw, k1 = patches.shape
    assert h % 2 == 0 and w % 2 == 0 and hw == h * w
    oh, ow = h // 2, w // 2
    c1 = enc_q["conv1_w"].shape[0]
    cc, cp2 = 2 * c1, 2 * _CP
    w1, b1, w2, b2 = _prep_backbone_weights(enc_q, enc_k)

    # Amortize the ~0.35us/step overhead with several images per step (padding
    # the batch up), but keep the grid >= 2 when possible (v7x: 2 TensorCores).
    nb = int(min(block_images, max(1, (b + 1) // 2)))
    grid = -(-b // nb)
    b_pad = grid * nb
    if b_pad != b:
        patches = jnp.pad(patches, ((0, b_pad - b), (0, 0), (0, 0)))
    patches2d = patches.reshape(b_pad * hw, k1)

    out = pl.pallas_call(
        _backbone_kernel,
        grid=(grid,),
        in_specs=[
            pl.BlockSpec((nb * hw, k1), lambda g: (g, 0)),
            pl.BlockSpec((k1, cc), lambda g: (0, 0)),
            pl.BlockSpec((1, cc), lambda g: (0, 0)),
            pl.BlockSpec((9 * cc, cp2), lambda g: (0, 0)),
            pl.BlockSpec((1, cp2), lambda g: (0, 0)),
        ],
        out_specs=pl.BlockSpec((1, nb, cp2), lambda g: (g, 0, 0)),
        out_shape=jax.ShapeDtypeStruct((grid, nb, cp2), jnp.float32),
        scratch_shapes=[pltpu.VMEM((nb, oh + 2, ow + 2, cc), jnp.float32)],
        compiler_params=pltpu.CompilerParams(
            dimension_semantics=("parallel",),
            vmem_limit_bytes=32 * 1024 * 1024,
        ),
    )(patches2d, w1, b1, w2, b2)
    return out.reshape(b_pad, cp2)[:b]


# ------------------------------ predictor kernel -----------------------------

def _predictor_kernel(x_ref, w1_ref, b1_ref, g_ref, bt_ref, w2_ref, b2_ref, o_ref):
    """Both predictor views in one step: rows [0:N] view 1, [N:2N] view 2.
    BatchNorm statistics are computed per view (training mode, biased var),
    matching two independent PyTorch predictor(...) calls."""
    n2 = x_ref.shape[0]
    dim = w1_ref.shape[1]
    n = n2 // 2
    x = x_ref[...].astype(jnp.bfloat16)                             # (2N, 128)
    hid = jnp.dot(x, w1_ref[...], preferred_element_type=jnp.float32) + b1_ref[...]
    hv = hid.reshape(2, n, dim)
    mu = jnp.mean(hv, axis=1, keepdims=True)
    var = jnp.mean((hv - mu) ** 2, axis=1, keepdims=True)           # biased (PyTorch BN)
    hn = (hv - mu) * jax.lax.rsqrt(var + 1e-5)
    hn = hn * g_ref[...].reshape(1, 1, dim) + bt_ref[...].reshape(1, 1, dim)
    hn = jnp.maximum(hn, 0.0).reshape(n2, dim)
    o_ref[...] = jnp.dot(hn.astype(jnp.bfloat16), w2_ref[...],
                         preferred_element_type=jnp.float32) + b2_ref[...]


def predictor_forward(params, feats):
    """feats: (2N, 128) lane-padded features (cols >= pred_dim are zero).
    Returns (2N, 128); output columns >= pred_dim are zero."""
    n2, cp = feats.shape
    pred_dim, dim = params["w1"].shape
    assert pred_dim <= cp
    w1 = jnp.pad(params["w1"], ((0, cp - pred_dim), (0, 0))).astype(jnp.bfloat16)
    b1 = params["b1"].reshape(1, dim).astype(jnp.float32)
    g = params["gamma"].reshape(1, dim).astype(jnp.float32)
    bt = params["beta"].reshape(1, dim).astype(jnp.float32)
    w2 = jnp.pad(params["w2"], ((0, 0), (0, cp - pred_dim))).astype(jnp.bfloat16)
    b2 = jnp.pad(params["b2"], (0, cp - pred_dim)).reshape(1, cp).astype(jnp.float32)
    return pl.pallas_call(
        _predictor_kernel,
        out_shape=jax.ShapeDtypeStruct((n2, cp), jnp.float32),
        compiler_params=pltpu.CompilerParams(vmem_limit_bytes=32 * 1024 * 1024),
    )(feats, w1, b1, g, bt, w2, b2)


# --------------------------------- JAX glue ----------------------------------

def momentum_update(params_q, params_k, m):
    # param_k = param_k * m + param_q * (1 - m)   (tiny elementwise, plain JAX)
    return jax.tree_util.tree_map(lambda q, k: k * m + q * (1.0 - m), params_q, params_k)


def _prep_images(x_nchw):
    # NCHW -> NHWC (channels on lanes) + spatial zero pad for conv1 (pad=1).
    x = jnp.transpose(x_nchw, (0, 2, 3, 1)).astype(jnp.float32)
    return jnp.pad(x, ((0, 0), (1, 1), (1, 1), (0, 0)))


def _im2col3x3(xpad):
    # (B, H+2, W+2, Cin) -> (B, H*W, 9*Cin) conv1 patches, built once in XLA.
    b, hp, wp, cin = xpad.shape
    h, w = hp - 2, wp - 2
    patches = jnp.concatenate(
        [xpad[:, di:di + h, dj:dj + w, :] for di in range(3) for dj in range(3)],
        axis=-1)
    return patches.reshape(b, h * w, 9 * cin).astype(jnp.bfloat16)


def siamese_byol_forward(params, x1, x2, m=0.996):
    enc_q = params["encoder_q"]
    # TODO(synk): PyTorch updates encoder_k in place (stateful EMA) and BN
    # running stats; here the EMA'd key-encoder params are used for this
    # forward only — callers must thread momentum_update(...) across steps.
    enc_k = momentum_update(enc_q, params["encoder_k"], m)

    n, _, h, w = x1.shape
    xb = _prep_images(jnp.concatenate([x1, x2], axis=0))        # (2N, H+2, W+2, C)
    patches = _im2col3x3(xb)                                    # (2N, H*W, 9C) bf16

    feats = backbone_forward_qk(enc_q, enc_k, patches, h, w)    # (2N, 256), one call
    feats_q = feats[:, :_CP]                                    # encoder_q([x1;x2])
    feats_k = jax.lax.stop_gradient(feats[:, _CP:])             # encoder_k([x1;x2])

    pred_dim = params["predictor"]["w1"].shape[0]
    pred_out = predictor_forward(params["predictor"], feats_q)  # (2N, 128), one call
    p1 = pred_out[:n, :pred_dim]
    p2 = pred_out[n:, :pred_dim]
    z1 = feats_k[:n, :pred_dim]
    z2 = feats_k[n:, :pred_dim]
    return p1, z2, p2, z1


# ---------------------------- parameter construction -------------------------

def init_backbone_params(key, cin, c1=16, c2=32):
    k1, k2, k3, k4 = jax.random.split(key, 4)
    return {
        "conv1_w": 0.1 * jax.random.normal(k1, (c1, cin, 3, 3), jnp.float32),
        "conv1_b": 0.01 * jax.random.normal(k2, (c1,), jnp.float32),
        "conv2_w": 0.1 * jax.random.normal(k3, (c2, c1, 3, 3), jnp.float32),
        "conv2_b": 0.01 * jax.random.normal(k4, (c2,), jnp.float32),
    }


def init_predictor_params(key, pred_dim=32, dim=256):
    k1, k2 = jax.random.split(key, 2)
    return {
        "w1": 0.1 * jax.random.normal(k1, (pred_dim, dim), jnp.float32),
        "b1": jnp.zeros((dim,), jnp.float32),
        "gamma": jnp.ones((dim,), jnp.float32),
        "beta": jnp.zeros((dim,), jnp.float32),
        "w2": 0.1 * jax.random.normal(k2, (dim, pred_dim), jnp.float32),
        "b2": jnp.zeros((pred_dim,), jnp.float32),
    }


if __name__ == "__main__":
    N, C, H, W = 2, 4, 16, 16
    pred_dim, dim = 32, 256

    key = jax.random.PRNGKey(0)
    kq, kk, kp, kx1, kx2 = jax.random.split(key, 5)
    params = {
        "encoder_q": init_backbone_params(kq, C, c1=16, c2=pred_dim),
        "encoder_k": init_backbone_params(kk, C, c1=16, c2=pred_dim),
        "predictor": init_predictor_params(kp, pred_dim=pred_dim, dim=dim),
    }

    x1 = jax.random.normal(kx1, (N, C, H, W), jnp.float32)
    x2 = jax.random.normal(kx2, (N, C, H, W), jnp.float32)

    fwd = jax.jit(lambda p, a, b: siamese_byol_forward(p, a, b, m=0.996))
    p1, z2, p2, z1 = fwd(params, x1, x2)
    jax.block_until_ready((p1, z2, p2, z1))

    assert p1.shape == (N, pred_dim) and p2.shape == (N, pred_dim)
    assert z1.shape == (N, pred_dim) and z2.shape == (N, pred_dim)
    assert bool(jnp.all(jnp.isfinite(p1))) and bool(jnp.all(jnp.isfinite(p2)))
    assert bool(jnp.all(jnp.isfinite(z1))) and bool(jnp.all(jnp.isfinite(z2)))
    print("KERNEL_OK")
</pallas_src>

<mosaic_0001>
module attributes {stable_mosaic.version = 11 : i64} {
  func.func @_backbone_kernel(%arg0: i32, %arg1: memref<512x36xbf16, #tpu.memory_space<vmem>>, %arg2: memref<36x32xbf16, #tpu.memory_space<vmem>>, %arg3: memref<1x32xf32, #tpu.memory_space<vmem>>, %arg4: memref<288x256xbf16, #tpu.memory_space<vmem>>, %arg5: memref<1x256xf32, #tpu.memory_space<vmem>>, %arg6: memref<1x2x256xf32, #tpu.memory_space<vmem>>, %arg7: memref<2x10x10x32xf32, #tpu.memory_space<vmem>>) attributes {dimension_semantics = [#tpu.dimension_semantics<parallel>], iteration_bounds = array<i64: 2>, scalar_prefetch = 0 : i64, scratch_operands = 1 : i64, tpu.core_type = #tpu.core_type<tc>, window_params = [{transform_indices = @transform_0, window_bounds = array<i64: 512, 36>}, {pipeline_mode = #tpu.pipeline_mode<synchronous>, transform_indices = @transform_1, window_bounds = array<i64: 36, 32>}, {pipeline_mode = #tpu.pipeline_mode<synchronous>, transform_indices = @transform_2, window_bounds = array<i64: 1, 32>}, {pipeline_mode = #tpu.pipeline_mode<synchronous>, transform_indices = @transform_3, window_bounds = array<i64: 288, 256>}, {pipeline_mode = #tpu.pipeline_mode<synchronous>, transform_indices = @transform_4, window_bounds = array<i64: 1, 256>}, {transform_indices = @transform_5, window_bounds = array<i64: 1, 2, 256>}]} {
    %c0 = arith.constant 0 : index
    %c0_0 = arith.constant 0 : index
    %0 = vector.load %arg1[%c0, %c0_0] : memref<512x36xbf16, #tpu.memory_space<vmem>>, vector<512x36xbf16>
    %c0_1 = arith.constant 0 : index
    %c0_2 = arith.constant 0 : index
    %1 = vector.load %arg2[%c0_1, %c0_2] : memref<36x32xbf16, #tpu.memory_space<vmem>>, vector<36x32xbf16>
    %cst = arith.constant dense<0.000000e+00> : vector<512x32xf32>
    %2 = tpu.matmul %0, %1, %cst {dimension_numbers = #tpu.dot_dimension_numbers<[1], [0], [0], [1], [0, 0, 1, 1], [], []>} : vector<512x36xbf16>, vector<36x32xbf16>, vector<512x32xf32> -> vector<512x32xf32>
    %c0_3 = arith.constant 0 : index
    %c0_4 = arith.constant 0 : index
    %3 = vector.load %arg3[%c0_3, %c0_4] : memref<1x32xf32, #tpu.memory_space<vmem>>, vector<1x32xf32>
    %4 = vector.broadcast %3 : vector<1x32xf32> to vector<512x32xf32>
    %5 = arith.addf %2, %4 : vector<512x32xf32>
    %cst_5 = arith.constant 0.000000e+00 : f32
    %6 = vector.broadcast %cst_5 : f32 to vector<512x32xf32>
    %7 = arith.maximumf %5, %6 : vector<512x32xf32>
    %8 = vector.shape_cast %7 : vector<512x32xf32> to vector<256x2x32xf32>
    %cst_6 = arith.constant dense<0xFF800000> : vector<256x32xf32>
    %9 = vector.multi_reduction <maximumf>, %8, %cst_6 [1] : vector<256x2x32xf32> to vector<256x32xf32>
    %10 = vector.shape_cast %9 : vector<256x32xf32> to vector<16x2x8x32xf32>
    %cst_7 = arith.constant dense<0xFF800000> : vector<16x8x32xf32>
    %11 = vector.multi_reduction <maximumf>, %10, %cst_7 [1] : vector<16x2x8x32xf32> to vector<16x8x32xf32>
    %12 = vector.shape_cast %11 : vector<16x8x32xf32> to vector<2x8x8x32xf32>
    %cst_8 = arith.constant 0.000000e+00 : f32
    %13 = vector.broadcast %cst_8 : f32 to vector<2x1x10x32xf32>
    %c0_9 = arith.constant 0 : index
    %c0_10 = arith.constant 0 : index
    %c0_11 = arith.constant 0 : index
    %c0_12 = arith.constant 0 : index
    %14 = vector.load %arg7[%c0_9, %c0_10, %c0_11, %c0_12] : memref<2x10x10x32xf32, #tpu.memory_space<vmem>>, vector<2x1x10x32xf32>
    tpu.vector_store %arg7[%c0_9, %c0_10, %c0_11, %c0_12], %13 {strides = array<i32>} : memref<2x10x10x32xf32, #tpu.memory_space<vmem>>, vector<2x1x10x32xf32>,
    %cst_13 = arith.constant 0.000000e+00 : f32
    %15 = vector.broadcast %cst_13 : f32 to vector<2x1x10x32xf32>
    %c0_14 = arith.constant 0 : index
    %c9 = arith.constant 9 : index
    %c0_15 = arith.constant 0 : index
    %c0_16 = arith.constant 0 : index
    %16 = vector.load %arg7[%c0_14, %c9, %c0_15, %c0_16] : memref<2x10x10x32xf32, #tpu.memory_space<vmem>>, vector<2x1x10x32xf32>
    tpu.vector_store %arg7[%c0_14, %c9, %c0_15, %c0_16], %15 {strides = array<i32>} : memref<2x10x10x32xf32, #tpu.memory_space<vmem>>, vector<2x1x10x32xf32>,
    %cst_17 = arith.constant 0.000000e+00 : f32
    %17 = vector.broadcast %cst_17 : f32 to vector<2x10x1x32xf32>
    %c0_18 = arith.constant 0 : index
    %c0_19 = arith.constant 0 : index
    %c0_20 = arith.constant 0 : index
    %c0_21 = arith.constant 0 : index
    %18 = vector.load %arg7[%c0_18, %c0_19, %c0_20, %c0_21] : memref<2x10x10x32xf32, #tpu.memory_space<vmem>>, vector<2x10x1x32xf32>
    tpu.vector_store %arg7[%c0_18, %c0_19, %c0_20, %c0_21], %17 {strides = array<i32>} : memref<2x10x10x32xf32, #tpu.memory_space<vmem>>, vector<2x10x1x32xf32>,
    %cst_22 = arith.constant 0.000000e+00 : f32
    %19 = vector.broadcast %cst_22 : f32 to vector<2x10x1x32xf32>
    %c0_23 = arith.constant 0 : index
    %c0_24 = arith.constant 0 : index
    %c9_25 = arith.constant 9 : index
    %c0_26 = arith.constant 0 : index
    %20 = vector.load %arg7[%c0_23, %c0_24, %c9_25, %c0_26] : memref<2x10x10x32xf32, #tpu.memory_space<vmem>>, vector<2x10x1x32xf32>
    tpu.vector_store %arg7[%c0_23, %c0_24, %c9_25, %c0_26], %19 {strides = array<i32>} : memref<2x10x10x32xf32, #tpu.memory_space<vmem>>, vector<2x10x1x32xf32>,
    %c0_27 = arith.constant 0 : index
    %c1 = arith.constant 1 : index
    %c1_28 = arith.constant 1 : index
    %c0_29 = arith.constant 0 : index
    %21 = vector.load %arg7[%c0_27, %c1, %c1_28, %c0_29] : memref<2x10x10x32xf32, #tpu.memory_space<vmem>>, vector<2x8x8x32xf32>
    tpu.vector_store %arg7[%c0_27, %c1, %c1_28, %c0_29], %12 {strides = array<i32>} : memref<2x10x10x32xf32, #tpu.memory_space<vmem>>, vector<2x8x8x32xf32>,
    %cst_30 = arith.constant 0.000000e+00 : f32
    %22 = vector.broadcast %cst_30 : f32 to vector<128x256xf32>
    %c0_31 = arith.constant 0 : index
    %c0_32 = arith.constant 0 : index
    %c0_33 = arith.constant 0 : index
    %c0_34 = arith.constant 0 : index
    %23 = vector.load %arg7[%c0_31, %c0_32, %c0_33, %c0_34] : memref<2x10x10x32xf32, #tpu.memory_space<vmem>>, vector<2x8x8x32xf32>
    %24 = vector.shape_cast %23 : vector<2x8x8x32xf32> to vector<128x32xf32>
    %25 = arith.truncf %24 : vector<128x32xf32> to vector<128x32xbf16>
    %c0_35 = arith.constant 0 : index
    %c0_36 = arith.constant 0 : index
    %26 = vector.load %arg4[%c0_35, %c0_36] : memref<288x256xbf16, #tpu.memory_space<vmem>>, vector<32x256xbf16>
    %cst_37 = arith.constant dense<0.000000e+00> : vector<128x256xf32>
    %27 = tpu.matmul %25, %26, %cst_37 {dimension_numbers = #tpu.dot_dimension_numbers<[1], [0], [0], [1], [0, 0, 1, 1], [], []>} : vector<128x32xbf16>, vector<32x256xbf16>, vector<128x256xf32> -> vector<128x256xf32>
    %28 = arith.addf %22, %27 : vector<128x256xf32>
    %c0_38 = arith.constant 0 : index
    %c0_39 = arith.constant 0 : index
    %c1_40 = arith.constant 1 : index
    %c0_41 = arith.constant 0 : index
    %29 = vector.load %arg7[%c0_38, %c0_39, %c1_40, %c0_41] : memref<2x10x10x32xf32, #tpu.memory_space<vmem>>, vector<2x8x8x32xf32>
    %30 = vector.shape_cast %29 : vector<2x8x8x32xf32> to vector<128x32xf32>
    %31 = arith.truncf %30 : vector<128x32xf32> to vector<128x32xbf16>
    %c32 = arith.constant 32 : index
    %c0_42 = arith.constant 0 : index
    %32 = vector.load %arg4[%c32, %c0_42] : memref<288x256xbf16, #tpu.memory_space<vmem>>, vector<32x256xbf16>
    %cst_43 = arith.constant dense<0.000000e+00> : vector<128x256xf32>
    %33 = tpu.matmul %31, %32, %cst_43 {dimension_numbers = #tpu.dot_dimension_numbers<[1], [0], [0], [1], [0, 0, 1, 1], [], []>} : vector<128x32xbf16>, vector<32x256xbf16>, vector<128x256xf32> -> vector<128x256xf32>
    %34 = arith.addf %28, %33 : vector<128x256xf32>
    %c0_44 = arith.constant 0 : index
    %c0_45 = arith.constant 0 : index
    %c2 = arith.constant 2 : index
    %c0_46 = arith.constant 0 : index
    %35 = vector.load %arg7[%c0_44, %c0_45, %c2, %c0_46] : memref<2x10x10x32xf32, #tpu.memory_space<vmem>>, vector<2x8x8x32xf32>
    %36 = vector.shape_cast %35 : vector<2x8x8x32xf32> to vector<128x32xf32>
    %37 = arith.truncf %36 : vector<128x32xf32> to vector<128x32xbf16>
    %c64 = arith.constant 64 : index
    %c0_47 = arith.constant 0 : index
    %38 = vector.load %arg4[%c64, %c0_47] : memref<288x256xbf16, #tpu.memory_space<vmem>>, vector<32x256xbf16>
    %cst_48 = arith.constant dense<0.000000e+00> : vector<128x256xf32>
    %39 = tpu.matmul %37, %38, %cst_48 {dimension_numbers = #tpu.dot_dimension_numbers<[1], [0], [0], [1], [0, 0, 1, 1], [], []>} : vector<128x32xbf16>, vector<32x256xbf16>, vector<128x256xf32> -> vector<128x256xf32>
    %40 = arith.addf %34, %39 : vector<128x256xf32>
    %c0_49 = arith.constant 0 : index
    %c1_50 = arith.constant 1 : index
    %c0_51 = arith.constant 0 : index
    %c0_52 = arith.constant 0 : index
    %41 = vector.load %arg7[%c0_49, %c1_50, %c0_51, %c0_52] : memref<2x10x10x32xf32, #tpu.memory_space<vmem>>, vector<2x8x8x32xf32>
    %42 = vector.shape_cast %41 : vector<2x8x8x32xf32> to vector<128x32xf32>
    %43 = arith.truncf %42 : vector<128x32xf32> to vector<128x32xbf16>
    %c96 = arith.constant 96 : index
    %c0_53 = arith.constant 0 : index
    %44 = vector.load %arg4[%c96, %c0_53] : memref<288x256xbf16, #tpu.memory_space<vmem>>, vector<32x256xbf16>
    %cst_54 = arith.constant dense<0.000000e+00> : vector<128x256xf32>
    %45 = tpu.matmul %43, %44, %cst_54 {dimension_numbers = #tpu.dot_dimension_numbers<[1], [0], [0], [1], [0, 0, 1, 1], [], []>} : vector<128x32xbf16>, vector<32x256xbf16>, vector<128x256xf32> -> vector<128x256xf32>
    %46 = arith.addf %40, %45 : vector<128x256xf32>
    %c0_55 = arith.constant 0 : index
    %c1_56 = arith.constant 1 : index
    %c1_57 = arith.constant 1 : index
    %c0_58 = arith.constant 0 : index
    %47 = vector.load %arg7[%c0_55, %c1_56, %c1_57, %c0_58] : memref<2x10x10x32xf32, #tpu.memory_space<vmem>>, vector<2x8x8x32xf32>
    %48 = vector.shape_cast %47 : vector<2x8x8x32xf32> to vector<128x32xf32>
    %49 = arith.truncf %48 : vector<128x32xf32> to vector<128x32xbf16>
    %c128 = arith.constant 128 : index
    %c0_59 = arith.constant 0 : index
    %50 = vector.load %arg4[%c128, %c0_59] : memref<288x256xbf16, #tpu.memory_space<vmem>>, vector<32x256xbf16>
    %cst_60 = arith.constant dense<0.000000e+00> : vector<128x256xf32>
    %51 = tpu.matmul %49, %50, %cst_60 {dimension_numbers = #tpu.dot_dimension_numbers<[1], [0], [0], [1], [0, 0, 1, 1], [], []>} : vector<128x32xbf16>, vector<32x256xbf16>, vector<128x256xf32> -> vector<128x256xf32>
    %52 = arith.addf %46, %51 : vector<128x256xf32>
    %c0_61 = arith.constant 0 : index
    %c1_62 = arith.constant 1 : index
    %c2_63 = arith.constant 2 : index
    %c0_64 = arith.constant 0 : index
    %53 = vector.load %arg7[%c0_61, %c1_62, %c2_63, %c0_64] : memref<2x10x10x32xf32, #tpu.memory_space<vmem>>, vector<2x8x8x32xf32>
    %54 = vector.shape_cast %53 : vector<2x8x8x32xf32> to vector<128x32xf32>
    %55 = arith.truncf %54 : vector<128x32xf32> to vector<128x32xbf16>
    %c160 = arith.constant 160 : index
    %c0_65 = arith.constant 0 : index
    %56 = vector.load %arg4[%c160, %c0_65] : memref<288x256xbf16, #tpu.memory_space<vmem>>, vector<32x256xbf16>
    %cst_66 = arith.constant dense<0.000000e+00> : vector<128x256xf32>
    %57 = tpu.matmul %55, %56, %cst_66 {dimension_numbers = #tpu.dot_dimension_numbers<[1], [0], [0], [1], [0, 0, 1, 1], [], []>} : vector<128x32xbf16>, vector<32x256xbf16>, vector<128x256xf32> -> vector<128x256xf32>
    %58 = arith.addf %52, %57 : vector<128x256xf32>
    %c0_67 = arith.constant 0 : index
    %c2_68 = arith.constant 2 : index
    %c0_69 = arith.constant 0 : index
    %c0_70 = arith.constant 0 : index
    %59 = vector.load %arg7[%c0_67, %c2_68, %c0_69, %c0_70] : memref<2x10x10x32xf32, #tpu.memory_space<vmem>>, vector<2x8x8x32xf32>
    %60 = vector.shape_cast %59 : vector<2x8x8x32xf32> to vector<128x32xf32>
    %61 = arith.truncf %60 : vector<128x32xf32> to vector<128x32xbf16>
    %c192 = arith.constant 192 : index
    %c0_71 = arith.constant 0 : index
    %62 = vector.load %arg4[%c192, %c0_71] : memref<288x256xbf16, #tpu.memory_space<vmem>>, vector<32x256xbf16>
    %cst_72 = arith.constant dense<0.000000e+00> : vector<128x256xf32>
    %63 = tpu.matmul %61, %62, %cst_72 {dimension_numbers = #tpu.dot_dimension_numbers<[1], [0], [0], [1], [0, 0, 1, 1], [], []>} : vector<128x32xbf16>, vector<32x256xbf16>, vector<128x256xf32> -> vector<128x256xf32>
    %64 = arith.addf %58, %63 : vector<128x256xf32>
    %c0_73 = arith.constant 0 : index
    %c2_74 = arith.constant 2 : index
    %c1_75 = arith.constant 1 : index
    %c0_76 = arith.constant 0 : index
    %65 = vector.load %arg7[%c0_73, %c2_74, %c1_75, %c0_76] : memref<2x10x10x32xf32, #tpu.memory_space<vmem>>, vector<2x8x8x32xf32>
    %66 = vector.shape_cast %65 : vector<2x8x8x32xf32> to vector<128x32xf32>
    %67 = arith.truncf %66 : vector<128x32xf32> to vector<128x32xbf16>
    %c224 = arith.constant 224 : index
    %c0_77 = arith.constant 0 : index
    %68 = vector.load %arg4[%c224, %c0_77] : memref<288x256xbf16, #tpu.memory_space<vmem>>, vector<32x256xbf16>
    %cst_78 = arith.constant dense<0.000000e+00> : vector<128x256xf32>
    %69 = tpu.matmul %67, %68, %cst_78 {dimension_numbers = #tpu.dot_dimension_numbers<[1], [0], [0], [1], [0, 0, 1, 1], [], []>} : vector<128x32xbf16>, vector<32x256xbf16>, vector<128x256xf32> -> vector<128x256xf32>
    %70 = arith.addf %64, %69 : vector<128x256xf32>
    %c0_79 = arith.constant 0 : index
    %c2_80 = arith.constant 2 : index
    %c2_81 = arith.constant 2 : index
    %c0_82 = arith.constant 0 : index
    %71 = vector.load %arg7[%c0_79, %c2_80, %c2_81, %c0_82] : memref<2x10x10x32xf32, #tpu.memory_space<vmem>>, vector<2x8x8x32xf32>
    %72 = vector.shape_cast %71 : vector<2x8x8x32xf32> to vector<128x32xf32>
    %73 = arith.truncf %72 : vector<128x32xf32> to vector<128x32xbf16>
    %c256 = arith.constant 256 : index
    %c0_83 = arith.constant 0 : index
    %74 = vector.load %arg4[%c256, %c0_83] : memref<288x256xbf16, #tpu.memory_space<vmem>>, vector<32x256xbf16>
    %cst_84 = arith.constant dense<0.000000e+00> : vector<128x256xf32>
    %75 = tpu.matmul %73, %74, %cst_84 {dimension_numbers = #tpu.dot_dimension_numbers<[1], [0], [0], [1], [0, 0, 1, 1], [], []>} : vector<128x32xbf16>, vector<32x256xbf16>, vector<128x256xf32> -> vector<128x256xf32>
    %76 = arith.addf %70, %75 : vector<128x256xf32>
    %c0_85 = arith.constant 0 : index
    %c0_86 = arith.constant 0 : index
    %77 = vector.load %arg5[%c0_85, %c0_86] : memref<1x256xf32, #tpu.memory_space<vmem>>, vector<1x256xf32>
    %78 = vector.broadcast %77 : vector<1x256xf32> to vector<128x256xf32>
    %79 = arith.addf %76, %78 : vector<128x256xf32>
    %cst_87 = arith.constant 0.000000e+00 : f32
    %80 = vector.broadcast %cst_87 : f32 to vector<128x256xf32>
    %81 = arith.maximumf %79, %80 : vector<128x256xf32>
    %82 = vector.shape_cast %81 : vector<128x256xf32> to vector<2x64x256xf32>
    %cst_88 = arith.constant dense<0.000000e+00> : vector<2x256xf32>
    %83 = vector.multi_reduction <add>, %82, %cst_88 [1] : vector<2x64x256xf32> to vector<2x256xf32>
    %cst_89 = arith.constant 6.400000e+01 : f32
    %84 = vector.broadcast %cst_89 : f32 to vector<2x256xf32>
    %85 = arith.divf %83, %84 : vector<2x256xf32>
    %86 = vector.shape_cast %85 : vector<2x256xf32> to vector<1x2x256xf32>
    %c0_90 = arith.constant 0 : index
    %c0_91 = arith.constant 0 : index
    %c0_92 = arith.constant 0 : index
    %87 = vector.load %arg6[%c0_90, %c0_91, %c0_92] : memref<1x2x256xf32, #tpu.memory_space<vmem>>, vector<1x2x256xf32>
    tpu.vector_store %arg6[%c0_90, %c0_91, %c0_92], %86 {strides = array<i32>} : memref<1x2x256xf32, #tpu.memory_space<vmem>>, vector<1x2x256xf32>,
    return
  }
  func.func @transform_0(%arg0: i32) -> (i32, i32) {
    %c0_i32 = arith.constant 0 : i32
    %c0_i32_0 = arith.constant 0 : i32
    return %arg0, %c0_i32 : i32, i32
  }
  func.func @transform_1(%arg0: i32) -> (i32, i32) {
    %c0_i32 = arith.constant 0 : i32
    %c0_i32_0 = arith.constant 0 : i32
    %c0_i32_1 = arith.constant 0 : i32
    return %c0_i32, %c0_i32_0 : i32, i32
  }
  func.func @transform_2(%arg0: i32) -> (i32, i32) {
    %c0_i32 = arith.constant 0 : i32
    %c0_i32_0 = arith.constant 0 : i32
    %c0_i32_1 = arith.constant 0 : i32
    return %c0_i32, %c0_i32_0 : i32, i32
  }
  func.func @transform_3(%arg0: i32) -> (i32, i32) {
    %c0_i32 = arith.constant 0 : i32
    %c0_i32_0 = arith.constant 0 : i32
    %c0_i32_1 = arith.constant 0 : i32
    return %c0_i32, %c0_i32_0 : i32, i32
  }
  func.func @transform_4(%arg0: i32) -> (i32, i32) {
    %c0_i32 = arith.constant 0 : i32
    %c0_i32_0 = arith.constant 0 : i32
    %c0_i32_1 = arith.constant 0 : i32
    return %c0_i32, %c0_i32_0 : i32, i32
  }
  func.func @transform_5(%arg0: i32) -> (i32, i32, i32) {
    %c0_i32 = arith.constant 0 : i32
    %c0_i32_0 = arith.constant 0 : i32
    %c0_i32_1 = arith.constant 0 : i32
    return %arg0, %c0_i32, %c0_i32_0 : i32, i32, i32
  }
}

module attributes {stable_mosaic.version = 11 : i64} {
  func.func @_predictor_kernel(%arg0: memref<4x128xf32, #tpu.memory_space<vmem>>, %arg1: memref<128x256xbf16, #tpu.memory_space<vmem>>, %arg2: memref<1x256xf32, #tpu.memory_space<vmem>>, %arg3: memref<1x256xf32, #tpu.memory_space<vmem>>, %arg4: memref<1x256xf32, #tpu.memory_space<vmem>>, %arg5: memref<256x128xbf16, #tpu.memory_space<vmem>>, %arg6: memref<1x128xf32, #tpu.memory_space<vmem>>, %arg7: memref<4x128xf32, #tpu.memory_space<vmem>>) attributes {dimension_semantics = [], scalar_prefetch = 0 : i64, scratch_operands = 0 : i64, tpu.core_type = #tpu.core_type<tc>} {
    %c0 = arith.constant 0 : index
    %c0_0 = arith.constant 0 : index
    %0 = vector.load %arg0[%c0, %c0_0] : memref<4x128xf32, #tpu.memory_space<vmem>>, vector<4x128xf32>
    %1 = arith.truncf %0 : vector<4x128xf32> to vector<4x128xbf16>
    %c0_1 = arith.constant 0 : index
    %c0_2 = arith.constant 0 : index
    %2 = vector.load %arg1[%c0_1, %c0_2] : memref<128x256xbf16, #tpu.memory_space<vmem>>, vector<128x256xbf16>
    %cst = arith.constant dense<0.000000e+00> : vector<4x256xf32>
    %3 = tpu.matmul %1, %2, %cst {dimension_numbers = #tpu.dot_dimension_numbers<[1], [0], [0], [1], [0, 0, 1, 1], [], []>} : vector<4x128xbf16>, vector<128x256xbf16>, vector<4x256xf32> -> vector<4x256xf32>
    %c0_3 = arith.constant 0 : index
    %c0_4 = arith.constant 0 : index
    %4 = vector.load %arg2[%c0_3, %c0_4] : memref<1x256xf32, #tpu.memory_space<vmem>>, vector<1x256xf32>
    %5 = vector.broadcast %4 : vector<1x256xf32> to vector<4x256xf32>
    %6 = arith.addf %3, %5 : vector<4x256xf32>
    %7 = vector.shape_cast %6 : vector<4x256xf32> to vector<2x2x256xf32>
    %cst_5 = arith.constant dense<0.000000e+00> : vector<2x256xf32>
    %8 = vector.multi_reduction <add>, %7, %cst_5 [1] : vector<2x2x256xf32> to vector<2x256xf32>
    %9 = vector.shape_cast %8 : vector<2x256xf32> to vector<2x1x256xf32>
    %cst_6 = arith.constant 2.000000e+00 : f32
    %10 = vector.broadcast %cst_6 : f32 to vector<2x1x256xf32>
    %11 = arith.divf %9, %10 : vector<2x1x256xf32>
    %12 = vector.broadcast %11 : vector<2x1x256xf32> to vector<2x2x256xf32>
    %13 = arith.subf %7, %12 : vector<2x2x256xf32>
    %14 = arith.mulf %13, %13 : vector<2x2x256xf32>
    %cst_7 = arith.constant dense<0.000000e+00> : vector<2x256xf32>
    %15 = vector.multi_reduction <add>, %14, %cst_7 [1] : vector<2x2x256xf32> to vector<2x256xf32>
    %16 = vector.shape_cast %15 : vector<2x256xf32> to vector<2x1x256xf32>
    %cst_8 = arith.constant 2.000000e+00 : f32
    %17 = vector.broadcast %cst_8 : f32 to vector<2x1x256xf32>
    %18 = arith.divf %16, %17 : vector<2x1x256xf32>
    %19 = vector.broadcast %11 : vector<2x1x256xf32> to vector<2x2x256xf32>
    %20 = arith.subf %7, %19 : vector<2x2x256xf32>
    %cst_9 = arith.constant 9.99999974E-6 : f32
    %21 = vector.broadcast %cst_9 : f32 to vector<2x1x256xf32>
    %22 = arith.addf %18, %21 : vector<2x1x256xf32>
    %23 = math.rsqrt %22 : vector<2x1x256xf32>
    %24 = vector.broadcast %23 : vector<2x1x256xf32> to vector<2x2x256xf32>
    %25 = arith.mulf %20, %24 : vector<2x2x256xf32>
    %c0_10 = arith.constant 0 : index
    %c0_11 = arith.constant 0 : index
    %26 = vector.load %arg3[%c0_10, %c0_11] : memref<1x256xf32, #tpu.memory_space<vmem>>, vector<1x256xf32>
    %27 = vector.shape_cast %26 : vector<1x256xf32> to vector<1x1x256xf32>
    %28 = vector.broadcast %27 : vector<1x1x256xf32> to vector<2x2x256xf32>
    %29 = arith.mulf %25, %28 : vector<2x2x256xf32>
    %c0_12 = arith.constant 0 : index
    %c0_13 = arith.constant 0 : index
    %30 = vector.load %arg4[%c0_12, %c0_13] : memref<1x256xf32, #tpu.memory_space<vmem>>, vector<1x256xf32>
    %31 = vector.shape_cast %30 : vector<1x256xf32> to vector<1x1x256xf32>
    %32 = vector.broadcast %31 : vector<1x1x256xf32> to vector<2x2x256xf32>
    %33 = arith.addf %29, %32 : vector<2x2x256xf32>
    %cst_14 = arith.constant 0.000000e+00 : f32
    %34 = vector.broadcast %cst_14 : f32 to vector<2x2x256xf32>
    %35 = arith.maximumf %33, %34 : vector<2x2x256xf32>
    %36 = vector.shape_cast %35 : vector<2x2x256xf32> to vector<4x256xf32>
    %37 = arith.truncf %36 : vector<4x256xf32> to vector<4x256xbf16>
    %c0_15 = arith.constant 0 : index
    %c0_16 = arith.constant 0 : index
    %38 = vector.load %arg5[%c0_15, %c0_16] : memref<256x128xbf16, #tpu.memory_space<vmem>>, vector<256x128xbf16>
    %cst_17 = arith.constant dense<0.000000e+00> : vector<4x128xf32>
    %39 = tpu.matmul %37, %38, %cst_17 {dimension_numbers = #tpu.dot_dimension_numbers<[1], [0], [0], [1], [0, 0, 1, 1], [], []>} : vector<4x256xbf16>, vector<256x128xbf16>, vector<4x128xf32> -> vector<4x128xf32>
    %c0_18 = arith.constant 0 : index
    %c0_19 = arith.constant 0 : index
    %40 = vector.load %arg6[%c0_18, %c0_19] : memref<1x128xf32, #tpu.memory_space<vmem>>, vector<1x128xf32>
    %41 = vector.broadcast %40 : vector<1x128xf32> to vector<4x128xf32>
    %42 = arith.addf %39, %41 : vector<4x128xf32>
    %c0_20 = arith.constant 0 : index
    %c0_21 = arith.constant 0 : index
    %43 = vector.load %arg7[%c0_20, %c0_21] : memref<4x128xf32, #tpu.memory_space<vmem>>, vector<4x128xf32>
    tpu.vector_store %arg7[%c0_20, %c0_21], %42 {strides = array<i32>} : memref<4x128xf32, #tpu.memory_space<vmem>>, vector<4x128xf32>,
    return
  }
}

</mosaic_0001>

<llo_original>
// kernel: _lambda_.3
$region0: #{_lambda_.3}
  #allocation0 [shape = 'u32[]', space=smem, size = 0x4, offset = 0x4, fixed_abs, tag = 'smem constant byte address 0x4 - core index']
  #allocation1 [shape = 'u32[72,128]{1,0:T(1,128)}', space=vmem, size = 0x9000, scoped, tag = 'internal scratch']
  %s0 = inlined_call_operand.vmem [shape: f32[4,128], index: 0, kind: input, shape index: {}]
  %s1 = inlined_call_operand.vmem [shape: bf16[128,256], index: 1, kind: input, shape index: {}]
  %s2 = inlined_call_operand.vmem [shape: f32[1,256], index: 2, kind: input, shape index: {}]
  %s3 = inlined_call_operand.vmem [shape: f32[1,256], index: 3, kind: input, shape index: {}]
  %s4 = inlined_call_operand.vmem [shape: f32[1,256], index: 4, kind: input, shape index: {}]
  %s5 = inlined_call_operand.vmem [shape: bf16[256,128], index: 5, kind: input, shape index: {}]
  %s6 = inlined_call_operand.vmem [shape: f32[1,128], index: 6, kind: input, shape index: {}]
  %s7 = inlined_call_operand.vmem [shape: f32[4,128], index: 7, kind: output, shape index: {}]
  %s8 = sld [smem:[#allocation0]]
  $region38: #{_lambda_.3} parent=0
    _
  %s10 = ssub.s32 1, %s8
  %s11 = scalar_select 0, %s10, %s8
  // Predicated region
  $region2: #{_lambda_.3} parent=0 // pred_check
    _
  $region3: #{_lambda_.3} parent=0 // pred_check_branch
    %13 = sbr.rel (0) target = $region5
  $region4: #{_lambda_.3} parent=0 // pred_region
    _
  $region5: #{_lambda_.3} parent=0 // pred_fallthru
    _
  // Predicated region
  $region6: #{_lambda_.3} parent=0 // pred_check
    _
  $region7: #{_lambda_.3} parent=0 // pred_check_branch
    %15 = sbr.rel (0) target = $region9
  $region8: #{_lambda_.3} parent=0 // pred_region
    _
  $region9: #{_lambda_.3} parent=0 // pred_fallthru
    _
  // Predicated region
  $region10: #{_lambda_.3} parent=0 // pred_check
    _
  $region11: #{_lambda_.3} parent=0 // pred_check_branch
    %17 = sbr.rel (0) target = $region13
  $region12: #{_lambda_.3} parent=0 // pred_region
    _
  $region13: #{_lambda_.3} parent=0 // pred_fallthru
    _
  // Predicated region
  $region14: #{_lambda_.3} parent=0 // pred_check
    _
  $region15: #{_lambda_.3} parent=0 // pred_check_branch
    %19 = sbr.rel (0) target = $region17
  $region16: #{_lambda_.3} parent=0 // pred_region
    _
  $region17: #{_lambda_.3} parent=0 // pred_fallthru
    _
  // Predicated region
  $region18: #{_lambda_.3} parent=0 // pred_check
    _
  $region19: #{_lambda_.3} parent=0 // pred_check_branch
    %21 = sbr.rel (0) target = $region21
  $region20: #{_lambda_.3} parent=0 // pred_region
    _
  $region21: #{_lambda_.3} parent=0 // pred_fallthru
    _
  // Predicated region
  $region22: #{_lambda_.3} parent=0 // pred_check
    _
  $region23: #{_lambda_.3} parent=0 // pred_check_branch
    %23 = sbr.rel (0) target = $region25
  $region24: #{_lambda_.3} parent=0 // pred_region
    _
  $region25: #{_lambda_.3} parent=0 // pred_fallthru
    _
  // Predicated region
  $region26: #{_lambda_.3} parent=0 // pred_check
    _
  $region27: #{_lambda_.3} parent=0 // pred_check_branch
    %25 = sbr.rel (0) target = $region29
  $region28: #{_lambda_.3} parent=0 // pred_region
    _
  $region29: #{_lambda_.3} parent=0 // pred_fallthru
    _
  %v26 = vld [vmem:[%s0] sm:$0xf]
  %v27 = vpack.c.bf16 %v26, %v26
  %v28 = vld [vmem:[%s1] sm:$0xff]
  %v29 = vld [vmem:[%s1 + $0x8] sm:$0xff]
  %v30 = vld [vmem:[%s1 + $0x10] sm:$0xff]
  %v31 = vld [vmem:[%s1 + $0x18] sm:$0xff]
  %v32 = vld [vmem:[%s1 + $0x20] sm:$0xff]
  %v33 = vld [vmem:[%s1 + $0x28] sm:$0xff]
  %v34 = vld [vmem:[%s1 + $0x30] sm:$0xff]
  %v35 = vld [vmem:[%s1 + $0x38] sm:$0xff]
  %v36 = vld [vmem:[%s1 + $0x40] sm:$0xff]
  %v37 = vld [vmem:[%s1 + $0x48] sm:$0xff]
  %v38 = vld [vmem:[%s1 + $0x50] sm:$0xff]
  %v39 = vld [vmem:[%s1 + $0x58] sm:$0xff]
  %v40 = vld [vmem:[%s1 + $0x60] sm:$0xff]
  %v41 = vld [vmem:[%s1 + $0x68] sm:$0xff]
  %v42 = vld [vmem:[%s1 + $0x70] sm:$0xff]
  %v43 = vld [vmem:[%s1 + $0x78] sm:$0xff]
  %v44 = vld [vmem:[%s2] sm:$0x3]
  %v46 = vperm.slane %v44, 0
  %v47 = vperm.slane %v44, 1
  %v66 = vunpack.c.l.b16 %v28
  %v67 = vunpack.c.h.b16 %v28
  %v68 = vunpack.c.l.b16 %v29
  %v69 = vunpack.c.h.b16 %v29
  %v70 = vunpack.c.l.b16 %v30
  %v71 = vunpack.c.h.b16 %v30
  %v72 = vunpack.c.l.b16 %v31
  %v73 = vunpack.c.h.b16 %v31
  %v74 = vunpack.c.l.b16 %v32
  %v75 = vunpack.c.h.b16 %v32
  %v76 = vunpack.c.l.b16 %v33
  %v77 = vunpack.c.h.b16 %v33
  %v78 = vunpack.c.l.b16 %v34
  %v79 = vunpack.c.h.b16 %v34
  %v80 = vunpack.c.l.b16 %v35
  %v81 = vunpack.c.h.b16 %v35
  %v82 = vunpack.c.l.b16 %v36
  %v83 = vunpack.c.h.b16 %v36
  %v84 = vunpack.c.l.b16 %v37
  %v85 = vunpack.c.h.b16 %v37
  %v86 = vunpack.c.l.b16 %v38
  %v87 = vunpack.c.h.b16 %v38
  %v88 = vunpack.c.l.b16 %v39
  %v89 = vunpack.c.h.b16 %v39
  %v90 = vunpack.c.l.b16 %v40
  %v91 = vunpack.c.h.b16 %v40
  %v92 = vunpack.c.l.b16 %v41
  %v93 = vunpack.c.h.b16 %v41
  %v94 = vunpack.c.l.b16 %v42
  %v95 = vunpack.c.h.b16 %v42
  %v96 = vunpack.c.l.b16 %v43
  %v97 = vunpack.c.h.b16 %v43
  %v98 = vpack.c.b16 %v68, %v66
  %v99 = vpack.c.b16 %v69, %v67
  %v100 = vpack.c.b16 %v72, %v70
  %v101 = vpack.c.b16 %v73, %v71
  %v102 = vpack.c.b16 %v76, %v74
  %v103 = vpack.c.b16 %v77, %v75
  %v104 = vpack.c.b16 %v80, %v78
  %v105 = vpack.c.b16 %v81, %v79
  %v106 = vpack.c.b16 %v84, %v82
  %v107 = vpack.c.b16 %v85, %v83
  %v108 = vpack.c.b16 %v88, %v86
  %v109 = vpack.c.b16 %v89, %v87
  %v110 = vpack.c.b16 %v92, %v90
  %v111 = vpack.c.b16 %v93, %v91
  %v112 = vpack.c.b16 %v96, %v94
  %v113 = vpack.c.b16 %v97, %v95
  %130 = vmatpush.bf16.msra.mxu0 %v112
  %131 = vmatpush.bf16.msra.mxu0 %v110
  %132 = vmatpush.bf16.msra.mxu0 %v108
  %133 = vmatpush.bf16.msra.mxu0 %v106
  %134 = vmatpush.bf16.msra.mxu0 %v104
  %135 = vmatpush.bf16.msra.mxu0 %v102
  %136 = vmatpush.bf16.msra.mxu0 %v100
  %137 = vmatpush.bf16.msra.mxu0 %v98
  %138 = vmatmul.bf16.gmra.mxu0 %v27
  %v139 = vpop.f32.mrf.mxu0
  %v140 = vadd.f32 %v46, %v139
  %v141 = vpop.f32.mrf.mxu0
  %142 = vdwg.mxu0
  %143 = vmatpush.bf16.msra.mxu0 %v113
  %144 = vmatpush.bf16.msra.mxu0 %v111
  %145 = vmatpush.bf16.msra.mxu0 %v109
  %146 = vmatpush.bf16.msra.mxu0 %v107
  %147 = vmatpush.bf16.msra.mxu0 %v105
  %148 = vmatpush.bf16.msra.mxu0 %v103
  %149 = vmatpush.bf16.msra.mxu0 %v101
  %150 = vmatpush.bf16.msra.mxu0 %v99
  %151 = vmatmul.bf16.gmra.mxu0 %v27
  %v152 = vpop.f32.mrf.mxu0
  %v153 = vadd.f32 %v47, %v152
  %v154 = vpop.f32.mrf.mxu0
  %155 = vdwg.mxu0
  %v158 = vrot.slane %v153, 6
  %vm159 = vcmask 1041408
  %v160 = vsel %vm159, %v140, %v158
  %vm161 = vcmask 1043458
  %v162 = vsel %vm161, %v140, %v158
  %v163 = vrot.slane %v162, 2
  %166 = vst [vmem:[#allocation1] ss:$4 sm:$0xff] %v160
  %v167 = vld.sshfl [vmem:[#allocation1] sm:$0xff pattern:$0x73625140]
  %v168 = vld.sshfl [vmem:[#allocation1 + $0x8] sm:$0xff pattern:$0x73625140]
  %s169 = scalar_lea.vmem [#allocation1], 32
  %170 = vst [vmem:[%s169] ss:$4 sm:$0xff] %v163
  %v171 = vld.sshfl [vmem:[#allocation1 + $0x20] sm:$0xff pattern:$0x73625140]
  %v172 = vld.sshfl [vmem:[#allocation1 + $0x28] sm:$0xff pattern:$0x73625140]
  %v177 = vsel %vm159, %v167, 0.0
  %v178 = vrot.slane %v177, 4
  %v179 = vadd.f32 %v177, %v178
  %v180 = vrot.slane %v179, 2
  %v181 = vadd.f32 %v179, %v180
  %v182 = vrot.slane %v181, 1
  %v183 = vadd.f32 %v181, %v182
  %v184 = vsel %vm159, %v168, 0.0
  %v185 = vrot.slane %v184, 4
  %v186 = vadd.f32 %v184, %v185
  %v187 = vrot.slane %v186, 2
  %v188 = vadd.f32 %v186, %v187
  %v189 = vrot.slane %v188, 1
  %v190 = vadd.f32 %v188, %v189
  %v191 = vsel %vm159, %v171, 0.0
  %v192 = vrot.slane %v191, 4
  %v193 = vadd.f32 %v191, %v192
  %v194 = vrot.slane %v193, 2
  %v195 = vadd.f32 %v193, %v194
  %v196 = vrot.slane %v195, 1
  %v197 = vadd.f32 %v195, %v196
  %v198 = vsel %vm159, %v172, 0.0
  %v199 = vrot.slane %v198, 4
  %v200 = vadd.f32 %v198, %v199
  %v201 = vrot.slane %v200, 2
  %v202 = vadd.f32 %v200, %v201
  %v203 = vrot.slane %v202, 1
  %v204 = vadd.f32 %v202, %v203
  %v205 = vrcp.pop 2.0
  %v206 = vmul.f32 2.0, %v205
  %v207 = vsub.f32 1.0, %v206
  %v208 = vmul.f32 %v205, %v207
  %v209 = vadd.f32 %v205, %v208
  %vm210 = vweird.f32 %v205
  %v211 = vsel %vm210, %v205, %v209
  %v212 = vmul.f32 %v183, %v211
  %v213 = vmul.f32 %v190, %v211
  %v214 = vmul.f32 %v197, %v211
  %v215 = vmul.f32 %v204, %v211
  %v220 = vrot.slane %v213, 6
  %v221 = vrot.slane %v215, 6
  %v222 = vsel %vm159, %v212, %v220
  %v223 = vsel %vm159, %v214, %v221
  %v226 = vsub.f32 %v160, %v222
  %v227 = vsub.f32 %v163, %v223
  %v228 = vmul.f32 %v226, %v226
  %v229 = vmul.f32 %v227, %v227
  %232 = vst [vmem:[#allocation1] ss:$4 sm:$0xff] %v228
  %v233 = vld.sshfl [vmem:[#allocation1] sm:$0xff pattern:$0x73625140]
  %v234 = vld.sshfl [vmem:[#allocation1 + $0x8] sm:$0xff pattern:$0x73625140]
  %s235 = scalar_lea.vmem [#allocation1], 32
  %236 = vst [vmem:[%s235] ss:$4 sm:$0xff] %v229
  %v237 = vld.sshfl [vmem:[#allocation1 + $0x20] sm:$0xff pattern:$0x73625140]
  %v238 = vld.sshfl [vmem:[#allocation1 + $0x28] sm:$0xff pattern:$0x73625140]
  %v243 = vsel %vm159, %v233, 0.0
  %v244 = vrot.slane %v243, 4
  %v245 = vadd.f32 %v243, %v244
  %v246 = vrot.slane %v245, 2
  %v247 = vadd.f32 %v245, %v246
  %v248 = vrot.slane %v247, 1
  %v249 = vadd.f32 %v247, %v248
  %v250 = vsel %vm159, %v234, 0.0
  %v251 = vrot.slane %v250, 4
  %v252 = vadd.f32 %v250, %v251
  %v253 = vrot.slane %v252, 2
  %v254 = vadd.f32 %v252, %v253
  %v255 = vrot.slane %v254, 1
  %v256 = vadd.f32 %v254, %v255
  %v257 = vsel %vm159, %v237, 0.0
  %v258 = vrot.slane %v257, 4
  %v259 = vadd.f32 %v257, %v258
  %v260 = vrot.slane %v259, 2
  %v261 = vadd.f32 %v259, %v260
  %v262 = vrot.slane %v261, 1
  %v263 = vadd.f32 %v261, %v262
  %v264 = vsel %vm159, %v238, 0.0
  %v265 = vrot.slane %v264, 4
  %v266 = vadd.f32 %v264, %v265
  %v267 = vrot.slane %v266, 2
  %v268 = vadd.f32 %v266, %v267
  %v269 = vrot.slane %v268, 1
  %v270 = vadd.f32 %v268, %v269
  %v271 = vmul.f32 %v249, %v211
  %v272 = vmul.f32 %v256, %v211
  %v273 = vmul.f32 %v263, %v211
  %v274 = vmul.f32 %v270, %v211
  %v275 = vadd.f32 %v271, 1e-05
  %v276 = vadd.f32 %v272, 1e-05
  %v277 = vadd.f32 %v273, 1e-05
  %v278 = vadd.f32 %v274, 1e-05
  %v279 = vrsqrt.pop %v275
  %v280 = vmul.f32 %v279, %v275
  %v281 = vmul.f32 %v280, %v279
  %v282 = vmul.f32 0.5, %v281
  %v283 = vsub.f32 1.5, %v282
  %v284 = vmul.f32 %v279, %v283
  %vm285 = vweird.f32 %v275
  %vm286 = vweird.f32 %v279
  %vm287 = vmor %vm285, %vm286
  %v288 = vsel %vm287, %v279, %v284
  %v289 = vrsqrt.pop %v276
  %v290 = vmul.f32 %v289, %v276
  %v291 = vmul.f32 %v290, %v289
  %v292 = vmul.f32 0.5, %v291
  %v293 = vsub.f32 1.5, %v292
  %v294 = vmul.f32 %v289, %v293
  %vm295 = vweird.f32 %v276
  %vm296 = vweird.f32 %v289
  %vm297 = vmor %vm295, %vm296
  %v298 = vsel %vm297, %v289, %v294
  %v299 = vrsqrt.pop %v277
  %v300 = vmul.f32 %v299, %v277
  %v301 = vmul.f32 %v300, %v299
  %v302 = vmul.f32 0.5, %v301
  %v303 = vsub.f32 1.5, %v302
  %v304 = vmul.f32 %v299, %v303
  %vm305 = vweird.f32 %v277
  %vm306 = vweird.f32 %v299
  %vm307 = vmor %vm305, %vm306
  %v308 = vsel %vm307, %v299, %v304
  %v309 = vrsqrt.pop %v278
  %v310 = vmul.f32 %v309, %v278
  %v311 = vmul.f32 %v310, %v309
  %v312 = vmul.f32 0.5, %v311
  %v313 = vsub.f32 1.5, %v312
  %v314 = vmul.f32 %v309, %v313
  %vm315 = vweird.f32 %v278
  %vm316 = vweird.f32 %v309
  %vm317 = vmor %vm315, %vm316
  %v318 = vsel %vm317, %v309, %v314
  %v323 = vrot.slane %v298, 6
  %v324 = vrot.slane %v318, 6
  %v325 = vsel %vm159, %v288, %v323
  %v326 = vsel %vm159, %v308, %v324
  %v329 = vmul.f32 %v226, %v325
  %v330 = vmul.f32 %v227, %v326
  %v331 = vld [vmem:[%s3] sm:$0x3]
  %v333 = vperm.slane %v331, 0
  %v334 = vperm.slane %v331, 1
  %v335 = vrot.slane %v334, 6
  %v336 = vsel %vm159, %v333, %v335
  %v338 = vmul.f32 %v329, %v336
  %v339 = vmul.f32 %v330, %v336
  %v340 = vld [vmem:[%s4] sm:$0x3]
  %v342 = vperm.slane %v340, 0
  %v343 = vperm.slane %v340, 1
  %v344 = vrot.slane %v343, 6
  %v345 = vsel %vm159, %v342, %v344
  %v347 = vadd.f32 %v338, %v345
  %v348 = vadd.f32 %v339, %v345
  %v349 = vmax.f32 %v347, 0.0
  %v350 = vmax.f32 %v348, 0.0
  %353 = vst [vmem:[#allocation1] ss:$4 sm:$0xff] %v349
  %s354 = scalar_lea.vmem [#allocation1], 1
  %355 = vst [vmem:[%s354] ss:$4 sm:$0xff] %v350
  %v356 = vld.sshfl [vmem:[#allocation1] sm:$0xff pattern:$0x73625140]
  %v357 = vld.sshfl [vmem:[#allocation1 + $0x8] sm:$0xff pattern:$0x73625140]
  %v360 = vpack.c.bf16 %v356, %v356
  %v361 = vpack.c.bf16 %v357, %v357
  %v362 = vld [vmem:[%s5] sm:$0xf]
  %v363 = vld [vmem:[%s5 + $0x4] sm:$0xf]
  %v364 = vld [vmem:[%s5 + $0x8] sm:$0xf]
  %v365 = vld [vmem:[%s5 + $0xc] sm:$0xf]
  %v366 = vld [vmem:[%s5 + $0x10] sm:$0xf]
  %v367 = vld [vmem:[%s5 + $0x14] sm:$0xf]
  %v368 = vld [vmem:[%s5 + $0x18] sm:$0xf]
  %v369 = vld [vmem:[%s5 + $0x1c] sm:$0xf]
  %v370 = vld [vmem:[%s5 + $0x20] sm:$0xf]
  %v371 = vld [vmem:[%s5 + $0x24] sm:$0xf]
  %v372 = vld [vmem:[%s5 + $0x28] sm:$0xf]
  %v373 = vld [vmem:[%s5 + $0x2c] sm:$0xf]
  %v374 = vld [vmem:[%s5 + $0x30] sm:$0xf]
  %v375 = vld [vmem:[%s5 + $0x34] sm:$0xf]
  %v376 = vld [vmem:[%s5 + $0x38] sm:$0xf]
  %v377 = vld [vmem:[%s5 + $0x3c] sm:$0xf]
  %v378 = vld [vmem:[%s5 + $0x40] sm:$0xf]
  %v379 = vld [vmem:[%s5 + $0x44] sm:$0xf]
  %v380 = vld [vmem:[%s5 + $0x48] sm:$0xf]
  %v381 = vld [vmem:[%s5 + $0x4c] sm:$0xf]
  %v382 = vld [vmem:[%s5 + $0x50] sm:$0xf]
  %v383 = vld [vmem:[%s5 + $0x54] sm:$0xf]
  %v384 = vld [vmem:[%s5 + $0x58] sm:$0xf]
  %v385 = vld [vmem:[%s5 + $0x5c] sm:$0xf]
  %v386 = vld [vmem:[%s5 + $0x60] sm:$0xf]
  %v387 = vld [vmem:[%s5 + $0x64] sm:$0xf]
  %v388 = vld [vmem:[%s5 + $0x68] sm:$0xf]
  %v389 = vld [vmem:[%s5 + $0x6c] sm:$0xf]
  %v390 = vld [vmem:[%s5 + $0x70] sm:$0xf]
  %v391 = vld [vmem:[%s5 + $0x74] sm:$0xf]
  %v392 = vld [vmem:[%s5 + $0x78] sm:$0xf]
  %v393 = vld [vmem:[%s5 + $0x7c] sm:$0xf]
  %v394 = vld [vmem:[%s6] sm:$0x1]
  %v396 = vperm.slane %v394, 0
  %v430 = vunpack.c.l.b16 %v362
  %v431 = vunpack.c.l.b16 %v363
  %v432 = vunpack.c.l.b16 %v364
  %v433 = vunpack.c.l.b16 %v365
  %v434 = vunpack.c.l.b16 %v366
  %v435 = vunpack.c.l.b16 %v367
  %v436 = vunpack.c.l.b16 %v368
  %v437 = vunpack.c.l.b16 %v369
  %v438 = vunpack.c.l.b16 %v370
  %v439 = vunpack.c.l.b16 %v371
  %v440 = vunpack.c.l.b16 %v372
  %v441 = vunpack.c.l.b16 %v373
  %v442 = vunpack.c.l.b16 %v374
  %v443 = vunpack.c.l.b16 %v375
  %v444 = vunpack.c.l.b16 %v376
  %v445 = vunpack.c.l.b16 %v377
  %v446 = vunpack.c.l.b16 %v378
  %v447 = vunpack.c.l.b16 %v379
  %v448 = vunpack.c.l.b16 %v380
  %v449 = vunpack.c.l.b16 %v381
  %v450 = vunpack.c.l.b16 %v382
  %v451 = vunpack.c.l.b16 %v383
  %v452 = vunpack.c.l.b16 %v384
  %v453 = vunpack.c.l.b16 %v385
  %v454 = vunpack.c.l.b16 %v386
  %v455 = vunpack.c.l.b16 %v387
  %v456 = vunpack.c.l.b16 %v388
  %v457 = vunpack.c.l.b16 %v389
  %v458 = vunpack.c.l.b16 %v390
  %v459 = vunpack.c.l.b16 %v391
  %v460 = vunpack.c.l.b16 %v392
  %v461 = vunpack.c.l.b16 %v393
  %v462 = vpack.c.b16 %v431, %v430
  %v463 = vpack.c.b16 %v433, %v432
  %v464 = vpack.c.b16 %v435, %v434
  %v465 = vpack.c.b16 %v437, %v436
  %v466 = vpack.c.b16 %v439, %v438
  %v467 = vpack.c.b16 %v441, %v440
  %v468 = vpack.c.b16 %v443, %v442
  %v469 = vpack.c.b16 %v445, %v444
  %v470 = vpack.c.b16 %v447, %v446
  %v471 = vpack.c.b16 %v449, %v448
  %v472 = vpack.c.b16 %v451, %v450
  %v473 = vpack.c.b16 %v453, %v452
  %v474 = vpack.c.b16 %v455, %v454
  %v475 = vpack.c.b16 %v457, %v456
  %v476 = vpack.c.b16 %v459, %v458
  %v477 = vpack.c.b16 %v461, %v460
  %494 = vmatpush.bf16.msra.mxu0 %v469
  %495 = vmatpush.bf16.msra.mxu0 %v468
  %496 = vmatpush.bf16.msra.mxu0 %v467
  %497 = vmatpush.bf16.msra.mxu0 %v466
  %498 = vmatpush.bf16.msra.mxu0 %v465
  %499 = vmatpush.bf16.msra.mxu0 %v464
  %500 = vmatpush.bf16.msra.mxu0 %v463
  %501 = vmatpush.bf16.msra.mxu0 %v462
  %502 = vmatmul.bf16.gmra.mxu0 %v360
  %v503 = vpop.f32.mrf.mxu0
  %v504 = vadd.f32 %v396, %v503
  %v505 = vpop.f32.mrf.mxu0
  %506 = vdwg.mxu0
  %507 = vmatpush.bf16.msra.mxu0 %v477
  %508 = vmatpush.bf16.msra.mxu0 %v476
  %509 = vmatpush.bf16.msra.mxu0 %v475
  %510 = vmatpush.bf16.msra.mxu0 %v474
  %511 = vmatpush.bf16.msra.mxu0 %v473
  %512 = vmatpush.bf16.msra.mxu0 %v472
  %513 = vmatpush.bf16.msra.mxu0 %v471
  %514 = vmatpush.bf16.msra.mxu0 %v470
  %515 = vmatmul.bf16.gmra.mxu0 %v361
  %v516 = vpop.f32.mrf.mxu0
  %v517 = vadd.f32 %v504, %v516
  %v518 = vpop.f32.mrf.mxu0
  %519 = vdwg.mxu0
  %520 = vst [vmem:[%s7] sm:$0xf] %v517
  // Predicated region
  $region30: #{_lambda_.3} parent=0 // pred_check
    _
  $region31: #{_lambda_.3} parent=0 // pred_check_branch
    %522 = sbr.rel (0) target = $region33
  $region32: #{_lambda_.3} parent=0 // pred_region
    _
  $region33: #{_lambda_.3} parent=0 // pred_fallthru
    _
  // Predicated region
  $region34: #{_lambda_.3} parent=0 // pred_check
    _
  $region35: #{_lambda_.3} parent=0 // pred_check_branch
    %524 = sbr.rel (0) target = $region37
  $region36: #{_lambda_.3} parent=0 // pred_region
    _
  $region37: #{_lambda_.3} parent=0 // pred_fallthru
    _

// kernel: _lambda_.2
$region0: #{_lambda_.2}
  #allocation0 [shape = 'u32[]', space=smem, size = 0x4, offset = 0x4, fixed_abs, tag = 'smem constant byte address 0x4 - core index']
  #allocation1 [shape = 'u32[72,128]{1,0:T(1,128)}', space=vmem, size = 0x9000, scoped, tag = 'internal scratch']
  #allocation2 [shape = 'f32[2,10,10,32]{3,2,1,0:T(8,128)}', space=vmem, size = 0x28000, scoped, tag = 'scratch operand']
  %s0 = inlined_call_operand.vmem [shape: bf16[1024,36], index: 0, kind: input, shape index: {}]
  %s1 = inlined_call_operand.vmem [shape: bf16[36,32], index: 1, kind: input, shape index: {}]
  %s2 = inlined_call_operand.vmem [shape: f32[1,32], index: 2, kind: input, shape index: {}]
  %s3 = inlined_call_operand.vmem [shape: bf16[288,256], index: 3, kind: input, shape index: {}]
  %s4 = inlined_call_operand.vmem [shape: f32[1,256], index: 4, kind: input, shape index: {}]
  %s5 = inlined_call_operand.vmem [shape: f32[2,2,256], index: 5, kind: output, shape index: {}]
  %s6 = sld [smem:[#allocation0]]
  $region53: #{_lambda_.2} parent=0
    _
  %s8 = ssub.s32 1, %s6
  %s9 = scalar_select 0, %s8, %s6
  loop: start=0, step=1, limit=4
  $region2: #{_lambda_.2} parent=0 // loop_pre_header
    _
  $region3: #{_lambda_.2} parent=0 // loop_header
    %s11 = sphi 0, %s15
    %p12 = scmp.ge.s32.totalorder %s11, 4
    %s21 = sphi 0, %s23
    %s24 = sphi 0, %s21
    %s25 = sphi 0, %s24
    %s41 = sphi 0, %s25
    %s45 = sphi 0, %s45
    %s47 = sphi 0, %s45
    %s48 = sphi 0, %s47
    %s62 = sphi 0, %s48
    %s66 = sphi 0, %s66
    %s68 = sphi 0, %s66
    %s69 = sphi 0, %s68
    %s83 = sphi 0, %s69
    %s87 = sphi 0, %s87
    %s89 = sphi 0, %s87
    %s90 = sphi 0, %s89
    %s104 = sphi 0, %s90
    %s108 = sphi 0, %s108
    %s110 = sphi 0, %s108
    %s111 = sphi 0, %s110
    %s125 = sphi 0, %s111
    %s131 = sphi 0, %s133
    %s134 = sphi 0, %s131
    %s135 = sphi 0, %s134
    %s151 = sphi 0, %s135
  $region4: #{_lambda_.2} parent=0 // loop_header_branch
    %14 = sbr.rel (%p12) target = $region8
  $region5: #{_lambda_.2} parent=0 // loop_body
    %s16 = ssub.s32 %s11, 1
    %s17 = ssub.s32 %s11, 2
    %s18 = sadd.s32 %s11, 1
    %s19 = ssub.s32 %s11, %s18
    %p20 = scmp.eq.s32.totalorder %s19, 0
    %s22 = sadd.s32 %s21, 1
    %s23 = scalar_select %p20, %s21, %s22
    %p26 = pneg %p20
    %p27 = scmp.eq.s32.totalorder %s11, 1
    %p28 = por %p26, %p27
    %p29 = scmp.ne.s32.totalorder %s21, %s24
    %p30 = scmp.eq.s32.totalorder %s11, 0
    %p31 = por %p29, %p30
    %p32 = scmp.ne.s32.totalorder %s21, %s24
    %p33 = scmp.eq.s32.totalorder %s16, 1
    %p34 = por %p32, %p33
    %p35 = scmp.ne.s32.totalorder %s24, %s25
    %p36 = scmp.eq.s32.totalorder %s16, 0
    %p37 = por %p35, %p36
    %p38 = scmp.ne.s32.totalorder %s24, %s25
    %p39 = scmp.eq.s32.totalorder %s17, 1
    %p40 = por %p38, %p39
    %p42 = scmp.ne.s32.totalorder %s25, %s41
    %p43 = scmp.eq.s32.totalorder %s17, 0
    %p44 = por %p42, %p43
    %s46 = sadd.s32 %s45, 1
    %p49 = scmp.eq.s32.totalorder %s11, 1
    %p50 = scmp.ne.s32.totalorder %s45, %s47
    %p51 = scmp.eq.s32.totalorder %s11, 0
    %p52 = por %p50, %p51
    %p53 = scmp.ne.s32.totalorder %s45, %s47
    %p54 = scmp.eq.s32.totalorder %s16, 1
    %p55 = por %p53, %p54
    %p56 = scmp.ne.s32.totalorder %s47, %s48
    %p57 = scmp.eq.s32.totalorder %s16, 0
    %p58 = por %p56, %p57
    %p59 = scmp.ne.s32.totalorder %s47, %s48
    %p60 = scmp.eq.s32.totalorder %s17, 1
    %p61 = por %p59, %p60
    %p63 = scmp.ne.s32.totalorder %s48, %s62
    %p64 = scmp.eq.s32.totalorder %s17, 0
    %p65 = por %p63, %p64
    %s67 = sadd.s32 %s66, 1
    %p70 = scmp.eq.s32.totalorder %s11, 1
    %p71 = scmp.ne.s32.totalorder %s66, %s68
    %p72 = scmp.eq.s32.totalorder %s11, 0
    %p73 = por %p71, %p72
    %p74 = scmp.ne.s32.totalorder %s66, %s68
    %p75 = scmp.eq.s32.totalorder %s16, 1
    %p76 = por %p74, %p75
    %p77 = scmp.ne.s32.totalorder %s68, %s69
    %p78 = scmp.eq.s32.totalorder %s16, 0
    %p79 = por %p77, %p78
    %p80 = scmp.ne.s32.totalorder %s68, %s69
    %p81 = scmp.eq.s32.totalorder %s17, 1
    %p82 = por %p80, %p81
    %p84 = scmp.ne.s32.totalorder %s69, %s83
    %p85 = scmp.eq.s32.totalorder %s17, 0
    %p86 = por %p84, %p85
    %s88 = sadd.s32 %s87, 1
    %p91 = scmp.eq.s32.totalorder %s11, 1
    %p92 = scmp.ne.s32.totalorder %s87, %s89
    %p93 = scmp.eq.s32.totalorder %s11, 0
    %p94 = por %p92, %p93
    %p95 = scmp.ne.s32.totalorder %s87, %s89
    %p96 = scmp.eq.s32.totalorder %s16, 1
    %p97 = por %p95, %p96
    %p98 = scmp.ne.s32.totalorder %s89, %s90
    %p99 = scmp.eq.s32.totalorder %s16, 0
    %p100 = por %p98, %p99
    %p101 = scmp.ne.s32.totalorder %s89, %s90
    %p102 = scmp.eq.s32.totalorder %s17, 1
    %p103 = por %p101, %p102
    %p105 = scmp.ne.s32.totalorder %s90, %s104
    %p106 = scmp.eq.s32.totalorder %s17, 0
    %p107 = por %p105, %p106
    %s109 = sadd.s32 %s108, 1
    %p112 = scmp.eq.s32.totalorder %s11, 1
    %p113 = scmp.ne.s32.totalorder %s108, %s110
    %p114 = scmp.eq.s32.totalorder %s11, 0
    %p115 = por %p113, %p114
    %p116 = scmp.ne.s32.totalorder %s108, %s110
    %p117 = scmp.eq.s32.totalorder %s16, 1
    %p118 = por %p116, %p117
    %p119 = scmp.ne.s32.totalorder %s110, %s111
    %p120 = scmp.eq.s32.totalorder %s16, 0
    %p121 = por %p119, %p120
    %p122 = scmp.ne.s32.totalorder %s110, %s111
    %p123 = scmp.eq.s32.totalorder %s17, 1
    %p124 = por %p122, %p123
    %p126 = scmp.ne.s32.totalorder %s111, %s125
    %p127 = scmp.eq.s32.totalorder %s17, 0
    %p128 = por %p126, %p127
    %s129 = ssub.s32 %s11, %s18
    %p130 = scmp.eq.s32.totalorder %s129, 0
    %s132 = sadd.s32 %s131, 1
    %s133 = scalar_select %p130, %s131, %s132
    %p136 = pneg %p130
    %p137 = scmp.eq.s32.totalorder %s11, 1
    %p138 = por %p136, %p137
    %p139 = scmp.ne.s32.totalorder %s131, %s134
    %p140 = scmp.eq.s32.totalorder %s11, 0
    %p141 = por %p139, %p140
    %p142 = scmp.ne.s32.totalorder %s131, %s134
    %p143 = scmp.eq.s32.totalorder %s16, 1
    %p144 = por %p142, %p143
    %p145 = scmp.ne.s32.totalorder %s134, %s135
    %p146 = scmp.eq.s32.totalorder %s16, 0
    %p147 = por %p145, %p146
    %p148 = scmp.ne.s32.totalorder %s134, %s135
    %p149 = scmp.eq.s32.totalorder %s17, 1
    %p150 = por %p148, %p149
    %p152 = scmp.ne.s32.totalorder %s135, %s151
    %p153 = scmp.eq.s32.totalorder %s17, 0
    %p154 = por %p152, %p153
    %p155 = scmp.le.s32.totalorder 1, %s11
    %p156 = scmp.lt.s32.totalorder %s11, 3
    %p157 = pnand %p155, %p156
    %p158 = pneg %p157
    // Predicated region
    $region9: #{_lambda_.2} parent=5 // pred_check
      _
    $region10: #{_lambda_.2} parent=5 // pred_check_branch
      %160 = sbr.rel (%p157) target = $region12
    $region11: #{_lambda_.2} parent=5 // pred_region
      %s161 = ssub.s32 %s11, 1
      // Predicated region
      $region13: #{_lambda_.2} parent=11 // pred_check
        %p162 = pneg %p58
      $region14: #{_lambda_.2} parent=11 // pred_check_branch
        %164 = sbr.rel (%p162) target = $region16
      $region15: #{_lambda_.2} parent=11 // pred_region
        _
      $region16: #{_lambda_.2} parent=11 // pred_fallthru
        _
      // Predicated region
      $region17: #{_lambda_.2} parent=11 // pred_check
        %p165 = pneg %p79
      $region18: #{_lambda_.2} parent=11 // pred_check_branch
        %167 = sbr.rel (%p165) target = $region20
      $region19: #{_lambda_.2} parent=11 // pred_region
        _
      $region20: #{_lambda_.2} parent=11 // pred_fallthru
        _
      // Predicated region
      $region21: #{_lambda_.2} parent=11 // pred_check
        %p168 = pneg %p100
      $region22: #{_lambda_.2} parent=11 // pred_check_branch
        %170 = sbr.rel (%p168) target = $region24
      $region23: #{_lambda_.2} parent=11 // pred_region
        _
      $region24: #{_lambda_.2} parent=11 // pred_fallthru
        _
      // Predicated region
      $region25: #{_lambda_.2} parent=11 // pred_check
        %p171 = pneg %p121
      $region26: #{_lambda_.2} parent=11 // pred_check_branch
        %173 = sbr.rel (%p171) target = $region28
      $region27: #{_lambda_.2} parent=11 // pred_region
        _
      $region28: #{_lambda_.2} parent=11 // pred_fallthru
        _
    $region12: #{_lambda_.2} parent=5 // pred_fallthru
      _
    %p174 = scmp.lt.s32.totalorder %s11, 2
    // Predicated region
    $region29: #{_lambda_.2} parent=5 // pred_check
      %p175 = pneg %p174
    $region30: #{_lambda_.2} parent=5 // pred_check_branch
      %177 = sbr.rel (%p175) target = $region32
    $region31: #{_lambda_.2} parent=5 // pred_region
      // Predicated region
      $region33: #{_lambda_.2} parent=31 // pred_check
        %p178 = pneg %p31
      $region34: #{_lambda_.2} parent=31 // pred_check_branch
        %180 = sbr.rel (%p178) target = $region36
      $region35: #{_lambda_.2} parent=31 // pred_region
        %s181 = smul.u32 64, %s11
        %p182 = scmp.lt.s32.totalorder %s181, 127
        %s183 = scalar_select %p182, %s181, 127
        %s184 = smul.addr %s183, 4
        %s185 = scalar_lea.vmem %s0, %s184
        %s186 = smul.u32 64, %s11
      $region36: #{_lambda_.2} parent=31 // pred_fallthru
        _
    $region32: #{_lambda_.2} parent=5 // pred_fallthru
      _
    %p187 = scmp.le.s32.totalorder 1, %s11
    %p188 = scmp.lt.s32.totalorder %s11, 3
    %p189 = pnand %p187, %p188
    %p190 = pneg %p189
    // Predicated region
    $region37: #{_lambda_.2} parent=5 // pred_check
      _
    $region38: #{_lambda_.2} parent=5 // pred_check_branch
      %192 = sbr.rel (%p189) target = $region40
    $region39: #{_lambda_.2} parent=5 // pred_region
      %s193 = ssub.s32 %s11, 1
      %s194 = smul.u32 64, %s16
      %p195 = scmp.lt.s32.totalorder %s194, 127
      %s196 = scalar_select %p195, %s194, 127
      %s197 = smul.addr %s196, 4
      %s198 = scalar_lea.vmem %s0, %s197
      %p199 = pneg %p37
      %p200 = pneg %p34
      %p201 = pneg %p58
      %p202 = pneg %p55
      %p203 = pneg %p79
      %p204 = pneg %p76
      %p205 = pneg %p100
      %p206 = pneg %p97
      %p207 = pneg %p121
      %p208 = pneg %p118
      %p209 = pneg %p147
      %p210 = pneg %p144
      %p211 = scmp.lt.s32.totalorder %s16, 1
      %s212 = scalar_select %p211, %s16, 1
      %s213 = smul.addr %s212, 2
      %s214 = smul.addr %s213, 2
      %s215 = scalar_lea.vmem %s5, %s214
      %s216 = smul.u32 64, %s16
      %p217 = scmp.lt.s32.totalorder %s216, 127
      %s218 = scalar_select %p217, %s216, 127
      %s219 = smul.addr %s218, 4
      %s220 = scalar_lea.vmem %s0, %s219
      %s221 = smul.u32 64, %s16
      %p222 = scmp.lt.s32.totalorder %s16, 1
      %s223 = scalar_select %p222, %s16, 1
      %s224 = smul.addr %s223, 2
      %s225 = smul.addr %s224, 2
      %s226 = scalar_lea.vmem %s5, %s225
      %v228 = vld [vmem:[%s220] sm:$0xf]
      %v229 = vld [vmem:[%s220 + $0x4] sm:$0xf]
      %v230 = vld [vmem:[%s220 + $0x8] sm:$0xf]
      %v231 = vld [vmem:[%s220 + $0xc] sm:$0xf]
      %v232 = vld [vmem:[%s220 + $0x10] sm:$0xf]
      %v233 = vld [vmem:[%s220 + $0x14] sm:$0xf]
      %v234 = vld [vmem:[%s220 + $0x18] sm:$0xf]
      %v235 = vld [vmem:[%s220 + $0x1c] sm:$0xf]
      %v236 = vld [vmem:[%s220 + $0x20] sm:$0xf]
      %v237 = vld [vmem:[%s220 + $0x24] sm:$0xf]
      %v238 = vld [vmem:[%s220 + $0x28] sm:$0xf]
      %v239 = vld [vmem:[%s220 + $0x2c] sm:$0xf]
      %v240 = vld [vmem:[%s220 + $0x30] sm:$0xf]
      %v241 = vld [vmem:[%s220 + $0x34] sm:$0xf]
      %v242 = vld [vmem:[%s220 + $0x38] sm:$0xf]
      %v243 = vld [vmem:[%s220 + $0x3c] sm:$0xf]
      %v244 = vld [vmem:[%s220 + $0x40] sm:$0xf]
      %v245 = vld [vmem:[%s220 + $0x44] sm:$0xf]
      %v246 = vld [vmem:[%s220 + $0x48] sm:$0xf]
      %v247 = vld [vmem:[%s220 + $0x4c] sm:$0xf]
      %v248 = vld [vmem:[%s220 + $0x50] sm:$0xf]
      %v249 = vld [vmem:[%s220 + $0x54] sm:$0xf]
      %v250 = vld [vmem:[%s220 + $0x58] sm:$0xf]
      %v251 = vld [vmem:[%s220 + $0x5c] sm:$0xf]
      %v252 = vld [vmem:[%s220 + $0x60] sm:$0xf]
      %v253 = vld [vmem:[%s220 + $0x64] sm:$0xf]
      %v254 = vld [vmem:[%s220 + $0x68] sm:$0xf]
      %v255 = vld [vmem:[%s220 + $0x6c] sm:$0xf]
      %v256 = vld [vmem:[%s220 + $0x70] sm:$0xf]
      %v257 = vld [vmem:[%s220 + $0x74] sm:$0xf]
      %v258 = vld [vmem:[%s220 + $0x78] sm:$0xf]
      %v259 = vld [vmem:[%s220 + $0x7c] sm:$0xf]
      %v260 = vld [vmem:[%s220 + $0x80] sm:$0xf]
      %v261 = vld [vmem:[%s220 + $0x84] sm:$0xf]
      %v262 = vld [vmem:[%s220 + $0x88] sm:$0xf]
      %v263 = vld [vmem:[%s220 + $0x8c] sm:$0xf]
      %v264 = vld [vmem:[%s220 + $0x90] sm:$0xf]
      %v265 = vld [vmem:[%s220 + $0x94] sm:$0xf]
      %v266 = vld [vmem:[%s220 + $0x98] sm:$0xf]
      %v267 = vld [vmem:[%s220 + $0x9c] sm:$0xf]
      %v268 = vld [vmem:[%s220 + $0xa0] sm:$0xf]
      %v269 = vld [vmem:[%s220 + $0xa4] sm:$0xf]
      %v270 = vld [vmem:[%s220 + $0xa8] sm:$0xf]
      %v271 = vld [vmem:[%s220 + $0xac] sm:$0xf]
      %v272 = vld [vmem:[%s220 + $0xb0] sm:$0xf]
      %v273 = vld [vmem:[%s220 + $0xb4] sm:$0xf]
      %v274 = vld [vmem:[%s220 + $0xb8] sm:$0xf]
      %v275 = vld [vmem:[%s220 + $0xbc] sm:$0xf]
      %v276 = vld [vmem:[%s220 + $0xc0] sm:$0xf]
      %v277 = vld [vmem:[%s220 + $0xc4] sm:$0xf]
      %v278 = vld [vmem:[%s220 + $0xc8] sm:$0xf]
      %v279 = vld [vmem:[%s220 + $0xcc] sm:$0xf]
      %v280 = vld [vmem:[%s220 + $0xd0] sm:$0xf]
      %v281 = vld [vmem:[%s220 + $0xd4] sm:$0xf]
      %v282 = vld [vmem:[%s220 + $0xd8] sm:$0xf]
      %v283 = vld [vmem:[%s220 + $0xdc] sm:$0xf]
      %v284 = vld [vmem:[%s220 + $0xe0] sm:$0xf]
      %v285 = vld [vmem:[%s220 + $0xe4] sm:$0xf]
      %v286 = vld [vmem:[%s220 + $0xe8] sm:$0xf]
      %v287 = vld [vmem:[%s220 + $0xec] sm:$0xf]
      %v288 = vld [vmem:[%s220 + $0xf0] sm:$0xf]
      %v289 = vld [vmem:[%s220 + $0xf4] sm:$0xf]
      %v290 = vld [vmem:[%s220 + $0xf8] sm:$0xf]
      %v291 = vld [vmem:[%s220 + $0xfc] sm:$0xf]
      %v292 = vld [vmem:[%s1] sm:$0xf]
      %v293 = vld [vmem:[%s1 + $0x4] sm:$0xf]
      %v294 = vld [vmem:[%s1 + $0x8] sm:$0xf]
      %v295 = vld [vmem:[%s1 + $0xc] sm:$0xf]
      %v296 = vld [vmem:[%s1 + $0x10] sm:$0x3]
      %v297 = vld [vmem:[%s2] sm:$0x1]
      %v299 = vperm.slane %v297, 0
      %v365 = vunpack.c.l.b16 %v228
      %v366 = vunpack.c.l.b16 %v229
      %v367 = vunpack.c.l.b16 %v230
      %v368 = vunpack.c.l.b16 %v231
      %v369 = vunpack.c.l.b16 %v232
      %v370 = vunpack.c.l.b16 %v233
      %v371 = vunpack.c.l.b16 %v234
      %v372 = vunpack.c.l.b16 %v235
      %v373 = vunpack.c.l.b16 %v236
      %v374 = vunpack.c.l.b16 %v237
      %v375 = vunpack.c.l.b16 %v238
      %v376 = vunpack.c.l.b16 %v239
      %v377 = vunpack.c.l.b16 %v240
      %v378 = vunpack.c.l.b16 %v241
      %v379 = vunpack.c.l.b16 %v242
      %v380 = vunpack.c.l.b16 %v243
      %v381 = vunpack.c.l.b16 %v244
      %v382 = vunpack.c.l.b16 %v245
      %v383 = vunpack.c.l.b16 %v246
      %v384 = vunpack.c.l.b16 %v247
      %v385 = vunpack.c.l.b16 %v248
      %v386 = vunpack.c.l.b16 %v249
      %v387 = vunpack.c.l.b16 %v250
      %v388 = vunpack.c.l.b16 %v251
      %v389 = vunpack.c.l.b16 %v252
      %v390 = vunpack.c.l.b16 %v253
      %v391 = vunpack.c.l.b16 %v254
      %v392 = vunpack.c.l.b16 %v255
      %v393 = vunpack.c.l.b16 %v256
      %v394 = vunpack.c.l.b16 %v257
      %v395 = vunpack.c.l.b16 %v258
      %v396 = vunpack.c.l.b16 %v259
      %v397 = vunpack.c.l.b16 %v260
      %v398 = vunpack.c.l.b16 %v261
      %v399 = vunpack.c.l.b16 %v262
      %v400 = vunpack.c.l.b16 %v263
      %v401 = vunpack.c.l.b16 %v264
      %v402 = vunpack.c.l.b16 %v265
      %v403 = vunpack.c.l.b16 %v266
      %v404 = vunpack.c.l.b16 %v267
      %v405 = vunpack.c.l.b16 %v268
      %v406 = vunpack.c.l.b16 %v269
      %v407 = vunpack.c.l.b16 %v270
      %v408 = vunpack.c.l.b16 %v271
      %v409 = vunpack.c.l.b16 %v272
      %v410 = vunpack.c.l.b16 %v273
      %v411 = vunpack.c.l.b16 %v274
      %v412 = vunpack.c.l.b16 %v275
      %v413 = vunpack.c.l.b16 %v276
      %v414 = vunpack.c.l.b16 %v277
      %v415 = vunpack.c.l.b16 %v278
      %v416 = vunpack.c.l.b16 %v279
      %v417 = vunpack.c.l.b16 %v280
      %v418 = vunpack.c.l.b16 %v281
      %v419 = vunpack.c.l.b16 %v282
      %v420 = vunpack.c.l.b16 %v283
      %v421 = vunpack.c.l.b16 %v284
      %v422 = vunpack.c.l.b16 %v285
      %v423 = vunpack.c.l.b16 %v286
      %v424 = vunpack.c.l.b16 %v287
      %v425 = vunpack.c.l.b16 %v288
      %v426 = vunpack.c.l.b16 %v289
      %v427 = vunpack.c.l.b16 %v290
      %v428 = vunpack.c.l.b16 %v291
      %v429 = vpack.c.b16 %v366, %v365
      %v430 = vpack.c.b16 %v368, %v367
      %v431 = vpack.c.b16 %v370, %v369
      %v432 = vpack.c.b16 %v372, %v371
      %v433 = vpack.c.b16 %v374, %v373
      %v434 = vpack.c.b16 %v376, %v375
      %v435 = vpack.c.b16 %v378, %v377
      %v436 = vpack.c.b16 %v380, %v379
      %v437 = vpack.c.b16 %v382, %v381
      %v438 = vpack.c.b16 %v384, %v383
      %v439 = vpack.c.b16 %v386, %v385
      %v440 = vpack.c.b16 %v388, %v387
      %v441 = vpack.c.b16 %v390, %v389
      %v442 = vpack.c.b16 %v392, %v391
      %v443 = vpack.c.b16 %v394, %v393
      %v444 = vpack.c.b16 %v396, %v395
      %v445 = vpack.c.b16 %v398, %v397
      %v446 = vpack.c.b16 %v400, %v399
      %v447 = vpack.c.b16 %v402, %v401
      %v448 = vpack.c.b16 %v404, %v403
      %v449 = vpack.c.b16 %v406, %v405
      %v450 = vpack.c.b16 %v408, %v407
      %v451 = vpack.c.b16 %v410, %v409
      %v452 = vpack.c.b16 %v412, %v411
      %v453 = vpack.c.b16 %v414, %v413
      %v454 = vpack.c.b16 %v416, %v415
      %v455 = vpack.c.b16 %v418, %v417
      %v456 = vpack.c.b16 %v420, %v419
      %v457 = vpack.c.b16 %v422, %v421
      %v458 = vpack.c.b16 %v424, %v423
      %v459 = vpack.c.b16 %v426, %v425
      %v460 = vpack.c.b16 %v428, %v427
      %v466 = vunpack.c.l.b16 %v292
      %v467 = vunpack.c.l.b16 %v293
      %v468 = vunpack.c.l.b16 %v294
      %v469 = vunpack.c.l.b16 %v295
      %v470 = vunpack.c.l.b16 %v296
      %v471 = vpack.c.b16 %v467, %v466
      %v472 = vpack.c.b16 %v469, %v468
      %v473 = vpack.c.b16 %v470, %v470
      %vm476 = vcmask 293888
      %v478 = vsel %vm476, %v429, 0
      %v481 = vsel %vm476, %v430, 0
      %v484 = vsel %vm476, %v431, 0
      %v487 = vsel %vm476, %v432, 0
      %v490 = vsel %vm476, %v433, 0
      %v493 = vsel %vm476, %v434, 0
      %v496 = vsel %vm476, %v435, 0
      %v499 = vsel %vm476, %v436, 0
      %v502 = vsel %vm476, %v437, 0
      %v505 = vsel %vm476, %v438, 0
      %v508 = vsel %vm476, %v439, 0
      %v511 = vsel %vm476, %v440, 0
      %v514 = vsel %vm476, %v441, 0
      %v517 = vsel %vm476, %v442, 0
      %v520 = vsel %vm476, %v443, 0
      %v523 = vsel %vm476, %v444, 0
      %v526 = vsel %vm476, %v445, 0
      %v529 = vsel %vm476, %v446, 0
      %v532 = vsel %vm476, %v447, 0
      %v535 = vsel %vm476, %v448, 0
      %v538 = vsel %vm476, %v449, 0
      %v541 = vsel %vm476, %v450, 0
      %v544 = vsel %vm476, %v451, 0
      %v547 = vsel %vm476, %v452, 0
      %v550 = vsel %vm476, %v453, 0
      %v553 = vsel %vm476, %v454, 0
      %v556 = vsel %vm476, %v455, 0
      %v559 = vsel %vm476, %v456, 0
      %v562 = vsel %vm476, %v457, 0
      %v565 = vsel %vm476, %v458, 0
      %v568 = vsel %vm476, %v459, 0
      %v571 = vsel %vm476, %v460, 0
      %vm573 = vcmask 1041408
      %v575 = vsel %vm573, %v473, 0
      %577 = vmatpush.bf16.msra.mxu0 0
      %578 = vmatpush.bf16.msra.mxu0 0
      %579 = vmatpush.bf16.msra.mxu0 0
      %580 = vmatpush.bf16.msra.mxu0 0
      %581 = vmatpush.bf16.msra.mxu0 0
      %582 = vmatpush.bf16.msra.mxu0 %v575
      %583 = vmatpush.bf16.msra.mxu0 %v472
      %584 = vmatpush.bf16.msra.mxu0 %v471
      %585 = vmatmul.bf16.gmra.mxu0 %v478
      %v586 = vpop.f32.mrf.mxu0
      %v587 = vadd.f32 %v299, %v586
      %v588 = vpop.f32.mrf.mxu0
      %v589 = vadd.f32 %v299, %v588
      %590 = vmatmul.bf16.gmra.mxu0 %v481
      %v591 = vpop.f32.mrf.mxu0
      %v592 = vadd.f32 %v299, %v591
      %v593 = vpop.f32.mrf.mxu0
      %v594 = vadd.f32 %v299, %v593
      %595 = vmatmul.bf16.gmra.mxu0 %v484
      %v596 = vpop.f32.mrf.mxu0
      %v597 = vadd.f32 %v299, %v596
      %v598 = vpop.f32.mrf.mxu0
      %v599 = vadd.f32 %v299, %v598
      %600 = vmatmul.bf16.gmra.mxu0 %v487
      %v601 = vpop.f32.mrf.mxu0
      %v602 = vadd.f32 %v299, %v601
      %v603 = vpop.f32.mrf.mxu0
      %v604 = vadd.f32 %v299, %v603
      %605 = vmatmul.bf16.gmra.mxu0 %v490
      %v606 = vpop.f32.mrf.mxu0
      %v607 = vadd.f32 %v299, %v606
      %v608 = vpop.f32.mrf.mxu0
      %v609 = vadd.f32 %v299, %v608
      %610 = vmatmul.bf16.gmra.mxu0 %v493
      %v611 = vpop.f32.mrf.mxu0
      %v612 = vadd.f32 %v299, %v611
      %v613 = vpop.f32.mrf.mxu0
      %v614 = vadd.f32 %v299, %v613
      %615 = vmatmul.bf16.gmra.mxu0 %v496
      %v616 = vpop.f32.mrf.mxu0
      %v617 = vadd.f32 %v299, %v616
      %v618 = vpop.f32.mrf.mxu0
      %v619 = vadd.f32 %v299, %v618
      %620 = vmatmul.bf16.gmra.mxu0 %v499
      %v621 = vpop.f32.mrf.mxu0
      %v622 = vadd.f32 %v299, %v621
      %v623 = vpop.f32.mrf.mxu0
      %v624 = vadd.f32 %v299, %v623
      %625 = vmatmul.bf16.gmra.mxu0 %v502
      %v626 = vpop.f32.mrf.mxu0
      %v627 = vadd.f32 %v299, %v626
      %v628 = vpop.f32.mrf.mxu0
      %v629 = vadd.f32 %v299, %v628
      %630 = vmatmul.bf16.gmra.mxu0 %v505
      %v631 = vpop.f32.mrf.mxu0
      %v632 = vadd.f32 %v299, %v631
      %v633 = vpop.f32.mrf.mxu0
      %v634 = vadd.f32 %v299, %v633
      %635 = vmatmul.bf16.gmra.mxu0 %v508
      %v636 = vpop.f32.mrf.mxu0
      %v637 = vadd.f32 %v299, %v636
      %v638 = vpop.f32.mrf.mxu0
      %v639 = vadd.f32 %v299, %v638
      %640 = vmatmul.bf16.gmra.mxu0 %v511
      %v641 = vpop.f32.mrf.mxu0
      %v642 = vadd.f32 %v299, %v641
      %v643 = vpop.f32.mrf.mxu0
      %v644 = vadd.f32 %v299, %v643
      %645 = vmatmul.bf16.gmra.mxu0 %v514
      %v646 = vpop.f32.mrf.mxu0
      %v647 = vadd.f32 %v299, %v646
      %v648 = vpop.f32.mrf.mxu0
      %v649 = vadd.f32 %v299, %v648
      %650 = vmatmul.bf16.gmra.mxu0 %v517
      %v651 = vpop.f32.mrf.mxu0
      %v652 = vadd.f32 %v299, %v651
      %v653 = vpop.f32.mrf.mxu0
      %v654 = vadd.f32 %v299, %v653
      %655 = vmatmul.bf16.gmra.mxu0 %v520
      %v656 = vpop.f32.mrf.mxu0
      %v657 = vadd.f32 %v299, %v656
      %v658 = vpop.f32.mrf.mxu0
      %v659 = vadd.f32 %v299, %v658
      %660 = vmatmul.bf16.gmra.mxu0 %v523
      %v661 = vpop.f32.mrf.mxu0
      %v662 = vadd.f32 %v299, %v661
      %v663 = vpop.f32.mrf.mxu0
      %v664 = vadd.f32 %v299, %v663
      %665 = vmatmul.bf16.gmra.mxu0 %v526
      %v666 = vpop.f32.mrf.mxu0
      %v667 = vadd.f32 %v299, %v666
      %v668 = vpop.f32.mrf.mxu0
      %v669 = vadd.f32 %v299, %v668
      %670 = vmatmul.bf16.gmra.mxu0 %v529
      %v671 = vpop.f32.mrf.mxu0
      %v672 = vadd.f32 %v299, %v671
      %v673 = vpop.f32.mrf.mxu0
      %v674 = vadd.f32 %v299, %v673
      %675 = vmatmul.bf16.gmra.mxu0 %v532
      %v676 = vpop.f32.mrf.mxu0
      %v677 = vadd.f32 %v299, %v676
      %v678 = vpop.f32.mrf.mxu0
      %v679 = vadd.f32 %v299, %v678
      %680 = vmatmul.bf16.gmra.mxu0 %v535
      %v681 = vpop.f32.mrf.mxu0
      %v682 = vadd.f32 %v299, %v681
      %v683 = vpop.f32.mrf.mxu0
      %v684 = vadd.f32 %v299, %v683
      %685 = vmatmul.bf16.gmra.mxu0 %v538
      %v686 = vpop.f32.mrf.mxu0
      %v687 = vadd.f32 %v299, %v686
      %v688 = vpop.f32.mrf.mxu0
      %v689 = vadd.f32 %v299, %v688
      %690 = vmatmul.bf16.gmra.mxu0 %v541
      %v691 = vpop.f32.mrf.mxu0
      %v692 = vadd.f32 %v299, %v691
      %v693 = vpop.f32.mrf.mxu0
      %v694 = vadd.f32 %v299, %v693
      %695 = vmatmul.bf16.gmra.mxu0 %v544
      %v696 = vpop.f32.mrf.mxu0
      %v697 = vadd.f32 %v299, %v696
      %v698 = vpop.f32.mrf.mxu0
      %v699 = vadd.f32 %v299, %v698
      %700 = vmatmul.bf16.gmra.mxu0 %v547
      %v701 = vpop.f32.mrf.mxu0
      %v702 = vadd.f32 %v299, %v701
      %v703 = vpop.f32.mrf.mxu0
      %v704 = vadd.f32 %v299, %v703
      %705 = vmatmul.bf16.gmra.mxu0 %v550
      %v706 = vpop.f32.mrf.mxu0
      %v707 = vadd.f32 %v299, %v706
      %v708 = vpop.f32.mrf.mxu0
      %v709 = vadd.f32 %v299, %v708
      %710 = vmatmul.bf16.gmra.mxu0 %v553
      %v711 = vpop.f32.mrf.mxu0
      %v712 = vadd.f32 %v299, %v711
      %v713 = vpop.f32.mrf.mxu0
      %v714 = vadd.f32 %v299, %v713
      %715 = vmatmul.bf16.gmra.mxu0 %v556
      %v716 = vpop.f32.mrf.mxu0
      %v717 = vadd.f32 %v299, %v716
      %v718 = vpop.f32.mrf.mxu0
      %v719 = vadd.f32 %v299, %v718
      %720 = vmatmul.bf16.gmra.mxu0 %v559
      %v721 = vpop.f32.mrf.mxu0
      %v722 = vadd.f32 %v299, %v721
      %v723 = vpop.f32.mrf.mxu0
      %v724 = vadd.f32 %v299, %v723
      %725 = vmatmul.bf16.gmra.mxu0 %v562
      %v726 = vpop.f32.mrf.mxu0
      %v727 = vadd.f32 %v299, %v726
      %v728 = vpop.f32.mrf.mxu0
      %v729 = vadd.f32 %v299, %v728
      %730 = vmatmul.bf16.gmra.mxu0 %v565
      %v731 = vpop.f32.mrf.mxu0
      %v732 = vadd.f32 %v299, %v731
      %v733 = vpop.f32.mrf.mxu0
      %v734 = vadd.f32 %v299, %v733
      %735 = vmatmul.bf16.gmra.mxu0 %v568
      %v736 = vpop.f32.mrf.mxu0
      %v737 = vadd.f32 %v299, %v736
      %v738 = vpop.f32.mrf.mxu0
      %v739 = vadd.f32 %v299, %v738
      %740 = vmatmul.bf16.gmra.mxu0 %v571
      %v741 = vpop.f32.mrf.mxu0
      %v742 = vadd.f32 %v299, %v741
      %v743 = vpop.f32.mrf.mxu0
      %v744 = vadd.f32 %v299, %v743
      %745 = vdwg.mxu0
      %v746 = vmax.f32 %v587, 0.0
      %v747 = vmax.f32 %v589, 0.0
      %v748 = vmax.f32 %v592, 0.0
      %v749 = vmax.f32 %v594, 0.0
      %v750 = vmax.f32 %v597, 0.0
      %v751 = vmax.f32 %v599, 0.0
      %v752 = vmax.f32 %v602, 0.0
      %v753 = vmax.f32 %v604, 0.0
      %v754 = vmax.f32 %v607, 0.0
      %v755 = vmax.f32 %v609, 0.0
      %v756 = vmax.f32 %v612, 0.0
      %v757 = vmax.f32 %v614, 0.0
      %v758 = vmax.f32 %v617, 0.0
      %v759 = vmax.f32 %v619, 0.0
      %v760 = vmax.f32 %v622, 0.0
      %v761 = vmax.f32 %v624, 0.0
      %v762 = vmax.f32 %v627, 0.0
      %v763 = vmax.f32 %v629, 0.0
      %v764 = vmax.f32 %v632, 0.0
      %v765 = vmax.f32 %v634, 0.0
      %v766 = vmax.f32 %v637, 0.0
      %v767 = vmax.f32 %v639, 0.0
      %v768 = vmax.f32 %v642, 0.0
      %v769 = vmax.f32 %v644, 0.0
      %v770 = vmax.f32 %v647, 0.0
      %v771 = vmax.f32 %v649, 0.0
      %v772 = vmax.f32 %v652, 0.0
      %v773 = vmax.f32 %v654, 0.0
      %v774 = vmax.f32 %v657, 0.0
      %v775 = vmax.f32 %v659, 0.0
      %v776 = vmax.f32 %v662, 0.0
      %v777 = vmax.f32 %v664, 0.0
      %v778 = vmax.f32 %v667, 0.0
      %v779 = vmax.f32 %v669, 0.0
      %v780 = vmax.f32 %v672, 0.0
      %v781 = vmax.f32 %v674, 0.0
      %v782 = vmax.f32 %v677, 0.0
      %v783 = vmax.f32 %v679, 0.0
      %v784 = vmax.f32 %v682, 0.0
      %v785 = vmax.f32 %v684, 0.0
      %v786 = vmax.f32 %v687, 0.0
      %v787 = vmax.f32 %v689, 0.0
      %v788 = vmax.f32 %v692, 0.0
      %v789 = vmax.f32 %v694, 0.0
      %v790 = vmax.f32 %v697, 0.0
      %v791 = vmax.f32 %v699, 0.0
      %v792 = vmax.f32 %v702, 0.0
      %v793 = vmax.f32 %v704, 0.0
      %v794 = vmax.f32 %v707, 0.0
      %v795 = vmax.f32 %v709, 0.0
      %v796 = vmax.f32 %v712, 0.0
      %v797 = vmax.f32 %v714, 0.0
      %v798 = vmax.f32 %v717, 0.0
      %v799 = vmax.f32 %v719, 0.0
      %v800 = vmax.f32 %v722, 0.0
      %v801 = vmax.f32 %v724, 0.0
      %v802 = vmax.f32 %v727, 0.0
      %v803 = vmax.f32 %v729, 0.0
      %v804 = vmax.f32 %v732, 0.0
      %v805 = vmax.f32 %v734, 0.0
      %v806 = vmax.f32 %v737, 0.0
      %v807 = vmax.f32 %v739, 0.0
      %v808 = vmax.f32 %v742, 0.0
      %v809 = vmax.f32 %v744, 0.0
      %v874 = vrot.slane %v746, 2
      %v875 = vrot.slane %v746, 4
      %v876 = vrot.slane %v746, 6
      %v877 = vrot.slane %v747, 2
      %v878 = vrot.slane %v747, 4
      %v879 = vrot.slane %v747, 6
      %v880 = vrot.slane %v748, 2
      %v881 = vrot.slane %v748, 4
      %v882 = vrot.slane %v748, 6
      %v883 = vrot.slane %v749, 2
      %v884 = vrot.slane %v749, 4
      %v885 = vrot.slane %v749, 6
      %v886 = vrot.slane %v750, 2
      %v887 = vrot.slane %v750, 4
      %v888 = vrot.slane %v750, 6
      %v889 = vrot.slane %v751, 2
      %v890 = vrot.slane %v751, 4
      %v891 = vrot.slane %v751, 6
      %v892 = vrot.slane %v752, 2
      %v893 = vrot.slane %v752, 4
      %v894 = vrot.slane %v752, 6
      %v895 = vrot.slane %v753, 2
      %v896 = vrot.slane %v753, 4
      %v897 = vrot.slane %v753, 6
      %v898 = vrot.slane %v754, 2
      %v899 = vrot.slane %v754, 4
      %v900 = vrot.slane %v754, 6
      %v901 = vrot.slane %v755, 2
      %v902 = vrot.slane %v755, 4
      %v903 = vrot.slane %v755, 6
      %v904 = vrot.slane %v756, 2
      %v905 = vrot.slane %v756, 4
      %v906 = vrot.slane %v756, 6
      %v907 = vrot.slane %v757, 2
      %v908 = vrot.slane %v757, 4
      %v909 = vrot.slane %v757, 6
      %v910 = vrot.slane %v758, 2
      %v911 = vrot.slane %v758, 4
      %v912 = vrot.slane %v758, 6
      %v913 = vrot.slane %v759, 2
      %v914 = vrot.slane %v759, 4
      %v915 = vrot.slane %v759, 6
      %v916 = vrot.slane %v760, 2
      %v917 = vrot.slane %v760, 4
      %v918 = vrot.slane %v760, 6
      %v919 = vrot.slane %v761, 2
      %v920 = vrot.slane %v761, 4
      %v921 = vrot.slane %v761, 6
      %v922 = vrot.slane %v762, 2
      %v923 = vrot.slane %v762, 4
      %v924 = vrot.slane %v762, 6
      %v925 = vrot.slane %v763, 2
      %v926 = vrot.slane %v763, 4
      %v927 = vrot.slane %v763, 6
      %v928 = vrot.slane %v764, 2
      %v929 = vrot.slane %v764, 4
      %v930 = vrot.slane %v764, 6
      %v931 = vrot.slane %v765, 2
      %v932 = vrot.slane %v765, 4
      %v933 = vrot.slane %v765, 6
      %v934 = vrot.slane %v766, 2
      %v935 = vrot.slane %v766, 4
      %v936 = vrot.slane %v766, 6
      %v937 = vrot.slane %v767, 2
      %v938 = vrot.slane %v767, 4
      %v939 = vrot.slane %v767, 6
      %v940 = vrot.slane %v768, 2
      %v941 = vrot.slane %v768, 4
      %v942 = vrot.slane %v768, 6
      %v943 = vrot.slane %v769, 2
      %v944 = vrot.slane %v769, 4
      %v945 = vrot.slane %v769, 6
      %v946 = vrot.slane %v770, 2
      %v947 = vrot.slane %v770, 4
      %v948 = vrot.slane %v770, 6
      %v949 = vrot.slane %v771, 2
      %v950 = vrot.slane %v771, 4
      %v951 = vrot.slane %v771, 6
      %v952 = vrot.slane %v772, 2
      %v953 = vrot.slane %v772, 4
      %v954 = vrot.slane %v772, 6
      %v955 = vrot.slane %v773, 2
      %v956 = vrot.slane %v773, 4
      %v957 = vrot.slane %v773, 6
      %v958 = vrot.slane %v774, 2
      %v959 = vrot.slane %v774, 4
      %v960 = vrot.slane %v774, 6
      %v961 = vrot.slane %v775, 2
      %v962 = vrot.slane %v775, 4
      %v963 = vrot.slane %v775, 6
      %v964 = vrot.slane %v776, 2
      %v965 = vrot.slane %v776, 4
      %v966 = vrot.slane %v776, 6
      %v967 = vrot.slane %v777, 2
      %v968 = vrot.slane %v777, 4
      %v969 = vrot.slane %v777, 6
      %v970 = vrot.slane %v778, 2
      %v971 = vrot.slane %v778, 4
      %v972 = vrot.slane %v778, 6
      %v973 = vrot.slane %v779, 2
      %v974 = vrot.slane %v779, 4
      %v975 = vrot.slane %v779, 6
      %v976 = vrot.slane %v780, 2
      %v977 = vrot.slane %v780, 4
      %v978 = vrot.slane %v780, 6
      %v979 = vrot.slane %v781, 2
      %v980 = vrot.slane %v781, 4
      %v981 = vrot.slane %v781, 6
      %v982 = vrot.slane %v782, 2
      %v983 = vrot.slane %v782, 4
      %v984 = vrot.slane %v782, 6
      %v985 = vrot.slane %v783, 2
      %v986 = vrot.slane %v783, 4
      %v987 = vrot.slane %v783, 6
      %v988 = vrot.slane %v784, 2
      %v989 = vrot.slane %v784, 4
      %v990 = vrot.slane %v784, 6
      %v991 = vrot.slane %v785, 2
      %v992 = vrot.slane %v785, 4
      %v993 = vrot.slane %v785, 6
      %v994 = vrot.slane %v786, 2
      %v995 = vrot.slane %v786, 4
      %v996 = vrot.slane %v786, 6
      %v997 = vrot.slane %v787, 2
      %v998 = vrot.slane %v787, 4
      %v999 = vrot.slane %v787, 6
      %v1000 = vrot.slane %v788, 2
      %v1001 = vrot.slane %v788, 4
      %v1002 = vrot.slane %v788, 6
      %v1003 = vrot.slane %v789, 2
      %v1004 = vrot.slane %v789, 4
      %v1005 = vrot.slane %v789, 6
      %v1006 = vrot.slane %v790, 2
      %v1007 = vrot.slane %v790, 4
      %v1008 = vrot.slane %v790, 6
      %v1009 = vrot.slane %v791, 2
      %v1010 = vrot.slane %v791, 4
      %v1011 = vrot.slane %v791, 6
      %v1012 = vrot.slane %v792, 2
      %v1013 = vrot.slane %v792, 4
      %v1014 = vrot.slane %v792, 6
      %v1015 = vrot.slane %v793, 2
      %v1016 = vrot.slane %v793, 4
      %v1017 = vrot.slane %v793, 6
      %v1018 = vrot.slane %v794, 2
      %v1019 = vrot.slane %v794, 4
      %v1020 = vrot.slane %v794, 6
      %v1021 = vrot.slane %v795, 2
      %v1022 = vrot.slane %v795, 4
      %v1023 = vrot.slane %v795, 6
      %v1024 = vrot.slane %v796, 2
      %v1025 = vrot.slane %v796, 4
      %v1026 = vrot.slane %v796, 6
      %v1027 = vrot.slane %v797, 2
      %v1028 = vrot.slane %v797, 4
      %v1029 = vrot.slane %v797, 6
      %v1030 = vrot.slane %v798, 2
      %v1031 = vrot.slane %v798, 4
      %v1032 = vrot.slane %v798, 6
      %v1033 = vrot.slane %v799, 2
      %v1034 = vrot.slane %v799, 4
      %v1035 = vrot.slane %v799, 6
      %v1036 = vrot.slane %v800, 2
      %v1037 = vrot.slane %v800, 4
      %v1038 = vrot.slane %v800, 6
      %v1039 = vrot.slane %v801, 2
      %v1040 = vrot.slane %v801, 4
      %v1041 = vrot.slane %v801, 6
      %v1042 = vrot.slane %v802, 2
      %v1043 = vrot.slane %v802, 4
      %v1044 = vrot.slane %v802, 6
      %v1045 = vrot.slane %v803, 2
      %v1046 = vrot.slane %v803, 4
      %v1047 = vrot.slane %v803, 6
      %v1048 = vrot.slane %v804, 2
      %v1049 = vrot.slane %v804, 4
      %v1050 = vrot.slane %v804, 6
      %v1051 = vrot.slane %v805, 2
      %v1052 = vrot.slane %v805, 4
      %v1053 = vrot.slane %v805, 6
      %v1054 = vrot.slane %v806, 2
      %v1055 = vrot.slane %v806, 4
      %v1056 = vrot.slane %v806, 6
      %v1057 = vrot.slane %v807, 2
      %v1058 = vrot.slane %v807, 4
      %v1059 = vrot.slane %v807, 6
      %v1060 = vrot.slane %v808, 2
      %v1061 = vrot.slane %v808, 4
      %v1062 = vrot.slane %v808, 6
      %v1063 = vrot.slane %v809, 2
      %v1064 = vrot.slane %v809, 4
      %v1065 = vrot.slane %v809, 6
      %vm1258 = vcmask 254976
      %v1259 = vsel %vm1258, %v746, -inf
      %v1260 = vrot.slane %v1259, 4
      %v1261 = vmax.f32 %v1259, %v1260
      %v1262 = vrot.slane %v1261, 2
      %v1263 = vmax.f32 %v1261, %v1262
      %v1264 = vrot.slane %v1263, 1
      %v1265 = vmax.f32 %v1263, %v1264
      %v1266 = vsel %vm1258, %v874, -inf
      %v1267 = vrot.slane %v1266, 4
      %v1268 = vmax.f32 %v1266, %v1267
      %v1269 = vrot.slane %v1268, 2
      %v1270 = vmax.f32 %v1268, %v1269
      %v1271 = vrot.slane %v1270, 1
      %v1272 = vmax.f32 %v1270, %v1271
      %v1273 = vsel %vm1258, %v875, -inf
      %v1274 = vrot.slane %v1273, 4
      %v1275 = vmax.f32 %v1273, %v1274
      %v1276 = vrot.slane %v1275, 2
      %v1277 = vmax.f32 %v1275, %v1276
      %v1278 = vrot.slane %v1277, 1
      %v1279 = vmax.f32 %v1277, %v1278
      %v1280 = vsel %vm1258, %v876, -inf
      %v1281 = vrot.slane %v1280, 4
      %v1282 = vmax.f32 %v1280, %v1281
      %v1283 = vrot.slane %v1282, 2
      %v1284 = vmax.f32 %v1282, %v1283
      %v1285 = vrot.slane %v1284, 1
      %v1286 = vmax.f32 %v1284, %v1285
      %v1287 = vsel %vm1258, %v747, -inf
      %v1288 = vrot.slane %v1287, 4
      %v1289 = vmax.f32 %v1287, %v1288
      %v1290 = vrot.slane %v1289, 2
      %v1291 = vmax.f32 %v1289, %v1290
      %v1292 = vrot.slane %v1291, 1
      %v1293 = vmax.f32 %v1291, %v1292
      %v1294 = vsel %vm1258, %v877, -inf
      %v1295 = vrot.slane %v1294, 4
      %v1296 = vmax.f32 %v1294, %v1295
      %v1297 = vrot.slane %v1296, 2
      %v1298 = vmax.f32 %v1296, %v1297
      %v1299 = vrot.slane %v1298, 1
      %v1300 = vmax.f32 %v1298, %v1299
      %v1301 = vsel %vm1258, %v878, -inf
      %v1302 = vrot.slane %v1301, 4
      %v1303 = vmax.f32 %v1301, %v1302
      %v1304 = vrot.slane %v1303, 2
      %v1305 = vmax.f32 %v1303, %v1304
      %v1306 = vrot.slane %v1305, 1
      %v1307 = vmax.f32 %v1305, %v1306
      %v1308 = vsel %vm1258, %v879, -inf
      %v1309 = vrot.slane %v1308, 4
      %v1310 = vmax.f32 %v1308, %v1309
      %v1311 = vrot.slane %v1310, 2
      %v1312 = vmax.f32 %v1310, %v1311
      %v1313 = vrot.slane %v1312, 1
      %v1314 = vmax.f32 %v1312, %v1313
      %v1315 = vsel %vm1258, %v748, -inf
      %v1316 = vrot.slane %v1315, 4
      %v1317 = vmax.f32 %v1315, %v1316
      %v1318 = vrot.slane %v1317, 2
      %v1319 = vmax.f32 %v1317, %v1318
      %v1320 = vrot.slane %v1319, 1
      %v1321 = vmax.f32 %v1319, %v1320
      %v1322 = vsel %vm1258, %v880, -inf
      %v1323 = vrot.slane %v1322, 4
      %v1324 = vmax.f32 %v1322, %v1323
      %v1325 = vrot.slane %v1324, 2
      %v1326 = vmax.f32 %v1324, %v1325
      %v1327 = vrot.slane %v1326, 1
      %v1328 = vmax.f32 %v1326, %v1327
      %v1329 = vsel %vm1258, %v881, -inf
      %v1330 = vrot.slane %v1329, 4
      %v1331 = vmax.f32 %v1329, %v1330
      %v1332 = vrot.slane %v1331, 2
      %v1333 = vmax.f32 %v1331, %v1332
      %v1334 = vrot.slane %v1333, 1
      %v1335 = vmax.f32 %v1333, %v1334
      %v1336 = vsel %vm1258, %v882, -inf
      %v1337 = vrot.slane %v1336, 4
      %v1338 = vmax.f32 %v1336, %v1337
      %v1339 = vrot.slane %v1338, 2
      %v1340 = vmax.f32 %v1338, %v1339
      %v1341 = vrot.slane %v1340, 1
      %v1342 = vmax.f32 %v1340, %v1341
      %v1343 = vsel %vm1258, %v749, -inf
      %v1344 = vrot.slane %v1343, 4
      %v1345 = vmax.f32 %v1343, %v1344
      %v1346 = vrot.slane %v1345, 2
      %v1347 = vmax.f32 %v1345, %v1346
      %v1348 = vrot.slane %v1347, 1
      %v1349 = vmax.f32 %v1347, %v1348
      %v1350 = vsel %vm1258, %v883, -inf
      %v1351 = vrot.slane %v1350, 4
      %v1352 = vmax.f32 %v1350, %v1351
      %v1353 = vrot.slane %v1352, 2
      %v1354 = vmax.f32 %v1352, %v1353
      %v1355 = vrot.slane %v1354, 1
      %v1356 = vmax.f32 %v1354, %v1355
      %v1357 = vsel %vm1258, %v884, -inf
      %v1358 = vrot.slane %v1357, 4
      %v1359 = vmax.f32 %v1357, %v1358
      %v1360 = vrot.slane %v1359, 2
      %v1361 = vmax.f32 %v1359, %v1360
      %v1362 = vrot.slane %v1361, 1
      %v1363 = vmax.f32 %v1361, %v1362
      %v1364 = vsel %vm1258, %v885, -inf
      %v1365 = vrot.slane %v1364, 4
      %v1366 = vmax.f32 %v1364, %v1365
      %v1367 = vrot.slane %v1366, 2
      %v1368 = vmax.f32 %v1366, %v1367
      %v1369 = vrot.slane %v1368, 1
      %v1370 = vmax.f32 %v1368, %v1369
      %v1371 = vsel %vm1258, %v750, -inf
      %v1372 = vrot.slane %v1371, 4
      %v1373 = vmax.f32 %v1371, %v1372
      %v1374 = vrot.slane %v1373, 2
      %v1375 = vmax.f32 %v1373, %v1374
      %v1376 = vrot.slane %v1375, 1
      %v1377 = vmax.f32 %v1375, %v1376
      %v1378 = vsel %vm1258, %v886, -inf
      %v1379 = vrot.slane %v1378, 4
      %v1380 = vmax.f32 %v1378, %v1379
      %v1381 = vrot.slane %v1380, 2
      %v1382 = vmax.f32 %v1380, %v1381
      %v1383 = vrot.slane %v1382, 1
      %v1384 = vmax.f32 %v1382, %v1383
      %v1385 = vsel %vm1258, %v887, -inf
      %v1386 = vrot.slane %v1385, 4
      %v1387 = vmax.f32 %v1385, %v1386
      %v1388 = vrot.slane %v1387, 2
      %v1389 = vmax.f32 %v1387, %v1388
      %v1390 = vrot.slane %v1389, 1
      %v1391 = vmax.f32 %v1389, %v1390
      %v1392 = vsel %vm1258, %v888, -inf
      %v1393 = vrot.slane %v1392, 4
      %v1394 = vmax.f32 %v1392, %v1393
      %v1395 = vrot.slane %v1394, 2
      %v1396 = vmax.f32 %v1394, %v1395
      %v1397 = vrot.slane %v1396, 1
      %v1398 = vmax.f32 %v1396, %v1397
      %v1399 = vsel %vm1258, %v751, -inf
      %v1400 = vrot.slane %v1399, 4
      %v1401 = vmax.f32 %v1399, %v1400
      %v1402 = vrot.slane %v1401, 2
      %v1403 = vmax.f32 %v1401, %v1402
      %v1404 = vrot.slane %v1403, 1
      %v1405 = vmax.f32 %v1403, %v1404
      %v1406 = vsel %vm1258, %v889, -inf
      %v1407 = vrot.slane %v1406, 4
      %v1408 = vmax.f32 %v1406, %v1407
      %v1409 = vrot.slane %v1408, 2
      %v1410 = vmax.f32 %v1408, %v1409
      %v1411 = vrot.slane %v1410, 1
      %v1412 = vmax.f32 %v1410, %v1411
      %v1413 = vsel %vm1258, %v890, -inf
      %v1414 = vrot.slane %v1413, 4
      %v1415 = vmax.f32 %v1413, %v1414
      %v1416 = vrot.slane %v1415, 2
      %v1417 = vmax.f32 %v1415, %v1416
      %v1418 = vrot.slane %v1417, 1
      %v1419 = vmax.f32 %v1417, %v1418
      %v1420 = vsel %vm1258, %v891, -inf
      %v1421 = vrot.slane %v1420, 4
      %v1422 = vmax.f32 %v1420, %v1421
      %v1423 = vrot.slane %v1422, 2
      %v1424 = vmax.f32 %v1422, %v1423
      %v1425 = vrot.slane %v1424, 1
      %v1426 = vmax.f32 %v1424, %v1425
      %v1427 = vsel %vm1258, %v752, -inf
      %v1428 = vrot.slane %v1427, 4
      %v1429 = vmax.f32 %v1427, %v1428
      %v1430 = vrot.slane %v1429, 2
      %v1431 = vmax.f32 %v1429, %v1430
      %v1432 = vrot.slane %v1431, 1
      %v1433 = vmax.f32 %v1431, %v1432
      %v1434 = vsel %vm1258, %v892, -inf
      %v1435 = vrot.slane %v1434, 4
      %v1436 = vmax.f32 %v1434, %v1435
      %v1437 = vrot.slane %v1436, 2
      %v1438 = vmax.f32 %v1436, %v1437
      %v1439 = vrot.slane %v1438, 1
      %v1440 = vmax.f32 %v1438, %v1439
      %v1441 = vsel %vm1258, %v893, -inf
      %v1442 = vrot.slane %v1441, 4
      %v1443 = vmax.f32 %v1441, %v1442
      %v1444 = vrot.slane %v1443, 2
      %v1445 = vmax.f32 %v1443, %v1444
      %v1446 = vrot.slane %v1445, 1
      %v1447 = vmax.f32 %v1445, %v1446
      %v1448 = vsel %vm1258, %v894, -inf
      %v1449 = vrot.slane %v1448, 4
      %v1450 = vmax.f32 %v1448, %v1449
      %v1451 = vrot.slane %v1450, 2
      %v1452 = vmax.f32 %v1450, %v1451
      %v1453 = vrot.slane %v1452, 1
      %v1454 = vmax.f32 %v1452, %v1453
      %v1455 = vsel %vm1258, %v753, -inf
      %v1456 = vrot.slane %v1455, 4
      %v1457 = vmax.f32 %v1455, %v1456
      %v1458 = vrot.slane %v1457, 2
      %v1459 = vmax.f32 %v1457, %v1458
      %v1460 = vrot.slane %v1459, 1
      %v1461 = vmax.f32 %v1459, %v1460
      %v1462 = vsel %vm1258, %v895, -inf
      %v1463 = vrot.slane %v1462, 4
      %v1464 = vmax.f32 %v1462, %v1463
      %v1465 = vrot.slane %v1464, 2
      %v1466 = vmax.f32 %v1464, %v1465
      %v1467 = vrot.slane %v1466, 1
      %v1468 = vmax.f32 %v1466, %v1467
      %v1469 = vsel %vm1258, %v896, -inf
      %v1470 = vrot.slane %v1469, 4
      %v1471 = vmax.f32 %v1469, %v1470
      %v1472 = vrot.slane %v1471, 2
      %v1473 = vmax.f32 %v1471, %v1472
      %v1474 = vrot.slane %v1473, 1
      %v1475 = vmax.f32 %v1473, %v1474
      %v1476 = vsel %vm1258, %v897, -inf
      %v1477 = vrot.slane %v1476, 4
      %v1478 = vmax.f32 %v1476, %v1477
      %v1479 = vrot.slane %v1478, 2
      %v1480 = vmax.f32 %v1478, %v1479
      %v1481 = vrot.slane %v1480, 1
      %v1482 = vmax.f32 %v1480, %v1481
      %v1483 = vsel %vm1258, %v754, -inf
      %v1484 = vrot.slane %v1483, 4
      %v1485 = vmax.f32 %v1483, %v1484
      %v1486 = vrot.slane %v1485, 2
      %v1487 = vmax.f32 %v1485, %v1486
      %v1488 = vrot.slane %v1487, 1
      %v1489 = vmax.f32 %v1487, %v1488
      %v1490 = vsel %vm1258, %v898, -inf
      %v1491 = vrot.slane %v1490, 4
      %v1492 = vmax.f32 %v1490, %v1491
      %v1493 = vrot.slane %v1492, 2
      %v1494 = vmax.f32 %v1492, %v1493
      %v1495 = vrot.slane %v1494, 1
      %v1496 = vmax.f32 %v1494, %v1495
      %v1497 = vsel %vm1258, %v899, -inf
      %v1498 = vrot.slane %v1497, 4
      %v1499 = vmax.f32 %v1497, %v1498
      %v1500 = vrot.slane %v1499, 2
      %v1501 = vmax.f32 %v1499, %v1500
      %v1502 = vrot.slane %v1501, 1
      %v1503 = vmax.f32 %v1501, %v1502
      %v1504 = vsel %vm1258, %v900, -inf
      %v1505 = vrot.slane %v1504, 4
      %v1506 = vmax.f32 %v1504, %v1505
      %v1507 = vrot.slane %v1506, 2
      %v1508 = vmax.f32 %v1506, %v1507
      %v1509 = vrot.slane %v1508, 1
      %v1510 = vmax.f32 %v1508, %v1509
      %v1511 = vsel %vm1258, %v755, -inf
      %v1512 = vrot.slane %v1511, 4
      %v1513 = vmax.f32 %v1511, %v1512
      %v1514 = vrot.slane %v1513, 2
      %v1515 = vmax.f32 %v1513, %v1514
      %v1516 = vrot.slane %v1515, 1
      %v1517 = vmax.f32 %v1515, %v1516
      %v1518 = vsel %vm1258, %v901, -inf
      %v1519 = vrot.slane %v1518, 4
      %v1520 = vmax.f32 %v1518, %v1519
      %v1521 = vrot.slane %v1520, 2
      %v1522 = vmax.f32 %v1520, %v1521
      %v1523 = vrot.slane %v1522, 1
      %v1524 = vmax.f32 %v1522, %v1523
      %v1525 = vsel %vm1258, %v902, -inf
      %v1526 = vrot.slane %v1525, 4
      %v1527 = vmax.f32 %v1525, %v1526
      %v1528 = vrot.slane %v1527, 2
      %v1529 = vmax.f32 %v1527, %v1528
      %v1530 = vrot.slane %v1529, 1
      %v1531 = vmax.f32 %v1529, %v1530
      %v1532 = vsel %vm1258, %v903, -inf
      %v1533 = vrot.slane %v1532, 4
      %v1534 = vmax.f32 %v1532, %v1533
      %v1535 = vrot.slane %v1534, 2
      %v1536 = vmax.f32 %v1534, %v1535
      %v1537 = vrot.slane %v1536, 1
      %v1538 = vmax.f32 %v1536, %v1537
      %v1539 = vsel %vm1258, %v756, -inf
      %v1540 = vrot.slane %v1539, 4
      %v1541 = vmax.f32 %v1539, %v1540
      %v1542 = vrot.slane %v1541, 2
      %v1543 = vmax.f32 %v1541, %v1542
      %v1544 = vrot.slane %v1543, 1
      %v1545 = vmax.f32 %v1543, %v1544
      %v1546 = vsel %vm1258, %v904, -inf
      %v1547 = vrot.slane %v1546, 4
      %v1548 = vmax.f32 %v1546, %v1547
      %v1549 = vrot.slane %v1548, 2
      %v1550 = vmax.f32 %v1548, %v1549
      %v1551 = vrot.slane %v1550, 1
      %v1552 = vmax.f32 %v1550, %v1551
      %v1553 = vsel %vm1258, %v905, -inf
      %v1554 = vrot.slane %v1553, 4
      %v1555 = vmax.f32 %v1553, %v1554
      %v1556 = vrot.slane %v1555, 2
      %v1557 = vmax.f32 %v1555, %v1556
      %v1558 = vrot.slane %v1557, 1
      %v1559 = vmax.f32 %v1557, %v1558
      %v1560 = vsel %vm1258, %v906, -inf
      %v1561 = vrot.slane %v1560, 4
      %v1562 = vmax.f32 %v1560, %v1561
      %v1563 = vrot.slane %v1562, 2
      %v1564 = vmax.f32 %v1562, %v1563
      %v1565 = vrot.slane %v1564, 1
      %v1566 = vmax.f32 %v1564, %v1565
      %v1567 = vsel %vm1258, %v757, -inf
      %v1568 = vrot.slane %v1567, 4
      %v1569 = vmax.f32 %v1567, %v1568
      %v1570 = vrot.slane %v1569, 2
      %v1571 = vmax.f32 %v1569, %v1570
      %v1572 = vrot.slane %v1571, 1
      %v1573 = vmax.f32 %v1571, %v1572
      %v1574 = vsel %vm1258, %v907, -inf
      %v1575 = vrot.slane %v1574, 4
      %v1576 = vmax.f32 %v1574, %v1575
      %v1577 = vrot.slane %v1576, 2
      %v1578 = vmax.f32 %v1576, %v1577
      %v1579 = vrot.slane %v1578, 1
      %v1580 = vmax.f32 %v1578, %v1579
      %v1581 = vsel %vm1258, %v908, -inf
      %v1582 = vrot.slane %v1581, 4
      %v1583 = vmax.f32 %v1581, %v1582
      %v1584 = vrot.slane %v1583, 2
      %v1585 = vmax.f32 %v1583, %v1584
      %v1586 = vrot.slane %v1585, 1
      %v1587 = vmax.f32 %v1585, %v1586
      %v1588 = vsel %vm1258, %v909, -inf
      %v1589 = vrot.slane %v1588, 4
      %v1590 = vmax.f32 %v1588, %v1589
      %v1591 = vrot.slane %v1590, 2
      %v1592 = vmax.f32 %v1590, %v1591
      %v1593 = vrot.slane %v1592, 1
      %v1594 = vmax.f32 %v1592, %v1593
      %v1595 = vsel %vm1258, %v758, -inf
      %v1596 = vrot.slane %v1595, 4
      %v1597 = vmax.f32 %v1595, %v1596
      %v1598 = vrot.slane %v1597, 2
      %v1599 = vmax.f32 %v1597, %v1598
      %v1600 = vrot.slane %v1599, 1
      %v1601 = vmax.f32 %v1599, %v1600
      %v1602 = vsel %vm1258, %v910, -inf
      %v1603 = vrot.slane %v1602, 4
      %v1604 = vmax.f32 %v1602, %v1603
      %v1605 = vrot.slane %v1604, 2
      %v1606 = vmax.f32 %v1604, %v1605
      %v1607 = vrot.slane %v1606, 1
      %v1608 = vmax.f32 %v1606, %v1607
      %v1609 = vsel %vm1258, %v911, -inf
      %v1610 = vrot.slane %v1609, 4
      %v1611 = vmax.f32 %v1609, %v1610
      %v1612 = vrot.slane %v1611, 2
      %v1613 = vmax.f32 %v1611, %v1612
      %v1614 = vrot.slane %v1613, 1
      %v1615 = vmax.f32 %v1613, %v1614
      %v1616 = vsel %vm1258, %v912, -inf
      %v1617 = vrot.slane %v1616, 4
      %v1618 = vmax.f32 %v1616, %v1617
      %v1619 = vrot.slane %v1618, 2
      %v1620 = vmax.f32 %v1618, %v1619
      %v1621 = vrot.slane %v1620, 1
      %v1622 = vmax.f32 %v1620, %v1621
      %v1623 = vsel %vm1258, %v759, -inf
      %v1624 = vrot.slane %v1623, 4
      %v1625 = vmax.f32 %v1623, %v1624
      %v1626 = vrot.slane %v1625, 2
      %v1627 = vmax.f32 %v1625, %v1626
      %v1628 = vrot.slane %v1627, 1
      %v1629 = vmax.f32 %v1627, %v1628
      %v1630 = vsel %vm1258, %v913, -inf
      %v1631 = vrot.slane %v1630, 4
      %v1632 = vmax.f32 %v1630, %v1631
      %v1633 = vrot.slane %v1632, 2
      %v1634 = vmax.f32 %v1632, %v1633
      %v1635 = vrot.slane %v1634, 1
      %v1636 = vmax.f32 %v1634, %v1635
      %v1637 = vsel %vm1258, %v914, -inf
      %v1638 = vrot.slane %v1637, 4
      %v1639 = vmax.f32 %v1637, %v1638
      %v1640 = vrot.slane %v1639, 2
      %v1641 = vmax.f32 %v1639, %v1640
      %v1642 = vrot.slane %v1641, 1
      %v1643 = vmax.f32 %v1641, %v1642
      %v1644 = vsel %vm1258, %v915, -inf
      %v1645 = vrot.slane %v1644, 4
      %v1646 = vmax.f32 %v1644, %v1645
      %v1647 = vrot.slane %v1646, 2
      %v1648 = vmax.f32 %v1646, %v1647
      %v1649 = vrot.slane %v1648, 1
      %v1650 = vmax.f32 %v1648, %v1649
      %v1651 = vsel %vm1258, %v760, -inf
      %v1652 = vrot.slane %v1651, 4
      %v1653 = vmax.f32 %v1651, %v1652
      %v1654 = vrot.slane %v1653, 2
      %v1655 = vmax.f32 %v1653, %v1654
      %v1656 = vrot.slane %v1655, 1
      %v1657 = vmax.f32 %v1655, %v1656
      %v1658 = vsel %vm1258, %v916, -inf
      %v1659 = vrot.slane %v1658, 4
      %v1660 = vmax.f32 %v1658, %v1659
      %v1661 = vrot.slane %v1660, 2
      %v1662 = vmax.f32 %v1660, %v1661
      %v1663 = vrot.slane %v1662, 1
      %v1664 = vmax.f32 %v1662, %v1663
      %v1665 = vsel %vm1258, %v917, -inf
      %v1666 = vrot.slane %v1665, 4
      %v1667 = vmax.f32 %v1665, %v1666
      %v1668 = vrot.slane %v1667, 2
      %v1669 = vmax.f32 %v1667, %v1668
      %v1670 = vrot.slane %v1669, 1
      %v1671 = vmax.f32 %v1669, %v1670
      %v1672 = vsel %vm1258, %v918, -inf
      %v1673 = vrot.slane %v1672, 4
      %v1674 = vmax.f32 %v1672, %v1673
      %v1675 = vrot.slane %v1674, 2
      %v1676 = vmax.f32 %v1674, %v1675
      %v1677 = vrot.slane %v1676, 1
      %v1678 = vmax.f32 %v1676, %v1677
      %v1679 = vsel %vm1258, %v761, -inf
      %v1680 = vrot.slane %v1679, 4
      %v1681 = vmax.f32 %v1679, %v1680
      %v1682 = vrot.slane %v1681, 2
      %v1683 = vmax.f32 %v1681, %v1682
      %v1684 = vrot.slane %v1683, 1
      %v1685 = vmax.f32 %v1683, %v1684
      %v1686 = vsel %vm1258, %v919, -inf
      %v1687 = vrot.slane %v1686, 4
      %v1688 = vmax.f32 %v1686, %v1687
      %v1689 = vrot.slane %v1688, 2
      %v1690 = vmax.f32 %v1688, %v1689
      %v1691 = vrot.slane %v1690, 1
      %v1692 = vmax.f32 %v1690, %v1691
      %v1693 = vsel %vm1258, %v920, -inf
      %v1694 = vrot.slane %v1693, 4
      %v1695 = vmax.f32 %v1693, %v1694
      %v1696 = vrot.slane %v1695, 2
      %v1697 = vmax.f32 %v1695, %v1696
      %v1698 = vrot.slane %v1697, 1
      %v1699 = vmax.f32 %v1697, %v1698
      %v1700 = vsel %vm1258, %v921, -inf
      %v1701 = vrot.slane %v1700, 4
      %v1702 = vmax.f32 %v1700, %v1701
      %v1703 = vrot.slane %v1702, 2
      %v1704 = vmax.f32 %v1702, %v1703
      %v1705 = vrot.slane %v1704, 1
      %v1706 = vmax.f32 %v1704, %v1705
      %v1707 = vsel %vm1258, %v762, -inf
      %v1708 = vrot.slane %v1707, 4
      %v1709 = vmax.f32 %v1707, %v1708
      %v1710 = vrot.slane %v1709, 2
      %v1711 = vmax.f32 %v1709, %v1710
      %v1712 = vrot.slane %v1711, 1
      %v1713 = vmax.f32 %v1711, %v1712
      %v1714 = vsel %vm1258, %v922, -inf
      %v1715 = vrot.slane %v1714, 4
      %v1716 = vmax.f32 %v1714, %v1715
      %v1717 = vrot.slane %v1716, 2
      %v1718 = vmax.f32 %v1716, %v1717
      %v1719 = vrot.slane %v1718, 1
      %v1720 = vmax.f32 %v1718, %v1719
      %v1721 = vsel %vm1258, %v923, -inf
      %v1722 = vrot.slane %v1721, 4
      %v1723 = vmax.f32 %v1721, %v1722
      %v1724 = vrot.slane %v1723, 2
      %v1725 = vmax.f32 %v1723, %v1724
      %v1726 = vrot.slane %v1725, 1
      %v1727 = vmax.f32 %v1725, %v1726
      %v1728 = vsel %vm1258, %v924, -inf
      %v1729 = vrot.slane %v1728, 4
      %v1730 = vmax.f32 %v1728, %v1729
      %v1731 = vrot.slane %v1730, 2
      %v1732 = vmax.f32 %v1730, %v1731
      %v1733 = vrot.slane %v1732, 1
      %v1734 = vmax.f32 %v1732, %v1733
      %v1735 = vsel %vm1258, %v763, -inf
      %v1736 = vrot.slane %v1735, 4
      %v1737 = vmax.f32 %v1735, %v1736
      %v1738 = vrot.slane %v1737, 2
      %v1739 = vmax.f32 %v1737, %v1738
      %v1740 = vrot.slane %v1739, 1
      %v1741 = vmax.f32 %v1739, %v1740
      %v1742 = vsel %vm1258, %v925, -inf
      %v1743 = vrot.slane %v1742, 4
      %v1744 = vmax.f32 %v1742, %v1743
      %v1745 = vrot.slane %v1744, 2
      %v1746 = vmax.f32 %v1744, %v1745
      %v1747 = vrot.slane %v1746, 1
      %v1748 = vmax.f32 %v1746, %v1747
      %v1749 = vsel %vm1258, %v926, -inf
      %v1750 = vrot.slane %v1749, 4
      %v1751 = vmax.f32 %v1749, %v1750
      %v1752 = vrot.slane %v1751, 2
      %v1753 = vmax.f32 %v1751, %v1752
      %v1754 = vrot.slane %v1753, 1
      %v1755 = vmax.f32 %v1753, %v1754
      %v1756 = vsel %vm1258, %v927, -inf
      %v1757 = vrot.slane %v1756, 4
      %v1758 = vmax.f32 %v1756, %v1757
      %v1759 = vrot.slane %v1758, 2
      %v1760 = vmax.f32 %v1758, %v1759
      %v1761 = vrot.slane %v1760, 1
      %v1762 = vmax.f32 %v1760, %v1761
      %v1763 = vsel %vm1258, %v764, -inf
      %v1764 = vrot.slane %v1763, 4
      %v1765 = vmax.f32 %v1763, %v1764
      %v1766 = vrot.slane %v1765, 2
      %v1767 = vmax.f32 %v1765, %v1766
      %v1768 = vrot.slane %v1767, 1
      %v1769 = vmax.f32 %v1767, %v1768
      %v1770 = vsel %vm1258, %v928, -inf
      %v1771 = vrot.slane %v1770, 4
      %v1772 = vmax.f32 %v1770, %v1771
      %v1773 = vrot.slane %v1772, 2
      %v1774 = vmax.f32 %v1772, %v1773
      %v1775 = vrot.slane %v1774, 1
      %v1776 = vmax.f32 %v1774, %v1775
      %v1777 = vsel %vm1258, %v929, -inf
      %v1778 = vrot.slane %v1777, 4
      %v1779 = vmax.f32 %v1777, %v1778
      %v1780 = vrot.slane %v1779, 2
      %v1781 = vmax.f32 %v1779, %v1780
      %v1782 = vrot.slane %v1781, 1
      %v1783 = vmax.f32 %v1781, %v1782
      %v1784 = vsel %vm1258, %v930, -inf
      %v1785 = vrot.slane %v1784, 4
      %v1786 = vmax.f32 %v1784, %v1785
      %v1787 = vrot.slane %v1786, 2
      %v1788 = vmax.f32 %v1786, %v1787
      %v1789 = vrot.slane %v1788, 1
      %v1790 = vmax.f32 %v1788, %v1789
      %v1791 = vsel %vm1258, %v765, -inf
      %v1792 = vrot.slane %v1791, 4
      %v1793 = vmax.f32 %v1791, %v1792
      %v1794 = vrot.slane %v1793, 2
      %v1795 = vmax.f32 %v1793, %v1794
      %v1796 = vrot.slane %v1795, 1
      %v1797 = vmax.f32 %v1795, %v1796
      %v1798 = vsel %vm1258, %v931, -inf
      %v1799 = vrot.slane %v1798, 4
      %v1800 = vmax.f32 %v1798, %v1799
      %v1801 = vrot.slane %v1800, 2
      %v1802 = vmax.f32 %v1800, %v1801
      %v1803 = vrot.slane %v1802, 1
      %v1804 = vmax.f32 %v1802, %v1803
      %v1805 = vsel %vm1258, %v932, -inf
      %v1806 = vrot.slane %v1805, 4
      %v1807 = vmax.f32 %v1805, %v1806
      %v1808 = vrot.slane %v1807, 2
      %v1809 = vmax.f32 %v1807, %v1808
      %v1810 = vrot.slane %v1809, 1
      %v1811 = vmax.f32 %v1809, %v1810
      %v1812 = vsel %vm1258, %v933, -inf
      %v1813 = vrot.slane %v1812, 4
      %v1814 = vmax.f32 %v1812, %v1813
      %v1815 = vrot.slane %v1814, 2
      %v1816 = vmax.f32 %v1814, %v1815
      %v1817 = vrot.slane %v1816, 1
      %v1818 = vmax.f32 %v1816, %v1817
      %v1819 = vsel %vm1258, %v766, -inf
      %v1820 = vrot.slane %v1819, 4
      %v1821 = vmax.f32 %v1819, %v1820
      %v1822 = vrot.slane %v1821, 2
      %v1823 = vmax.f32 %v1821, %v1822
      %v1824 = vrot.slane %v1823, 1
      %v1825 = vmax.f32 %v1823, %v1824
      %v1826 = vsel %vm1258, %v934, -inf
      %v1827 = vrot.slane %v1826, 4
      %v1828 = vmax.f32 %v1826, %v1827
      %v1829 = vrot.slane %v1828, 2
      %v1830 = vmax.f32 %v1828, %v1829
      %v1831 = vrot.slane %v1830, 1
      %v1832 = vmax.f32 %v1830, %v1831
      %v1833 = vsel %vm1258, %v935, -inf
      %v1834 = vrot.slane %v1833, 4
      %v1835 = vmax.f32 %v1833, %v1834
      %v1836 = vrot.slane %v1835, 2
      %v1837 = vmax.f32 %v1835, %v1836
      %v1838 = vrot.slane %v1837, 1
      %v1839 = vmax.f32 %v1837, %v1838
      %v1840 = vsel %vm1258, %v936, -inf
      %v1841 = vrot.slane %v1840, 4
      %v1842 = vmax.f32 %v1840, %v1841
      %v1843 = vrot.slane %v1842, 2
      %v1844 = vmax.f32 %v1842, %v1843
      %v1845 = vrot.slane %v1844, 1
      %v1846 = vmax.f32 %v1844, %v1845
      %v1847 = vsel %vm1258, %v767, -inf
      %v1848 = vrot.slane %v1847, 4
      %v1849 = vmax.f32 %v1847, %v1848
      %v1850 = vrot.slane %v1849, 2
      %v1851 = vmax.f32 %v1849, %v1850
      %v1852 = vrot.slane %v1851, 1
      %v1853 = vmax.f32 %v1851, %v1852
      %v1854 = vsel %vm1258, %v937, -inf
      %v1855 = vrot.slane %v1854, 4
      %v1856 = vmax.f32 %v1854, %v1855
      %v1857 = vrot.slane %v1856, 2
      %v1858 = vmax.f32 %v1856, %v1857
      %v1859 = vrot.slane %v1858, 1
      %v1860 = vmax.f32 %v1858, %v1859
      %v1861 = vsel %vm1258, %v938, -inf
      %v1862 = vrot.slane %v1861, 4
      %v1863 = vmax.f32 %v1861, %v1862
      %v1864 = vrot.slane %v1863, 2
      %v1865 = vmax.f32 %v1863, %v1864
      %v1866 = vrot.slane %v1865, 1
      %v1867 = vmax.f32 %v1865, %v1866
      %v1868 = vsel %vm1258, %v939, -inf
      %v1869 = vrot.slane %v1868, 4
      %v1870 = vmax.f32 %v1868, %v1869
      %v1871 = vrot.slane %v1870, 2
      %v1872 = vmax.f32 %v1870, %v1871
      %v1873 = vrot.slane %v1872, 1
      %v1874 = vmax.f32 %v1872, %v1873
      %v1875 = vsel %vm1258, %v768, -inf
      %v1876 = vrot.slane %v1875, 4
      %v1877 = vmax.f32 %v1875, %v1876
      %v1878 = vrot.slane %v1877, 2
      %v1879 = vmax.f32 %v1877, %v1878
      %v1880 = vrot.slane %v1879, 1
      %v1881 = vmax.f32 %v1879, %v1880
      %v1882 = vsel %vm1258, %v940, -inf
      %v1883 = vrot.slane %v1882, 4
      %v1884 = vmax.f32 %v1882, %v1883
      %v1885 = vrot.slane %v1884, 2
      %v1886 = vmax.f32 %v1884, %v1885
      %v1887 = vrot.slane %v1886, 1
      %v1888 = vmax.f32 %v1886, %v1887
      %v1889 = vsel %vm1258, %v941, -inf
      %v1890 = vrot.slane %v1889, 4
      %v1891 = vmax.f32 %v1889, %v1890
      %v1892 = vrot.slane %v1891, 2
      %v1893 = vmax.f32 %v1891, %v1892
      %v1894 = vrot.slane %v1893, 1
      %v1895 = vmax.f32 %v1893, %v1894
      %v1896 = vsel %vm1258, %v942, -inf
      %v1897 = vrot.slane %v1896, 4
      %v1898 = vmax.f32 %v1896, %v1897
      %v1899 = vrot.slane %v1898, 2
      %v1900 = vmax.f32 %v1898, %v1899
      %v1901 = vrot.slane %v1900, 1
      %v1902 = vmax.f32 %v1900, %v1901
      %v1903 = vsel %vm1258, %v769, -inf
      %v1904 = vrot.slane %v1903, 4
      %v1905 = vmax.f32 %v1903, %v1904
      %v1906 = vrot.slane %v1905, 2
      %v1907 = vmax.f32 %v1905, %v1906
      %v1908 = vrot.slane %v1907, 1
      %v1909 = vmax.f32 %v1907, %v1908
      %v1910 = vsel %vm1258, %v943, -inf
      %v1911 = vrot.slane %v1910, 4
      %v1912 = vmax.f32 %v1910, %v1911
      %v1913 = vrot.slane %v1912, 2
      %v1914 = vmax.f32 %v1912, %v1913
      %v1915 = vrot.slane %v1914, 1
      %v1916 = vmax.f32 %v1914, %v1915
      %v1917 = vsel %vm1258, %v944, -inf
      %v1918 = vrot.slane %v1917, 4
      %v1919 = vmax.f32 %v1917, %v1918
      %v1920 = vrot.slane %v1919, 2
      %v1921 = vmax.f32 %v1919, %v1920
      %v1922 = vrot.slane %v1921, 1
      %v1923 = vmax.f32 %v1921, %v1922
      %v1924 = vsel %vm1258, %v945, -inf
      %v1925 = vrot.slane %v1924, 4
      %v1926 = vmax.f32 %v1924, %v1925
      %v1927 = vrot.slane %v1926, 2
      %v1928 = vmax.f32 %v1926, %v1927
      %v1929 = vrot.slane %v1928, 1
      %v1930 = vmax.f32 %v1928, %v1929
      %v1931 = vsel %vm1258, %v770, -inf
      %v1932 = vrot.slane %v1931, 4
      %v1933 = vmax.f32 %v1931, %v1932
      %v1934 = vrot.slane %v1933, 2
      %v1935 = vmax.f32 %v1933, %v1934
      %v1936 = vrot.slane %v1935, 1
      %v1937 = vmax.f32 %v1935, %v1936
      %v1938 = vsel %vm1258, %v946, -inf
      %v1939 = vrot.slane %v1938, 4
      %v1940 = vmax.f32 %v1938, %v1939
      %v1941 = vrot.slane %v1940, 2
      %v1942 = vmax.f32 %v1940, %v1941
      %v1943 = vrot.slane %v1942, 1
      %v1944 = vmax.f32 %v1942, %v1943
      %v1945 = vsel %vm1258, %v947, -inf
      %v1946 = vrot.slane %v1945, 4
      %v1947 = vmax.f32 %v1945, %v1946
      %v1948 = vrot.slane %v1947, 2
      %v1949 = vmax.f32 %v1947, %v1948
      %v1950 = vrot.slane %v1949, 1
      %v1951 = vmax.f32 %v1949, %v1950
      %v1952 = vsel %vm1258, %v948, -inf
      %v1953 = vrot.slane %v1952, 4
      %v1954 = vmax.f32 %v1952, %v1953
      %v1955 = vrot.slane %v1954, 2
      %v1956 = vmax.f32 %v1954, %v1955
      %v1957 = vrot.slane %v1956, 1
      %v1958 = vmax.f32 %v1956, %v1957
      %v1959 = vsel %vm1258, %v771, -inf
      %v1960 = vrot.slane %v1959, 4
      %v1961 = vmax.f32 %v1959, %v1960
      %v1962 = vrot.slane %v1961, 2
      %v1963 = vmax.f32 %v1961, %v1962
      %v1964 = vrot.slane %v1963, 1
      %v1965 = vmax.f32 %v1963, %v1964
      %v1966 = vsel %vm1258, %v949, -inf
      %v1967 = vrot.slane %v1966, 4
      %v1968 = vmax.f32 %v1966, %v1967
      %v1969 = vrot.slane %v1968, 2
      %v1970 = vmax.f32 %v1968, %v1969
      %v1971 = vrot.slane %v1970, 1
      %v1972 = vmax.f32 %v1970, %v1971
      %v1973 = vsel %vm1258, %v950, -inf
      %v1974 = vrot.slane %v1973, 4
      %v1975 = vmax.f32 %v1973, %v1974
      %v1976 = vrot.slane %v1975, 2
      %v1977 = vmax.f32 %v1975, %v1976
      %v1978 = vrot.slane %v1977, 1
      %v1979 = vmax.f32 %v1977, %v1978
      %v1980 = vsel %vm1258, %v951, -inf
      %v1981 = vrot.slane %v1980, 4
      %v1982 = vmax.f32 %v1980, %v1981
      %v1983 = vrot.slane %v1982, 2
      %v1984 = vmax.f32 %v1982, %v1983
      %v1985 = vrot.slane %v1984, 1
      %v1986 = vmax.f32 %v1984, %v1985
      %v1987 = vsel %vm1258, %v772, -inf
      %v1988 = vrot.slane %v1987, 4
      %v1989 = vmax.f32 %v1987, %v1988
      %v1990 = vrot.slane %v1989, 2
      %v1991 = vmax.f32 %v1989, %v1990
      %v1992 = vrot.slane %v1991, 1
      %v1993 = vmax.f32 %v1991, %v1992
      %v1994 = vsel %vm1258, %v952, -inf
      %v1995 = vrot.slane %v1994, 4
      %v1996 = vmax.f32 %v1994, %v1995
      %v1997 = vrot.slane %v1996, 2
      %v1998 = vmax.f32 %v1996, %v1997
      %v1999 = vrot.slane %v1998, 1
      %v2000 = vmax.f32 %v1998, %v1999
      %v2001 = vsel %vm1258, %v953, -inf
      %v2002 = vrot.slane %v2001, 4
      %v2003 = vmax.f32 %v2001, %v2002
      %v2004 = vrot.slane %v2003, 2
      %v2005 = vmax.f32 %v2003, %v2004
      %v2006 = vrot.slane %v2005, 1
      %v2007 = vmax.f32 %v2005, %v2006
      %v2008 = vsel %vm1258, %v954, -inf
      %v2009 = vrot.slane %v2008, 4
      %v2010 = vmax.f32 %v2008, %v2009
      %v2011 = vrot.slane %v2010, 2
      %v2012 = vmax.f32 %v2010, %v2011
      %v2013 = vrot.slane %v2012, 1
      %v2014 = vmax.f32 %v2012, %v2013
      %v2015 = vsel %vm1258, %v773, -inf
      %v2016 = vrot.slane %v2015, 4
      %v2017 = vmax.f32 %v2015, %v2016
      %v2018 = vrot.slane %v2017, 2
      %v2019 = vmax.f32 %v2017, %v2018
      %v2020 = vrot.slane %v2019, 1
      %v2021 = vmax.f32 %v2019, %v2020
      %v2022 = vsel %vm1258, %v955, -inf
      %v2023 = vrot.slane %v2022, 4
      %v2024 = vmax.f32 %v2022, %v2023
      %v2025 = vrot.slane %v2024, 2
      %v2026 = vmax.f32 %v2024, %v2025
      %v2027 = vrot.slane %v2026, 1
      %v2028 = vmax.f32 %v2026, %v2027
      %v2029 = vsel %vm1258, %v956, -inf
      %v2030 = vrot.slane %v2029, 4
      %v2031 = vmax.f32 %v2029, %v2030
      %v2032 = vrot.slane %v2031, 2
      %v2033 = vmax.f32 %v2031, %v2032
      %v2034 = vrot.slane %v2033, 1
      %v2035 = vmax.f32 %v2033, %v2034
      %v2036 = vsel %vm1258, %v957, -inf
      %v2037 = vrot.slane %v2036, 4
      %v2038 = vmax.f32 %v2036, %v2037
      %v2039 = vrot.slane %v2038, 2
      %v2040 = vmax.f32 %v2038, %v2039
      %v2041 = vrot.slane %v2040, 1
      %v2042 = vmax.f32 %v2040, %v2041
      %v2043 = vsel %vm1258, %v774, -inf
      %v2044 = vrot.slane %v2043, 4
      %v2045 = vmax.f32 %v2043, %v2044
      %v2046 = vrot.slane %v2045, 2
      %v2047 = vmax.f32 %v2045, %v2046
      %v2048 = vrot.slane %v2047, 1
      %v2049 = vmax.f32 %v2047, %v2048
      %v2050 = vsel %vm1258, %v958, -inf
      %v2051 = vrot.slane %v2050, 4
      %v2052 = vmax.f32 %v2050, %v2051
      %v2053 = vrot.slane %v2052, 2
      %v2054 = vmax.f32 %v2052, %v2053
      %v2055 = vrot.slane %v2054, 1
      %v2056 = vmax.f32 %v2054, %v2055
      %v2057 = vsel %vm1258, %v959, -inf
      %v2058 = vrot.slane %v2057, 4
      %v2059 = vmax.f32 %v2057, %v2058
      %v2060 = vrot.slane %v2059, 2
      %v2061 = vmax.f32 %v2059, %v2060
      %v2062 = vrot.slane %v2061, 1
      %v2063 = vmax.f32 %v2061, %v2062
      %v2064 = vsel %vm1258, %v960, -inf
      %v2065 = vrot.slane %v2064, 4
      %v2066 = vmax.f32 %v2064, %v2065
      %v2067 = vrot.slane %v2066, 2
      %v2068 = vmax.f32 %v2066, %v2067
      %v2069 = vrot.slane %v2068, 1
      %v2070 = vmax.f32 %v2068, %v2069
      %v2071 = vsel %vm1258, %v775, -inf
      %v2072 = vrot.slane %v2071, 4
      %v2073 = vmax.f32 %v2071, %v2072
      %v2074 = vrot.slane %v2073, 2
      %v2075 = vmax.f32 %v2073, %v2074
      %v2076 = vrot.slane %v2075, 1
      %v2077 = vmax.f32 %v2075, %v2076
      %v2078 = vsel %vm1258, %v961, -inf
      %v2079 = vrot.slane %v2078, 4
      %v2080 = vmax.f32 %v2078, %v2079
      %v2081 = vrot.slane %v2080, 2
      %v2082 = vmax.f32 %v2080, %v2081
      %v2083 = vrot.slane %v2082, 1
      %v2084 = vmax.f32 %v2082, %v2083
      %v2085 = vsel %vm1258, %v962, -inf
      %v2086 = vrot.slane %v2085, 4
      %v2087 = vmax.f32 %v2085, %v2086
      %v2088 = vrot.slane %v2087, 2
      %v2089 = vmax.f32 %v2087, %v2088
      %v2090 = vrot.slane %v2089, 1
      %v2091 = vmax.f32 %v2089, %v2090
      %v2092 = vsel %vm1258, %v963, -inf
      %v2093 = vrot.slane %v2092, 4
      %v2094 = vmax.f32 %v2092, %v2093
      %v2095 = vrot.slane %v2094, 2
      %v2096 = vmax.f32 %v2094, %v2095
      %v2097 = vrot.slane %v2096, 1
      %v2098 = vmax.f32 %v2096, %v2097
      %v2099 = vsel %vm1258, %v776, -inf
      %v2100 = vrot.slane %v2099, 4
      %v2101 = vmax.f32 %v2099, %v2100
      %v2102 = vrot.slane %v2101, 2
      %v2103 = vmax.f32 %v2101, %v2102
      %v2104 = vrot.slane %v2103, 1
      %v2105 = vmax.f32 %v2103, %v2104
      %v2106 = vsel %vm1258, %v964, -inf
      %v2107 = vrot.slane %v2106, 4
      %v2108 = vmax.f32 %v2106, %v2107
      %v2109 = vrot.slane %v2108, 2
      %v2110 = vmax.f32 %v2108, %v2109
      %v2111 = vrot.slane %v2110, 1
      %v2112 = vmax.f32 %v2110, %v2111
      %v2113 = vsel %vm1258, %v965, -inf
      %v2114 = vrot.slane %v2113, 4
      %v2115 = vmax.f32 %v2113, %v2114
      %v2116 = vrot.slane %v2115, 2
      %v2117 = vmax.f32 %v2115, %v2116
      %v2118 = vrot.slane %v2117, 1
      %v2119 = vmax.f32 %v2117, %v2118
      %v2120 = vsel %vm1258, %v966, -inf
      %v2121 = vrot.slane %v2120, 4
      %v2122 = vmax.f32 %v2120, %v2121
      %v2123 = vrot.slane %v2122, 2
      %v2124 = vmax.f32 %v2122, %v2123
      %v2125 = vrot.slane %v2124, 1
      %v2126 = vmax.f32 %v2124, %v2125
      %v2127 = vsel %vm1258, %v777, -inf
      %v2128 = vrot.slane %v2127, 4
      %v2129 = vmax.f32 %v2127, %v2128
      %v2130 = vrot.slane %v2129, 2
      %v2131 = vmax.f32 %v2129, %v2130
      %v2132 = vrot.slane %v2131, 1
      %v2133 = vmax.f32 %v2131, %v2132
      %v2134 = vsel %vm1258, %v967, -inf
      %v2135 = vrot.slane %v2134, 4
      %v2136 = vmax.f32 %v2134, %v2135
      %v2137 = vrot.slane %v2136, 2
      %v2138 = vmax.f32 %v2136, %v2137
      %v2139 = vrot.slane %v2138, 1
      %v2140 = vmax.f32 %v2138, %v2139
      %v2141 = vsel %vm1258, %v968, -inf
      %v2142 = vrot.slane %v2141, 4
      %v2143 = vmax.f32 %v2141, %v2142
      %v2144 = vrot.slane %v2143, 2
      %v2145 = vmax.f32 %v2143, %v2144
      %v2146 = vrot.slane %v2145, 1
      %v2147 = vmax.f32 %v2145, %v2146
      %v2148 = vsel %vm1258, %v969, -inf
      %v2149 = vrot.slane %v2148, 4
      %v2150 = vmax.f32 %v2148, %v2149
      %v2151 = vrot.slane %v2150, 2
      %v2152 = vmax.f32 %v2150, %v2151
      %v2153 = vrot.slane %v2152, 1
      %v2154 = vmax.f32 %v2152, %v2153
      %v2155 = vsel %vm1258, %v778, -inf
      %v2156 = vrot.slane %v2155, 4
      %v2157 = vmax.f32 %v2155, %v2156
      %v2158 = vrot.slane %v2157, 2
      %v2159 = vmax.f32 %v2157, %v2158
      %v2160 = vrot.slane %v2159, 1
      %v2161 = vmax.f32 %v2159, %v2160
      %v2162 = vsel %vm1258, %v970, -inf
      %v2163 = vrot.slane %v2162, 4
      %v2164 = vmax.f32 %v2162, %v2163
      %v2165 = vrot.slane %v2164, 2
      %v2166 = vmax.f32 %v2164, %v2165
      %v2167 = vrot.slane %v2166, 1
      %v2168 = vmax.f32 %v2166, %v2167
      %v2169 = vsel %vm1258, %v971, -inf
      %v2170 = vrot.slane %v2169, 4
      %v2171 = vmax.f32 %v2169, %v2170
      %v2172 = vrot.slane %v2171, 2
      %v2173 = vmax.f32 %v2171, %v2172
      %v2174 = vrot.slane %v2173, 1
      %v2175 = vmax.f32 %v2173, %v2174
      %v2176 = vsel %vm1258, %v972, -inf
      %v2177 = vrot.slane %v2176, 4
      %v2178 = vmax.f32 %v2176, %v2177
      %v2179 = vrot.slane %v2178, 2
      %v2180 = vmax.f32 %v2178, %v2179
      %v2181 = vrot.slane %v2180, 1
      %v2182 = vmax.f32 %v2180, %v2181
      %v2183 = vsel %vm1258, %v779, -inf
      %v2184 = vrot.slane %v2183, 4
      %v2185 = vmax.f32 %v2183, %v2184
      %v2186 = vrot.slane %v2185, 2
      %v2187 = vmax.f32 %v2185, %v2186
      %v2188 = vrot.slane %v2187, 1
      %v2189 = vmax.f32 %v2187, %v2188
      %v2190 = vsel %vm1258, %v973, -inf
      %v2191 = vrot.slane %v2190, 4
      %v2192 = vmax.f32 %v2190, %v2191
      %v2193 = vrot.slane %v2192, 2
      %v2194 = vmax.f32 %v2192, %v2193
      %v2195 = vrot.slane %v2194, 1
      %v2196 = vmax.f32 %v2194, %v2195
      %v2197 = vsel %vm1258, %v974, -inf
      %v2198 = vrot.slane %v2197, 4
      %v2199 = vmax.f32 %v2197, %v2198
      %v2200 = vrot.slane %v2199, 2
      %v2201 = vmax.f32 %v2199, %v2200
      %v2202 = vrot.slane %v2201, 1
      %v2203 = vmax.f32 %v2201, %v2202
      %v2204 = vsel %vm1258, %v975, -inf
      %v2205 = vrot.slane %v2204, 4
      %v2206 = vmax.f32 %v2204, %v2205
      %v2207 = vrot.slane %v2206, 2
      %v2208 = vmax.f32 %v2206, %v2207
      %v2209 = vrot.slane %v2208, 1
      %v2210 = vmax.f32 %v2208, %v2209
      %v2211 = vsel %vm1258, %v780, -inf
      %v2212 = vrot.slane %v2211, 4
      %v2213 = vmax.f32 %v2211, %v2212
      %v2214 = vrot.slane %v2213, 2
      %v2215 = vmax.f32 %v2213, %v2214
      %v2216 = vrot.slane %v2215, 1
      %v2217 = vmax.f32 %v2215, %v2216
      %v2218 = vsel %vm1258, %v976, -inf
      %v2219 = vrot.slane %v2218, 4
      %v2220 = vmax.f32 %v2218, %v2219
      %v2221 = vrot.slane %v2220, 2
      %v2222 = vmax.f32 %v2220, %v2221
      %v2223 = vrot.slane %v2222, 1
      %v2224 = vmax.f32 %v2222, %v2223
      %v2225 = vsel %vm1258, %v977, -inf
      %v2226 = vrot.slane %v2225, 4
      %v2227 = vmax.f32 %v2225, %v2226
      %v2228 = vrot.slane %v2227, 2
      %v2229 = vmax.f32 %v2227, %v2228
      %v2230 = vrot.slane %v2229, 1
      %v2231 = vmax.f32 %v2229, %v2230
      %v2232 = vsel %vm1258, %v978, -inf
      %v2233 = vrot.slane %v2232, 4
      %v2234 = vmax.f32 %v2232, %v2233
      %v2235 = vrot.slane %v2234, 2
      %v2236 = vmax.f32 %v2234, %v2235
      %v2237 = vrot.slane %v2236, 1
      %v2238 = vmax.f32 %v2236, %v2237
      %v2239 = vsel %vm1258, %v781, -inf
      %v2240 = vrot.slane %v2239, 4
      %v2241 = vmax.f32 %v2239, %v2240
      %v2242 = vrot.slane %v2241, 2
      %v2243 = vmax.f32 %v2241, %v2242
      %v2244 = vrot.slane %v2243, 1
      %v2245 = vmax.f32 %v2243, %v2244
      %v2246 = vsel %vm1258, %v979, -inf
      %v2247 = vrot.slane %v2246, 4
      %v2248 = vmax.f32 %v2246, %v2247
      %v2249 = vrot.slane %v2248, 2
      %v2250 = vmax.f32 %v2248, %v2249
      %v2251 = vrot.slane %v2250, 1
      %v2252 = vmax.f32 %v2250, %v2251
      %v2253 = vsel %vm1258, %v980, -inf
      %v2254 = vrot.slane %v2253, 4
      %v2255 = vmax.f32 %v2253, %v2254
      %v2256 = vrot.slane %v2255, 2
      %v2257 = vmax.f32 %v2255, %v2256
      %v2258 = vrot.slane %v2257, 1
      %v2259 = vmax.f32 %v2257, %v2258
      %v2260 = vsel %vm1258, %v981, -inf
      %v2261 = vrot.slane %v2260, 4
      %v2262 = vmax.f32 %v2260, %v2261
      %v2263 = vrot.slane %v2262, 2
      %v2264 = vmax.f32 %v2262, %v2263
      %v2265 = vrot.slane %v2264, 1
      %v2266 = vmax.f32 %v2264, %v2265
      %v2267 = vsel %vm1258, %v782, -inf
      %v2268 = vrot.slane %v2267, 4
      %v2269 = vmax.f32 %v2267, %v2268
      %v2270 = vrot.slane %v2269, 2
      %v2271 = vmax.f32 %v2269, %v2270
      %v2272 = vrot.slane %v2271, 1
      %v2273 = vmax.f32 %v2271, %v2272
      %v2274 = vsel %vm1258, %v982, -inf
      %v2275 = vrot.slane %v2274, 4
      %v2276 = vmax.f32 %v2274, %v2275
      %v2277 = vrot.slane %v2276, 2
      %v2278 = vmax.f32 %v2276, %v2277
      %v2279 = vrot.slane %v2278, 1
      %v2280 = vmax.f32 %v2278, %v2279
      %v2281 = vsel %vm1258, %v983, -inf
      %v2282 = vrot.slane %v2281, 4
      %v2283 = vmax.f32 %v2281, %v2282
      %v2284 = vrot.slane %v2283, 2
      %v2285 = vmax.f32 %v2283, %v2284
      %v2286 = vrot.slane %v2285, 1
      %v2287 = vmax.f32 %v2285, %v2286
      %v2288 = vsel %vm1258, %v984, -inf
      %v2289 = vrot.slane %v2288, 4
      %v2290 = vmax.f32 %v2288, %v2289
      %v2291 = vrot.slane %v2290, 2
      %v2292 = vmax.f32 %v2290, %v2291
      %v2293 = vrot.slane %v2292, 1
      %v2294 = vmax.f32 %v2292, %v2293
      %v2295 = vsel %vm1258, %v783, -inf
      %v2296 = vrot.slane %v2295, 4
      %v2297 = vmax.f32 %v2295, %v2296
      %v2298 = vrot.slane %v2297, 2
      %v2299 = vmax.f32 %v2297, %v2298
      %v2300 = vrot.slane %v2299, 1
      %v2301 = vmax.f32 %v2299, %v2300
      %v2302 = vsel %vm1258, %v985, -inf
      %v2303 = vrot.slane %v2302, 4
      %v2304 = vmax.f32 %v2302, %v2303
      %v2305 = vrot.slane %v2304, 2
      %v2306 = vmax.f32 %v2304, %v2305
      %v2307 = vrot.slane %v2306, 1
      %v2308 = vmax.f32 %v2306, %v2307
      %v2309 = vsel %vm1258, %v986, -inf
      %v2310 = vrot.slane %v2309, 4
      %v2311 = vmax.f32 %v2309, %v2310
      %v2312 = vrot.slane %v2311, 2
      %v2313 = vmax.f32 %v2311, %v2312
      %v2314 = vrot.slane %v2313, 1
      %v2315 = vmax.f32 %v2313, %v2314
      %v2316 = vsel %vm1258, %v987, -inf
      %v2317 = vrot.slane %v2316, 4
      %v2318 = vmax.f32 %v2316, %v2317
      %v2319 = vrot.slane %v2318, 2
      %v2320 = vmax.f32 %v2318, %v2319
      %v2321 = vrot.slane %v2320, 1
      %v2322 = vmax.f32 %v2320, %v2321
      %v2323 = vsel %vm1258, %v784, -inf
      %v2324 = vrot.slane %v2323, 4
      %v2325 = vmax.f32 %v2323, %v2324
      %v2326 = vrot.slane %v2325, 2
      %v2327 = vmax.f32 %v2325, %v2326
      %v2328 = vrot.slane %v2327, 1
      %v2329 = vmax.f32 %v2327, %v2328
      %v2330 = vsel %vm1258, %v988, -inf
      %v2331 = vrot.slane %v2330, 4
      %v2332 = vmax.f32 %v2330, %v2331
      %v2333 = vrot.slane %v2332, 2
      %v2334 = vmax.f32 %v2332, %v2333
      %v2335 = vrot.slane %v2334, 1
      %v2336 = vmax.f32 %v2334, %v2335
      %v2337 = vsel %vm1258, %v989, -inf
      %v2338 = vrot.slane %v2337, 4
      %v2339 = vmax.f32 %v2337, %v2338
      %v2340 = vrot.slane %v2339, 2
      %v2341 = vmax.f32 %v2339, %v2340
      %v2342 = vrot.slane %v2341, 1
      %v2343 = vmax.f32 %v2341, %v2342
      %v2344 = vsel %vm1258, %v990, -inf
      %v2345 = vrot.slane %v2344, 4
      %v2346 = vmax.f32 %v2344, %v2345
      %v2347 = vrot.slane %v2346, 2
      %v2348 = vmax.f32 %v2346, %v2347
      %v2349 = vrot.slane %v2348, 1
      %v2350 = vmax.f32 %v2348, %v2349
      %v2351 = vsel %vm1258, %v785, -inf
      %v2352 = vrot.slane %v2351, 4
      %v2353 = vmax.f32 %v2351, %v2352
      %v2354 = vrot.slane %v2353, 2
      %v2355 = vmax.f32 %v2353, %v2354
      %v2356 = vrot.slane %v2355, 1
      %v2357 = vmax.f32 %v2355, %v2356
      %v2358 = vsel %vm1258, %v991, -inf
      %v2359 = vrot.slane %v2358, 4
      %v2360 = vmax.f32 %v2358, %v2359
      %v2361 = vrot.slane %v2360, 2
      %v2362 = vmax.f32 %v2360, %v2361
      %v2363 = vrot.slane %v2362, 1
      %v2364 = vmax.f32 %v2362, %v2363
      %v2365 = vsel %vm1258, %v992, -inf
      %v2366 = vrot.slane %v2365, 4
      %v2367 = vmax.f32 %v2365, %v2366
      %v2368 = vrot.slane %v2367, 2
      %v2369 = vmax.f32 %v2367, %v2368
      %v2370 = vrot.slane %v2369, 1
      %v2371 = vmax.f32 %v2369, %v2370
      %v2372 = vsel %vm1258, %v993, -inf
      %v2373 = vrot.slane %v2372, 4
      %v2374 = vmax.f32 %v2372, %v2373
      %v2375 = vrot.slane %v2374, 2
      %v2376 = vmax.f32 %v2374, %v2375
      %v2377 = vrot.slane %v2376, 1
      %v2378 = vmax.f32 %v2376, %v2377
      %v2379 = vsel %vm1258, %v786, -inf
      %v2380 = vrot.slane %v2379, 4
      %v2381 = vmax.f32 %v2379, %v2380
      %v2382 = vrot.slane %v2381, 2
      %v2383 = vmax.f32 %v2381, %v2382
      %v2384 = vrot.slane %v2383, 1
      %v2385 = vmax.f32 %v2383, %v2384
      %v2386 = vsel %vm1258, %v994, -inf
      %v2387 = vrot.slane %v2386, 4
      %v2388 = vmax.f32 %v2386, %v2387
      %v2389 = vrot.slane %v2388, 2
      %v2390 = vmax.f32 %v2388, %v2389
      %v2391 = vrot.slane %v2390, 1
      %v2392 = vmax.f32 %v2390, %v2391
      %v2393 = vsel %vm1258, %v995, -inf
      %v2394 = vrot.slane %v2393, 4
      %v2395 = vmax.f32 %v2393, %v2394
      %v2396 = vrot.slane %v2395, 2
      %v2397 = vmax.f32 %v2395, %v2396
      %v2398 = vrot.slane %v2397, 1
      %v2399 = vmax.f32 %v2397, %v2398
      %v2400 = vsel %vm1258, %v996, -inf
      %v2401 = vrot.slane %v2400, 4
      %v2402 = vmax.f32 %v2400, %v2401
      %v2403 = vrot.slane %v2402, 2
      %v2404 = vmax.f32 %v2402, %v2403
      %v2405 = vrot.slane %v2404, 1
      %v2406 = vmax.f32 %v2404, %v2405
      %v2407 = vsel %vm1258, %v787, -inf
      %v2408 = vrot.slane %v2407, 4
      %v2409 = vmax.f32 %v2407, %v2408
      %v2410 = vrot.slane %v2409, 2
      %v2411 = vmax.f32 %v2409, %v2410
      %v2412 = vrot.slane %v2411, 1
      %v2413 = vmax.f32 %v2411, %v2412
      %v2414 = vsel %vm1258, %v997, -inf
      %v2415 = vrot.slane %v2414, 4
      %v2416 = vmax.f32 %v2414, %v2415
      %v2417 = vrot.slane %v2416, 2
      %v2418 = vmax.f32 %v2416, %v2417
      %v2419 = vrot.slane %v2418, 1
      %v2420 = vmax.f32 %v2418, %v2419
      %v2421 = vsel %vm1258, %v998, -inf
      %v2422 = vrot.slane %v2421, 4
      %v2423 = vmax.f32 %v2421, %v2422
      %v2424 = vrot.slane %v2423, 2
      %v2425 = vmax.f32 %v2423, %v2424
      %v2426 = vrot.slane %v2425, 1
      %v2427 = vmax.f32 %v2425, %v2426
      %v2428 = vsel %vm1258, %v999, -inf
      %v2429 = vrot.slane %v2428, 4
      %v2430 = vmax.f32 %v2428, %v2429
      %v2431 = vrot.slane %v2430, 2
      %v2432 = vmax.f32 %v2430, %v2431
      %v2433 = vrot.slane %v2432, 1
      %v2434 = vmax.f32 %v2432, %v2433
      %v2435 = vsel %vm1258, %v788, -inf
      %v2436 = vrot.slane %v2435, 4
      %v2437 = vmax.f32 %v2435, %v2436
      %v2438 = vrot.slane %v2437, 2
      %v2439 = vmax.f32 %v2437, %v2438
      %v2440 = vrot.slane %v2439, 1
      %v2441 = vmax.f32 %v2439, %v2440
      %v2442 = vsel %vm1258, %v1000, -inf
      %v2443 = vrot.slane %v2442, 4
      %v2444 = vmax.f32 %v2442, %v2443
      %v2445 = vrot.slane %v2444, 2
      %v2446 = vmax.f32 %v2444, %v2445
      %v2447 = vrot.slane %v2446, 1
      %v2448 = vmax.f32 %v2446, %v2447
      %v2449 = vsel %vm1258, %v1001, -inf
      %v2450 = vrot.slane %v2449, 4
      %v2451 = vmax.f32 %v2449, %v2450
      %v2452 = vrot.slane %v2451, 2
      %v2453 = vmax.f32 %v2451, %v2452
      %v2454 = vrot.slane %v2453, 1
      %v2455 = vmax.f32 %v2453, %v2454
      %v2456 = vsel %vm1258, %v1002, -inf
      %v2457 = vrot.slane %v2456, 4
      %v2458 = vmax.f32 %v2456, %v2457
      %v2459 = vrot.slane %v2458, 2
      %v2460 = vmax.f32 %v2458, %v2459
      %v2461 = vrot.slane %v2460, 1
      %v2462 = vmax.f32 %v2460, %v2461
      %v2463 = vsel %vm1258, %v789, -inf
      %v2464 = vrot.slane %v2463, 4
      %v2465 = vmax.f32 %v2463, %v2464
      %v2466 = vrot.slane %v2465, 2
      %v2467 = vmax.f32 %v2465, %v2466
      %v2468 = vrot.slane %v2467, 1
      %v2469 = vmax.f32 %v2467, %v2468
      %v2470 = vsel %vm1258, %v1003, -inf
      %v2471 = vrot.slane %v2470, 4
      %v2472 = vmax.f32 %v2470, %v2471
      %v2473 = vrot.slane %v2472, 2
      %v2474 = vmax.f32 %v2472, %v2473
      %v2475 = vrot.slane %v2474, 1
      %v2476 = vmax.f32 %v2474, %v2475
      %v2477 = vsel %vm1258, %v1004, -inf
      %v2478 = vrot.slane %v2477, 4
      %v2479 = vmax.f32 %v2477, %v2478
      %v2480 = vrot.slane %v2479, 2
      %v2481 = vmax.f32 %v2479, %v2480
      %v2482 = vrot.slane %v2481, 1
      %v2483 = vmax.f32 %v2481, %v2482
      %v2484 = vsel %vm1258, %v1005, -inf
      %v2485 = vrot.slane %v2484, 4
      %v2486 = vmax.f32 %v2484, %v2485
      %v2487 = vrot.slane %v2486, 2
      %v2488 = vmax.f32 %v2486, %v2487
      %v2489 = vrot.slane %v2488, 1
      %v2490 = vmax.f32 %v2488, %v2489
      %v2491 = vsel %vm1258, %v790, -inf
      %v2492 = vrot.slane %v2491, 4
      %v2493 = vmax.f32 %v2491, %v2492
      %v2494 = vrot.slane %v2493, 2
      %v2495 = vmax.f32 %v2493, %v2494
      %v2496 = vrot.slane %v2495, 1
      %v2497 = vmax.f32 %v2495, %v2496
      %v2498 = vsel %vm1258, %v1006, -inf
      %v2499 = vrot.slane %v2498, 4
      %v2500 = vmax.f32 %v2498, %v2499
      %v2501 = vrot.slane %v2500, 2
      %v2502 = vmax.f32 %v2500, %v2501
      %v2503 = vrot.slane %v2502, 1
      %v2504 = vmax.f32 %v2502, %v2503
      %v2505 = vsel %vm1258, %v1007, -inf
      %v2506 = vrot.slane %v2505, 4
      %v2507 = vmax.f32 %v2505, %v2506
      %v2508 = vrot.slane %v2507, 2
      %v2509 = vmax.f32 %v2507, %v2508
      %v2510 = vrot.slane %v2509, 1
      %v2511 = vmax.f32 %v2509, %v2510
      %v2512 = vsel %vm1258, %v1008, -inf
      %v2513 = vrot.slane %v2512, 4
      %v2514 = vmax.f32 %v2512, %v2513
      %v2515 = vrot.slane %v2514, 2
      %v2516 = vmax.f32 %v2514, %v2515
      %v2517 = vrot.slane %v2516, 1
      %v2518 = vmax.f32 %v2516, %v2517
      %v2519 = vsel %vm1258, %v791, -inf
      %v2520 = vrot.slane %v2519, 4
      %v2521 = vmax.f32 %v2519, %v2520
      %v2522 = vrot.slane %v2521, 2
      %v2523 = vmax.f32 %v2521, %v2522
      %v2524 = vrot.slane %v2523, 1
      %v2525 = vmax.f32 %v2523, %v2524
      %v2526 = vsel %vm1258, %v1009, -inf
      %v2527 = vrot.slane %v2526, 4
      %v2528 = vmax.f32 %v2526, %v2527
      %v2529 = vrot.slane %v2528, 2
      %v2530 = vmax.f32 %v2528, %v2529
      %v2531 = vrot.slane %v2530, 1
      %v2532 = vmax.f32 %v2530, %v2531
      %v2533 = vsel %vm1258, %v1010, -inf
      %v2534 = vrot.slane %v2533, 4
      %v2535 = vmax.f32 %v2533, %v2534
      %v2536 = vrot.slane %v2535, 2
      %v2537 = vmax.f32 %v2535, %v2536
      %v2538 = vrot.slane %v2537, 1
      %v2539 = vmax.f32 %v2537, %v2538
      %v2540 = vsel %vm1258, %v1011, -inf
      %v2541 = vrot.slane %v2540, 4
      %v2542 = vmax.f32 %v2540, %v2541
      %v2543 = vrot.slane %v2542, 2
      %v2544 = vmax.f32 %v2542, %v2543
      %v2545 = vrot.slane %v2544, 1
      %v2546 = vmax.f32 %v2544, %v2545
      %v2547 = vsel %vm1258, %v792, -inf
      %v2548 = vrot.slane %v2547, 4
      %v2549 = vmax.f32 %v2547, %v2548
      %v2550 = vrot.slane %v2549, 2
      %v2551 = vmax.f32 %v2549, %v2550
      %v2552 = vrot.slane %v2551, 1
      %v2553 = vmax.f32 %v2551, %v2552
      %v2554 = vsel %vm1258, %v1012, -inf
      %v2555 = vrot.slane %v2554, 4
      %v2556 = vmax.f32 %v2554, %v2555
      %v2557 = vrot.slane %v2556, 2
      %v2558 = vmax.f32 %v2556, %v2557
      %v2559 = vrot.slane %v2558, 1
      %v2560 = vmax.f32 %v2558, %v2559
      %v2561 = vsel %vm1258, %v1013, -inf
      %v2562 = vrot.slane %v2561, 4
      %v2563 = vmax.f32 %v2561, %v2562
      %v2564 = vrot.slane %v2563, 2
      %v2565 = vmax.f32 %v2563, %v2564
      %v2566 = vrot.slane %v2565, 1
      %v2567 = vmax.f32 %v2565, %v2566
      %v2568 = vsel %vm1258, %v1014, -inf
      %v2569 = vrot.slane %v2568, 4
      %v2570 = vmax.f32 %v2568, %v2569
      %v2571 = vrot.slane %v2570, 2
      %v2572 = vmax.f32 %v2570, %v2571
      %v2573 = vrot.slane %v2572, 1
      %v2574 = vmax.f32 %v2572, %v2573
      %v2575 = vsel %vm1258, %v793, -inf
      %v2576 = vrot.slane %v2575, 4
      %v2577 = vmax.f32 %v2575, %v2576
      %v2578 = vrot.slane %v2577, 2
      %v2579 = vmax.f32 %v2577, %v2578
      %v2580 = vrot.slane %v2579, 1
      %v2581 = vmax.f32 %v2579, %v2580
      %v2582 = vsel %vm1258, %v1015, -inf
      %v2583 = vrot.slane %v2582, 4
      %v2584 = vmax.f32 %v2582, %v2583
      %v2585 = vrot.slane %v2584, 2
      %v2586 = vmax.f32 %v2584, %v2585
      %v2587 = vrot.slane %v2586, 1
      %v2588 = vmax.f32 %v2586, %v2587
      %v2589 = vsel %vm1258, %v1016, -inf
      %v2590 = vrot.slane %v2589, 4
      %v2591 = vmax.f32 %v2589, %v2590
      %v2592 = vrot.slane %v2591, 2
      %v2593 = vmax.f32 %v2591, %v2592
      %v2594 = vrot.slane %v2593, 1
      %v2595 = vmax.f32 %v2593, %v2594
      %v2596 = vsel %vm1258, %v1017, -inf
      %v2597 = vrot.slane %v2596, 4
      %v2598 = vmax.f32 %v2596, %v2597
      %v2599 = vrot.slane %v2598, 2
      %v2600 = vmax.f32 %v2598, %v2599
      %v2601 = vrot.slane %v2600, 1
      %v2602 = vmax.f32 %v2600, %v2601
      %v2603 = vsel %vm1258, %v794, -inf
      %v2604 = vrot.slane %v2603, 4
      %v2605 = vmax.f32 %v2603, %v2604
      %v2606 = vrot.slane %v2605, 2
      %v2607 = vmax.f32 %v2605, %v2606
      %v2608 = vrot.slane %v2607, 1
      %v2609 = vmax.f32 %v2607, %v2608
      %v2610 = vsel %vm1258, %v1018, -inf
      %v2611 = vrot.slane %v2610, 4
      %v2612 = vmax.f32 %v2610, %v2611
      %v2613 = vrot.slane %v2612, 2
      %v2614 = vmax.f32 %v2612, %v2613
      %v2615 = vrot.slane %v2614, 1
      %v2616 = vmax.f32 %v2614, %v2615
      %v2617 = vsel %vm1258, %v1019, -inf
      %v2618 = vrot.slane %v2617, 4
      %v2619 = vmax.f32 %v2617, %v2618
      %v2620 = vrot.slane %v2619, 2
      %v2621 = vmax.f32 %v2619, %v2620
      %v2622 = vrot.slane %v2621, 1
      %v2623 = vmax.f32 %v2621, %v2622
      %v2624 = vsel %vm1258, %v1020, -inf
      %v2625 = vrot.slane %v2624, 4
      %v2626 = vmax.f32 %v2624, %v2625
      %v2627 = vrot.slane %v2626, 2
      %v2628 = vmax.f32 %v2626, %v2627
      %v2629 = vrot.slane %v2628, 1
      %v2630 = vmax.f32 %v2628, %v2629
      %v2631 = vsel %vm1258, %v795, -inf
      %v2632 = vrot.slane %v2631, 4
      %v2633 = vmax.f32 %v2631, %v2632
      %v2634 = vrot.slane %v2633, 2
      %v2635 = vmax.f32 %v2633, %v2634
      %v2636 = vrot.slane %v2635, 1
      %v2637 = vmax.f32 %v2635, %v2636
      %v2638 = vsel %vm1258, %v1021, -inf
      %v2639 = vrot.slane %v2638, 4
      %v2640 = vmax.f32 %v2638, %v2639
      %v2641 = vrot.slane %v2640, 2
      %v2642 = vmax.f32 %v2640, %v2641
      %v2643 = vrot.slane %v2642, 1
      %v2644 = vmax.f32 %v2642, %v2643
      %v2645 = vsel %vm1258, %v1022, -inf
      %v2646 = vrot.slane %v2645, 4
      %v2647 = vmax.f32 %v2645, %v2646
      %v2648 = vrot.slane %v2647, 2
      %v2649 = vmax.f32 %v2647, %v2648
      %v2650 = vrot.slane %v2649, 1
      %v2651 = vmax.f32 %v2649, %v2650
      %v2652 = vsel %vm1258, %v1023, -inf
      %v2653 = vrot.slane %v2652, 4
      %v2654 = vmax.f32 %v2652, %v2653
      %v2655 = vrot.slane %v2654, 2
      %v2656 = vmax.f32 %v2654, %v2655
      %v2657 = vrot.slane %v2656, 1
      %v2658 = vmax.f32 %v2656, %v2657
      %v2659 = vsel %vm1258, %v796, -inf
      %v2660 = vrot.slane %v2659, 4
      %v2661 = vmax.f32 %v2659, %v2660
      %v2662 = vrot.slane %v2661, 2
      %v2663 = vmax.f32 %v2661, %v2662
      %v2664 = vrot.slane %v2663, 1
      %v2665 = vmax.f32 %v2663, %v2664
      %v2666 = vsel %vm1258, %v1024, -inf
      %v2667 = vrot.slane %v2666, 4
      %v2668 = vmax.f32 %v2666, %v2667
      %v2669 = vrot.slane %v2668, 2
      %v2670 = vmax.f32 %v2668, %v2669
      %v2671 = vrot.slane %v2670, 1
      %v2672 = vmax.f32 %v2670, %v2671
      %v2673 = vsel %vm1258, %v1025, -inf
      %v2674 = vrot.slane %v2673, 4
      %v2675 = vmax.f32 %v2673, %v2674
      %v2676 = vrot.slane %v2675, 2
      %v2677 = vmax.f32 %v2675, %v2676
      %v2678 = vrot.slane %v2677, 1
      %v2679 = vmax.f32 %v2677, %v2678
      %v2680 = vsel %vm1258, %v1026, -inf
      %v2681 = vrot.slane %v2680, 4
      %v2682 = vmax.f32 %v2680, %v2681
      %v2683 = vrot.slane %v2682, 2
      %v2684 = vmax.f32 %v2682, %v2683
      %v2685 = vrot.slane %v2684, 1
      %v2686 = vmax.f32 %v2684, %v2685
      %v2687 = vsel %vm1258, %v797, -inf
      %v2688 = vrot.slane %v2687, 4
      %v2689 = vmax.f32 %v2687, %v2688
      %v2690 = vrot.slane %v2689, 2
      %v2691 = vmax.f32 %v2689, %v2690
      %v2692 = vrot.slane %v2691, 1
      %v2693 = vmax.f32 %v2691, %v2692
      %v2694 = vsel %vm1258, %v1027, -inf
      %v2695 = vrot.slane %v2694, 4
      %v2696 = vmax.f32 %v2694, %v2695
      %v2697 = vrot.slane %v2696, 2
      %v2698 = vmax.f32 %v2696, %v2697
      %v2699 = vrot.slane %v2698, 1
      %v2700 = vmax.f32 %v2698, %v2699
      %v2701 = vsel %vm1258, %v1028, -inf
      %v2702 = vrot.slane %v2701, 4
      %v2703 = vmax.f32 %v2701, %v2702
      %v2704 = vrot.slane %v2703, 2
      %v2705 = vmax.f32 %v2703, %v2704
      %v2706 = vrot.slane %v2705, 1
      %v2707 = vmax.f32 %v2705, %v2706
      %v2708 = vsel %vm1258, %v1029, -inf
      %v2709 = vrot.slane %v2708, 4
      %v2710 = vmax.f32 %v2708, %v2709
      %v2711 = vrot.slane %v2710, 2
      %v2712 = vmax.f32 %v2710, %v2711
      %v2713 = vrot.slane %v2712, 1
      %v2714 = vmax.f32 %v2712, %v2713
      %v2715 = vsel %vm1258, %v798, -inf
      %v2716 = vrot.slane %v2715, 4
      %v2717 = vmax.f32 %v2715, %v2716
      %v2718 = vrot.slane %v2717, 2
      %v2719 = vmax.f32 %v2717, %v2718
      %v2720 = vrot.slane %v2719, 1
      %v2721 = vmax.f32 %v2719, %v2720
      %v2722 = vsel %vm1258, %v1030, -inf
      %v2723 = vrot.slane %v2722, 4
      %v2724 = vmax.f32 %v2722, %v2723
      %v2725 = vrot.slane %v2724, 2
      %v2726 = vmax.f32 %v2724, %v2725
      %v2727 = vrot.slane %v2726, 1
      %v2728 = vmax.f32 %v2726, %v2727
      %v2729 = vsel %vm1258, %v1031, -inf
      %v2730 = vrot.slane %v2729, 4
      %v2731 = vmax.f32 %v2729, %v2730
      %v2732 = vrot.slane %v2731, 2
      %v2733 = vmax.f32 %v2731, %v2732
      %v2734 = vrot.slane %v2733, 1
      %v2735 = vmax.f32 %v2733, %v2734
      %v2736 = vsel %vm1258, %v1032, -inf
      %v2737 = vrot.slane %v2736, 4
      %v2738 = vmax.f32 %v2736, %v2737
      %v2739 = vrot.slane %v2738, 2
      %v2740 = vmax.f32 %v2738, %v2739
      %v2741 = vrot.slane %v2740, 1
      %v2742 = vmax.f32 %v2740, %v2741
      %v2743 = vsel %vm1258, %v799, -inf
      %v2744 = vrot.slane %v2743, 4
      %v2745 = vmax.f32 %v2743, %v2744
      %v2746 = vrot.slane %v2745, 2
      %v2747 = vmax.f32 %v2745, %v2746
      %v2748 = vrot.slane %v2747, 1
      %v2749 = vmax.f32 %v2747, %v2748
      %v2750 = vsel %vm1258, %v1033, -inf
      %v2751 = vrot.slane %v2750, 4
      %v2752 = vmax.f32 %v2750, %v2751
      %v2753 = vrot.slane %v2752, 2
      %v2754 = vmax.f32 %v2752, %v2753
      %v2755 = vrot.slane %v2754, 1
      %v2756 = vmax.f32 %v2754, %v2755
      %v2757 = vsel %vm1258, %v1034, -inf
      %v2758 = vrot.slane %v2757, 4
      %v2759 = vmax.f32 %v2757, %v2758
      %v2760 = vrot.slane %v2759, 2
      %v2761 = vmax.f32 %v2759, %v2760
      %v2762 = vrot.slane %v2761, 1
      %v2763 = vmax.f32 %v2761, %v2762
      %v2764 = vsel %vm1258, %v1035, -inf
      %v2765 = vrot.slane %v2764, 4
      %v2766 = vmax.f32 %v2764, %v2765
      %v2767 = vrot.slane %v2766, 2
      %v2768 = vmax.f32 %v2766, %v2767
      %v2769 = vrot.slane %v2768, 1
      %v2770 = vmax.f32 %v2768, %v2769
      %v2771 = vsel %vm1258, %v800, -inf
      %v2772 = vrot.slane %v2771, 4
      %v2773 = vmax.f32 %v2771, %v2772
      %v2774 = vrot.slane %v2773, 2
      %v2775 = vmax.f32 %v2773, %v2774
      %v2776 = vrot.slane %v2775, 1
      %v2777 = vmax.f32 %v2775, %v2776
      %v2778 = vsel %vm1258, %v1036, -inf
      %v2779 = vrot.slane %v2778, 4
      %v2780 = vmax.f32 %v2778, %v2779
      %v2781 = vrot.slane %v2780, 2
      %v2782 = vmax.f32 %v2780, %v2781
      %v2783 = vrot.slane %v2782, 1
      %v2784 = vmax.f32 %v2782, %v2783
      %v2785 = vsel %vm1258, %v1037, -inf
      %v2786 = vrot.slane %v2785, 4
      %v2787 = vmax.f32 %v2785, %v2786
      %v2788 = vrot.slane %v2787, 2
      %v2789 = vmax.f32 %v2787, %v2788
      %v2790 = vrot.slane %v2789, 1
      %v2791 = vmax.f32 %v2789, %v2790
      %v2792 = vsel %vm1258, %v1038, -inf
      %v2793 = vrot.slane %v2792, 4
      %v2794 = vmax.f32 %v2792, %v2793
      %v2795 = vrot.slane %v2794, 2
      %v2796 = vmax.f32 %v2794, %v2795
      %v2797 = vrot.slane %v2796, 1
      %v2798 = vmax.f32 %v2796, %v2797
      %v2799 = vsel %vm1258, %v801, -inf
      %v2800 = vrot.slane %v2799, 4
      %v2801 = vmax.f32 %v2799, %v2800
      %v2802 = vrot.slane %v2801, 2
      %v2803 = vmax.f32 %v2801, %v2802
      %v2804 = vrot.slane %v2803, 1
      %v2805 = vmax.f32 %v2803, %v2804
      %v2806 = vsel %vm1258, %v1039, -inf
      %v2807 = vrot.slane %v2806, 4
      %v2808 = vmax.f32 %v2806, %v2807
      %v2809 = vrot.slane %v2808, 2
      %v2810 = vmax.f32 %v2808, %v2809
      %v2811 = vrot.slane %v2810, 1
      %v2812 = vmax.f32 %v2810, %v2811
      %v2813 = vsel %vm1258, %v1040, -inf
      %v2814 = vrot.slane %v2813, 4
      %v2815 = vmax.f32 %v2813, %v2814
      %v2816 = vrot.slane %v2815, 2
      %v2817 = vmax.f32 %v2815, %v2816
      %v2818 = vrot.slane %v2817, 1
      %v2819 = vmax.f32 %v2817, %v2818
      %v2820 = vsel %vm1258, %v1041, -inf
      %v2821 = vrot.slane %v2820, 4
      %v2822 = vmax.f32 %v2820, %v2821
      %v2823 = vrot.slane %v2822, 2
      %v2824 = vmax.f32 %v2822, %v2823
      %v2825 = vrot.slane %v2824, 1
      %v2826 = vmax.f32 %v2824, %v2825
      %v2827 = vsel %vm1258, %v802, -inf
      %v2828 = vrot.slane %v2827, 4
      %v2829 = vmax.f32 %v2827, %v2828
      %v2830 = vrot.slane %v2829, 2
      %v2831 = vmax.f32 %v2829, %v2830
      %v2832 = vrot.slane %v2831, 1
      %v2833 = vmax.f32 %v2831, %v2832
      %v2834 = vsel %vm1258, %v1042, -inf
      %v2835 = vrot.slane %v2834, 4
      %v2836 = vmax.f32 %v2834, %v2835
      %v2837 = vrot.slane %v2836, 2
      %v2838 = vmax.f32 %v2836, %v2837
      %v2839 = vrot.slane %v2838, 1
      %v2840 = vmax.f32 %v2838, %v2839
      %v2841 = vsel %vm1258, %v1043, -inf
      %v2842 = vrot.slane %v2841, 4
      %v2843 = vmax.f32 %v2841, %v2842
      %v2844 = vrot.slane %v2843, 2
      %v2845 = vmax.f32 %v2843, %v2844
      %v2846 = vrot.slane %v2845, 1
      %v2847 = vmax.f32 %v2845, %v2846
      %v2848 = vsel %vm1258, %v1044, -inf
      %v2849 = vrot.slane %v2848, 4
      %v2850 = vmax.f32 %v2848, %v2849
      %v2851 = vrot.slane %v2850, 2
      %v2852 = vmax.f32 %v2850, %v2851
      %v2853 = vrot.slane %v2852, 1
      %v2854 = vmax.f32 %v2852, %v2853
      %v2855 = vsel %vm1258, %v803, -inf
      %v2856 = vrot.slane %v2855, 4
      %v2857 = vmax.f32 %v2855, %v2856
      %v2858 = vrot.slane %v2857, 2
      %v2859 = vmax.f32 %v2857, %v2858
      %v2860 = vrot.slane %v2859, 1
      %v2861 = vmax.f32 %v2859, %v2860
      %v2862 = vsel %vm1258, %v1045, -inf
      %v2863 = vrot.slane %v2862, 4
      %v2864 = vmax.f32 %v2862, %v2863
      %v2865 = vrot.slane %v2864, 2
      %v2866 = vmax.f32 %v2864, %v2865
      %v2867 = vrot.slane %v2866, 1
      %v2868 = vmax.f32 %v2866, %v2867
      %v2869 = vsel %vm1258, %v1046, -inf
      %v2870 = vrot.slane %v2869, 4
      %v2871 = vmax.f32 %v2869, %v2870
      %v2872 = vrot.slane %v2871, 2
      %v2873 = vmax.f32 %v2871, %v2872
      %v2874 = vrot.slane %v2873, 1
      %v2875 = vmax.f32 %v2873, %v2874
      %v2876 = vsel %vm1258, %v1047, -inf
      %v2877 = vrot.slane %v2876, 4
      %v2878 = vmax.f32 %v2876, %v2877
      %v2879 = vrot.slane %v2878, 2
      %v2880 = vmax.f32 %v2878, %v2879
      %v2881 = vrot.slane %v2880, 1
      %v2882 = vmax.f32 %v2880, %v2881
      %v2883 = vsel %vm1258, %v804, -inf
      %v2884 = vrot.slane %v2883, 4
      %v2885 = vmax.f32 %v2883, %v2884
      %v2886 = vrot.slane %v2885, 2
      %v2887 = vmax.f32 %v2885, %v2886
      %v2888 = vrot.slane %v2887, 1
      %v2889 = vmax.f32 %v2887, %v2888
      %v2890 = vsel %vm1258, %v1048, -inf
      %v2891 = vrot.slane %v2890, 4
      %v2892 = vmax.f32 %v2890, %v2891
      %v2893 = vrot.slane %v2892, 2
      %v2894 = vmax.f32 %v2892, %v2893
      %v2895 = vrot.slane %v2894, 1
      %v2896 = vmax.f32 %v2894, %v2895
      %v2897 = vsel %vm1258, %v1049, -inf
      %v2898 = vrot.slane %v2897, 4
      %v2899 = vmax.f32 %v2897, %v2898
      %v2900 = vrot.slane %v2899, 2
      %v2901 = vmax.f32 %v2899, %v2900
      %v2902 = vrot.slane %v2901, 1
      %v2903 = vmax.f32 %v2901, %v2902
      %v2904 = vsel %vm1258, %v1050, -inf
      %v2905 = vrot.slane %v2904, 4
      %v2906 = vmax.f32 %v2904, %v2905
      %v2907 = vrot.slane %v2906, 2
      %v2908 = vmax.f32 %v2906, %v2907
      %v2909 = vrot.slane %v2908, 1
      %v2910 = vmax.f32 %v2908, %v2909
      %v2911 = vsel %vm1258, %v805, -inf
      %v2912 = vrot.slane %v2911, 4
      %v2913 = vmax.f32 %v2911, %v2912
      %v2914 = vrot.slane %v2913, 2
      %v2915 = vmax.f32 %v2913, %v2914
      %v2916 = vrot.slane %v2915, 1
      %v2917 = vmax.f32 %v2915, %v2916
      %v2918 = vsel %vm1258, %v1051, -inf
      %v2919 = vrot.slane %v2918, 4
      %v2920 = vmax.f32 %v2918, %v2919
      %v2921 = vrot.slane %v2920, 2
      %v2922 = vmax.f32 %v2920, %v2921
      %v2923 = vrot.slane %v2922, 1
      %v2924 = vmax.f32 %v2922, %v2923
      %v2925 = vsel %vm1258, %v1052, -inf
      %v2926 = vrot.slane %v2925, 4
      %v2927 = vmax.f32 %v2925, %v2926
      %v2928 = vrot.slane %v2927, 2
      %v2929 = vmax.f32 %v2927, %v2928
      %v2930 = vrot.slane %v2929, 1
      %v2931 = vmax.f32 %v2929, %v2930
      %v2932 = vsel %vm1258, %v1053, -inf
      %v2933 = vrot.slane %v2932, 4
      %v2934 = vmax.f32 %v2932, %v2933
      %v2935 = vrot.slane %v2934, 2
      %v2936 = vmax.f32 %v2934, %v2935
      %v2937 = vrot.slane %v2936, 1
      %v2938 = vmax.f32 %v2936, %v2937
      %v2939 = vsel %vm1258, %v806, -inf
      %v2940 = vrot.slane %v2939, 4
      %v2941 = vmax.f32 %v2939, %v2940
      %v2942 = vrot.slane %v2941, 2
      %v2943 = vmax.f32 %v2941, %v2942
      %v2944 = vrot.slane %v2943, 1
      %v2945 = vmax.f32 %v2943, %v2944
      %v2946 = vsel %vm1258, %v1054, -inf
      %v2947 = vrot.slane %v2946, 4
      %v2948 = vmax.f32 %v2946, %v2947
      %v2949 = vrot.slane %v2948, 2
      %v2950 = vmax.f32 %v2948, %v2949
      %v2951 = vrot.slane %v2950, 1
      %v2952 = vmax.f32 %v2950, %v2951
      %v2953 = vsel %vm1258, %v1055, -inf
      %v2954 = vrot.slane %v2953, 4
      %v2955 = vmax.f32 %v2953, %v2954
      %v2956 = vrot.slane %v2955, 2
      %v2957 = vmax.f32 %v2955, %v2956
      %v2958 = vrot.slane %v2957, 1
      %v2959 = vmax.f32 %v2957, %v2958
      %v2960 = vsel %vm1258, %v1056, -inf
      %v2961 = vrot.slane %v2960, 4
      %v2962 = vmax.f32 %v2960, %v2961
      %v2963 = vrot.slane %v2962, 2
      %v2964 = vmax.f32 %v2962, %v2963
      %v2965 = vrot.slane %v2964, 1
      %v2966 = vmax.f32 %v2964, %v2965
      %v2967 = vsel %vm1258, %v807, -inf
      %v2968 = vrot.slane %v2967, 4
      %v2969 = vmax.f32 %v2967, %v2968
      %v2970 = vrot.slane %v2969, 2
      %v2971 = vmax.f32 %v2969, %v2970
      %v2972 = vrot.slane %v2971, 1
      %v2973 = vmax.f32 %v2971, %v2972
      %v2974 = vsel %vm1258, %v1057, -inf
      %v2975 = vrot.slane %v2974, 4
      %v2976 = vmax.f32 %v2974, %v2975
      %v2977 = vrot.slane %v2976, 2
      %v2978 = vmax.f32 %v2976, %v2977
      %v2979 = vrot.slane %v2978, 1
      %v2980 = vmax.f32 %v2978, %v2979
      %v2981 = vsel %vm1258, %v1058, -inf
      %v2982 = vrot.slane %v2981, 4
      %v2983 = vmax.f32 %v2981, %v2982
      %v2984 = vrot.slane %v2983, 2
      %v2985 = vmax.f32 %v2983, %v2984
      %v2986 = vrot.slane %v2985, 1
      %v2987 = vmax.f32 %v2985, %v2986
      %v2988 = vsel %vm1258, %v1059, -inf
      %v2989 = vrot.slane %v2988, 4
      %v2990 = vmax.f32 %v2988, %v2989
      %v2991 = vrot.slane %v2990, 2
      %v2992 = vmax.f32 %v2990, %v2991
      %v2993 = vrot.slane %v2992, 1
      %v2994 = vmax.f32 %v2992, %v2993
      %v2995 = vsel %vm1258, %v808, -inf
      %v2996 = vrot.slane %v2995, 4
      %v2997 = vmax.f32 %v2995, %v2996
      %v2998 = vrot.slane %v2997, 2
      %v2999 = vmax.f32 %v2997, %v2998
      %v3000 = vrot.slane %v2999, 1
      %v3001 = vmax.f32 %v2999, %v3000
      %v3002 = vsel %vm1258, %v1060, -inf
      %v3003 = vrot.slane %v3002, 4
      %v3004 = vmax.f32 %v3002, %v3003
      %v3005 = vrot.slane %v3004, 2
      %v3006 = vmax.f32 %v3004, %v3005
      %v3007 = vrot.slane %v3006, 1
      %v3008 = vmax.f32 %v3006, %v3007
      %v3009 = vsel %vm1258, %v1061, -inf
      %v3010 = vrot.slane %v3009, 4
      %v3011 = vmax.f32 %v3009, %v3010
      %v3012 = vrot.slane %v3011, 2
      %v3013 = vmax.f32 %v3011, %v3012
      %v3014 = vrot.slane %v3013, 1
      %v3015 = vmax.f32 %v3013, %v3014
      %v3016 = vsel %vm1258, %v1062, -inf
      %v3017 = vrot.slane %v3016, 4
      %v3018 = vmax.f32 %v3016, %v3017
      %v3019 = vrot.slane %v3018, 2
      %v3020 = vmax.f32 %v3018, %v3019
      %v3021 = vrot.slane %v3020, 1
      %v3022 = vmax.f32 %v3020, %v3021
      %v3023 = vsel %vm1258, %v809, -inf
      %v3024 = vrot.slane %v3023, 4
      %v3025 = vmax.f32 %v3023, %v3024
      %v3026 = vrot.slane %v3025, 2
      %v3027 = vmax.f32 %v3025, %v3026
      %v3028 = vrot.slane %v3027, 1
      %v3029 = vmax.f32 %v3027, %v3028
      %v3030 = vsel %vm1258, %v1063, -inf
      %v3031 = vrot.slane %v3030, 4
      %v3032 = vmax.f32 %v3030, %v3031
      %v3033 = vrot.slane %v3032, 2
      %v3034 = vmax.f32 %v3032, %v3033
      %v3035 = vrot.slane %v3034, 1
      %v3036 = vmax.f32 %v3034, %v3035
      %v3037 = vsel %vm1258, %v1064, -inf
      %v3038 = vrot.slane %v3037, 4
      %v3039 = vmax.f32 %v3037, %v3038
      %v3040 = vrot.slane %v3039, 2
      %v3041 = vmax.f32 %v3039, %v3040
      %v3042 = vrot.slane %v3041, 1
      %v3043 = vmax.f32 %v3041, %v3042
      %v3044 = vsel %vm1258, %v1065, -inf
      %v3045 = vrot.slane %v3044, 4
      %v3046 = vmax.f32 %v3044, %v3045
      %v3047 = vrot.slane %v3046, 2
      %v3048 = vmax.f32 %v3046, %v3047
      %v3049 = vrot.slane %v3048, 1
      %v3050 = vmax.f32 %v3048, %v3049
      %vm3051 = vcmask 261120
      %v3052 = vsel %vm3051, %v1265, -inf
      %v3053 = vsel %vm3051, %v1321, -inf
      %v3054 = vmax.f32 %v3052, %v3053
      %v3055 = vsel %vm3051, %v1272, -inf
      %v3056 = vsel %vm3051, %v1328, -inf
      %v3057 = vmax.f32 %v3055, %v3056
      %v3058 = vsel %vm3051, %v1279, -inf
      %v3059 = vsel %vm3051, %v1335, -inf
      %v3060 = vmax.f32 %v3058, %v3059
      %v3061 = vsel %vm3051, %v1286, -inf
      %v3062 = vsel %vm3051, %v1342, -inf
      %v3063 = vmax.f32 %v3061, %v3062
      %v3064 = vsel %vm3051, %v1293, -inf
      %v3065 = vsel %vm3051, %v1349, -inf
      %v3066 = vmax.f32 %v3064, %v3065
      %v3067 = vsel %vm3051, %v1300, -inf
      %v3068 = vsel %vm3051, %v1356, -inf
      %v3069 = vmax.f32 %v3067, %v3068
      %v3070 = vsel %vm3051, %v1307, -inf
      %v3071 = vsel %vm3051, %v1363, -inf
      %v3072 = vmax.f32 %v3070, %v3071
      %v3073 = vsel %vm3051, %v1314, -inf
      %v3074 = vsel %vm3051, %v1370, -inf
      %v3075 = vmax.f32 %v3073, %v3074
      %v3076 = vsel %vm3051, %v1377, -inf
      %v3077 = vsel %vm3051, %v1433, -inf
      %v3078 = vmax.f32 %v3076, %v3077
      %v3079 = vsel %vm3051, %v1384, -inf
      %v3080 = vsel %vm3051, %v1440, -inf
      %v3081 = vmax.f32 %v3079, %v3080
      %v3082 = vsel %vm3051, %v1391, -inf
      %v3083 = vsel %vm3051, %v1447, -inf
      %v3084 = vmax.f32 %v3082, %v3083
      %v3085 = vsel %vm3051, %v1398, -inf
      %v3086 = vsel %vm3051, %v1454, -inf
      %v3087 = vmax.f32 %v3085, %v3086
      %v3088 = vsel %vm3051, %v1405, -inf
      %v3089 = vsel %vm3051, %v1461, -inf
      %v3090 = vmax.f32 %v3088, %v3089
      %v3091 = vsel %vm3051, %v1412, -inf
      %v3092 = vsel %vm3051, %v1468, -inf
      %v3093 = vmax.f32 %v3091, %v3092
      %v3094 = vsel %vm3051, %v1419, -inf
      %v3095 = vsel %vm3051, %v1475, -inf
      %v3096 = vmax.f32 %v3094, %v3095
      %v3097 = vsel %vm3051, %v1426, -inf
      %v3098 = vsel %vm3051, %v1482, -inf
      %v3099 = vmax.f32 %v3097, %v3098
      %v3100 = vsel %vm3051, %v1489, -inf
      %v3101 = vsel %vm3051, %v1545, -inf
      %v3102 = vmax.f32 %v3100, %v3101
      %v3103 = vsel %vm3051, %v1496, -inf
      %v3104 = vsel %vm3051, %v1552, -inf
      %v3105 = vmax.f32 %v3103, %v3104
      %v3106 = vsel %vm3051, %v1503, -inf
      %v3107 = vsel %vm3051, %v1559, -inf
      %v3108 = vmax.f32 %v3106, %v3107
      %v3109 = vsel %vm3051, %v1510, -inf
      %v3110 = vsel %vm3051, %v1566, -inf
      %v3111 = vmax.f32 %v3109, %v3110
      %v3112 = vsel %vm3051, %v1517, -inf
      %v3113 = vsel %vm3051, %v1573, -inf
      %v3114 = vmax.f32 %v3112, %v3113
      %v3115 = vsel %vm3051, %v1524, -inf
      %v3116 = vsel %vm3051, %v1580, -inf
      %v3117 = vmax.f32 %v3115, %v3116
      %v3118 = vsel %vm3051, %v1531, -inf
      %v3119 = vsel %vm3051, %v1587, -inf
      %v3120 = vmax.f32 %v3118, %v3119
      %v3121 = vsel %vm3051, %v1538, -inf
      %v3122 = vsel %vm3051, %v1594, -inf
      %v3123 = vmax.f32 %v3121, %v3122
      %v3124 = vsel %vm3051, %v1601, -inf
      %v3125 = vsel %vm3051, %v1657, -inf
      %v3126 = vmax.f32 %v3124, %v3125
      %v3127 = vsel %vm3051, %v1608, -inf
      %v3128 = vsel %vm3051, %v1664, -inf
      %v3129 = vmax.f32 %v3127, %v3128
      %v3130 = vsel %vm3051, %v1615, -inf
      %v3131 = vsel %vm3051, %v1671, -inf
      %v3132 = vmax.f32 %v3130, %v3131
      %v3133 = vsel %vm3051, %v1622, -inf
      %v3134 = vsel %vm3051, %v1678, -inf
      %v3135 = vmax.f32 %v3133, %v3134
      %v3136 = vsel %vm3051, %v1629, -inf
      %v3137 = vsel %vm3051, %v1685, -inf
      %v3138 = vmax.f32 %v3136, %v3137
      %v3139 = vsel %vm3051, %v1636, -inf
      %v3140 = vsel %vm3051, %v1692, -inf
      %v3141 = vmax.f32 %v3139, %v3140
      %v3142 = vsel %vm3051, %v1643, -inf
      %v3143 = vsel %vm3051, %v1699, -inf
      %v3144 = vmax.f32 %v3142, %v3143
      %v3145 = vsel %vm3051, %v1650, -inf
      %v3146 = vsel %vm3051, %v1706, -inf
      %v3147 = vmax.f32 %v3145, %v3146
      %v3148 = vsel %vm3051, %v1713, -inf
      %v3149 = vsel %vm3051, %v1769, -inf
      %v3150 = vmax.f32 %v3148, %v3149
      %v3151 = vsel %vm3051, %v1720, -inf
      %v3152 = vsel %vm3051, %v1776, -inf
      %v3153 = vmax.f32 %v3151, %v3152
      %v3154 = vsel %vm3051, %v1727, -inf
      %v3155 = vsel %vm3051, %v1783, -inf
      %v3156 = vmax.f32 %v3154, %v3155
      %v3157 = vsel %vm3051, %v1734, -inf
      %v3158 = vsel %vm3051, %v1790, -inf
      %v3159 = vmax.f32 %v3157, %v3158
      %v3160 = vsel %vm3051, %v1741, -inf
      %v3161 = vsel %vm3051, %v1797, -inf
      %v3162 = vmax.f32 %v3160, %v3161
      %v3163 = vsel %vm3051, %v1748, -inf
      %v3164 = vsel %vm3051, %v1804, -inf
      %v3165 = vmax.f32 %v3163, %v3164
      %v3166 = vsel %vm3051, %v1755, -inf
      %v3167 = vsel %vm3051, %v1811, -inf
      %v3168 = vmax.f32 %v3166, %v3167
      %v3169 = vsel %vm3051, %v1762, -inf
      %v3170 = vsel %vm3051, %v1818, -inf
      %v3171 = vmax.f32 %v3169, %v3170
      %v3172 = vsel %vm3051, %v1825, -inf
      %v3173 = vsel %vm3051, %v1881, -inf
      %v3174 = vmax.f32 %v3172, %v3173
      %v3175 = vsel %vm3051, %v1832, -inf
      %v3176 = vsel %vm3051, %v1888, -inf
      %v3177 = vmax.f32 %v3175, %v3176
      %v3178 = vsel %vm3051, %v1839, -inf
      %v3179 = vsel %vm3051, %v1895, -inf
      %v3180 = vmax.f32 %v3178, %v3179
      %v3181 = vsel %vm3051, %v1846, -inf
      %v3182 = vsel %vm3051, %v1902, -inf
      %v3183 = vmax.f32 %v3181, %v3182
      %v3184 = vsel %vm3051, %v1853, -inf
      %v3185 = vsel %vm3051, %v1909, -inf
      %v3186 = vmax.f32 %v3184, %v3185
      %v3187 = vsel %vm3051, %v1860, -inf
      %v3188 = vsel %vm3051, %v1916, -inf
      %v3189 = vmax.f32 %v3187, %v3188
      %v3190 = vsel %vm3051, %v1867, -inf
      %v3191 = vsel %vm3051, %v1923, -inf
      %v3192 = vmax.f32 %v3190, %v3191
      %v3193 = vsel %vm3051, %v1874, -inf
      %v3194 = vsel %vm3051, %v1930, -inf
      %v3195 = vmax.f32 %v3193, %v3194
      %v3196 = vsel %vm3051, %v1937, -inf
      %v3197 = vsel %vm3051, %v1993, -inf
      %v3198 = vmax.f32 %v3196, %v3197
      %v3199 = vsel %vm3051, %v1944, -inf
      %v3200 = vsel %vm3051, %v2000, -inf
      %v3201 = vmax.f32 %v3199, %v3200
      %v3202 = vsel %vm3051, %v1951, -inf
      %v3203 = vsel %vm3051, %v2007, -inf
      %v3204 = vmax.f32 %v3202, %v3203
      %v3205 = vsel %vm3051, %v1958, -inf
      %v3206 = vsel %vm3051, %v2014, -inf
      %v3207 = vmax.f32 %v3205, %v3206
      %v3208 = vsel %vm3051, %v1965, -inf
      %v3209 = vsel %vm3051, %v2021, -inf
      %v3210 = vmax.f32 %v3208, %v3209
      %v3211 = vsel %vm3051, %v1972, -inf
      %v3212 = vsel %vm3051, %v2028, -inf
      %v3213 = vmax.f32 %v3211, %v3212
      %v3214 = vsel %vm3051, %v1979, -inf
      %v3215 = vsel %vm3051, %v2035, -inf
      %v3216 = vmax.f32 %v3214, %v3215
      %v3217 = vsel %vm3051, %v1986, -inf
      %v3218 = vsel %vm3051, %v2042, -inf
      %v3219 = vmax.f32 %v3217, %v3218
      %v3220 = vsel %vm3051, %v2049, -inf
      %v3221 = vsel %vm3051, %v2105, -inf
      %v3222 = vmax.f32 %v3220, %v3221
      %v3223 = vsel %vm3051, %v2056, -inf
      %v3224 = vsel %vm3051, %v2112, -inf
      %v3225 = vmax.f32 %v3223, %v3224
      %v3226 = vsel %vm3051, %v2063, -inf
      %v3227 = vsel %vm3051, %v2119, -inf
      %v3228 = vmax.f32 %v3226, %v3227
      %v3229 = vsel %vm3051, %v2070, -inf
      %v3230 = vsel %vm3051, %v2126, -inf
      %v3231 = vmax.f32 %v3229, %v3230
      %v3232 = vsel %vm3051, %v2077, -inf
      %v3233 = vsel %vm3051, %v2133, -inf
      %v3234 = vmax.f32 %v3232, %v3233
      %v3235 = vsel %vm3051, %v2084, -inf
      %v3236 = vsel %vm3051, %v2140, -inf
      %v3237 = vmax.f32 %v3235, %v3236
      %v3238 = vsel %vm3051, %v2091, -inf
      %v3239 = vsel %vm3051, %v2147, -inf
      %v3240 = vmax.f32 %v3238, %v3239
      %v3241 = vsel %vm3051, %v2098, -inf
      %v3242 = vsel %vm3051, %v2154, -inf
      %v3243 = vmax.f32 %v3241, %v3242
      %v3244 = vsel %vm3051, %v2161, -inf
      %v3245 = vsel %vm3051, %v2217, -inf
      %v3246 = vmax.f32 %v3244, %v3245
      %v3247 = vsel %vm3051, %v2168, -inf
      %v3248 = vsel %vm3051, %v2224, -inf
      %v3249 = vmax.f32 %v3247, %v3248
      %v3250 = vsel %vm3051, %v2175, -inf
      %v3251 = vsel %vm3051, %v2231, -inf
      %v3252 = vmax.f32 %v3250, %v3251
      %v3253 = vsel %vm3051, %v2182, -inf
      %v3254 = vsel %vm3051, %v2238, -inf
      %v3255 = vmax.f32 %v3253, %v3254
      %v3256 = vsel %vm3051, %v2189, -inf
      %v3257 = vsel %vm3051, %v2245, -inf
      %v3258 = vmax.f32 %v3256, %v3257
      %v3259 = vsel %vm3051, %v2196, -inf
      %v3260 = vsel %vm3051, %v2252, -inf
      %v3261 = vmax.f32 %v3259, %v3260
      %v3262 = vsel %vm3051, %v2203, -inf
      %v3263 = vsel %vm3051, %v2259, -inf
      %v3264 = vmax.f32 %v3262, %v3263
      %v3265 = vsel %vm3051, %v2210, -inf
      %v3266 = vsel %vm3051, %v2266, -inf
      %v3267 = vmax.f32 %v3265, %v3266
      %v3268 = vsel %vm3051, %v2273, -inf
      %v3269 = vsel %vm3051, %v2329, -inf
      %v3270 = vmax.f32 %v3268, %v3269
      %v3271 = vsel %vm3051, %v2280, -inf
      %v3272 = vsel %vm3051, %v2336, -inf
      %v3273 = vmax.f32 %v3271, %v3272
      %v3274 = vsel %vm3051, %v2287, -inf
      %v3275 = vsel %vm3051, %v2343, -inf
      %v3276 = vmax.f32 %v3274, %v3275
      %v3277 = vsel %vm3051, %v2294, -inf
      %v3278 = vsel %vm3051, %v2350, -inf
      %v3279 = vmax.f32 %v3277, %v3278
      %v3280 = vsel %vm3051, %v2301, -inf
      %v3281 = vsel %vm3051, %v2357, -inf
      %v3282 = vmax.f32 %v3280, %v3281
      %v3283 = vsel %vm3051, %v2308, -inf
      %v3284 = vsel %vm3051, %v2364, -inf
      %v3285 = vmax.f32 %v3283, %v3284
      %v3286 = vsel %vm3051, %v2315, -inf
      %v3287 = vsel %vm3051, %v2371, -inf
      %v3288 = vmax.f32 %v3286, %v3287
      %v3289 = vsel %vm3051, %v2322, -inf
      %v3290 = vsel %vm3051, %v2378, -inf
      %v3291 = vmax.f32 %v3289, %v3290
      %v3292 = vsel %vm3051, %v2385, -inf
      %v3293 = vsel %vm3051, %v2441, -inf
      %v3294 = vmax.f32 %v3292, %v3293
      %v3295 = vsel %vm3051, %v2392, -inf
      %v3296 = vsel %vm3051, %v2448, -inf
      %v3297 = vmax.f32 %v3295, %v3296
      %v3298 = vsel %vm3051, %v2399, -inf
      %v3299 = vsel %vm3051, %v2455, -inf
      %v3300 = vmax.f32 %v3298, %v3299
      %v3301 = vsel %vm3051, %v2406, -inf
      %v3302 = vsel %vm3051, %v2462, -inf
      %v3303 = vmax.f32 %v3301, %v3302
      %v3304 = vsel %vm3051, %v2413, -inf
      %v3305 = vsel %vm3051, %v2469, -inf
      %v3306 = vmax.f32 %v3304, %v3305
      %v3307 = vsel %vm3051, %v2420, -inf
      %v3308 = vsel %vm3051, %v2476, -inf
      %v3309 = vmax.f32 %v3307, %v3308
      %v3310 = vsel %vm3051, %v2427, -inf
      %v3311 = vsel %vm3051, %v2483, -inf
      %v3312 = vmax.f32 %v3310, %v3311
      %v3313 = vsel %vm3051, %v2434, -inf
      %v3314 = vsel %vm3051, %v2490, -inf
      %v3315 = vmax.f32 %v3313, %v3314
      %v3316 = vsel %vm3051, %v2497, -inf
      %v3317 = vsel %vm3051, %v2553, -inf
      %v3318 = vmax.f32 %v3316, %v3317
      %v3319 = vsel %vm3051, %v2504, -inf
      %v3320 = vsel %vm3051, %v2560, -inf
      %v3321 = vmax.f32 %v3319, %v3320
      %v3322 = vsel %vm3051, %v2511, -inf
      %v3323 = vsel %vm3051, %v2567, -inf
      %v3324 = vmax.f32 %v3322, %v3323
      %v3325 = vsel %vm3051, %v2518, -inf
      %v3326 = vsel %vm3051, %v2574, -inf
      %v3327 = vmax.f32 %v3325, %v3326
      %v3328 = vsel %vm3051, %v2525, -inf
      %v3329 = vsel %vm3051, %v2581, -inf
      %v3330 = vmax.f32 %v3328, %v3329
      %v3331 = vsel %vm3051, %v2532, -inf
      %v3332 = vsel %vm3051, %v2588, -inf
      %v3333 = vmax.f32 %v3331, %v3332
      %v3334 = vsel %vm3051, %v2539, -inf
      %v3335 = vsel %vm3051, %v2595, -inf
      %v3336 = vmax.f32 %v3334, %v3335
      %v3337 = vsel %vm3051, %v2546, -inf
      %v3338 = vsel %vm3051, %v2602, -inf
      %v3339 = vmax.f32 %v3337, %v3338
      %v3340 = vsel %vm3051, %v2609, -inf
      %v3341 = vsel %vm3051, %v2665, -inf
      %v3342 = vmax.f32 %v3340, %v3341
      %v3343 = vsel %vm3051, %v2616, -inf
      %v3344 = vsel %vm3051, %v2672, -inf
      %v3345 = vmax.f32 %v3343, %v3344
      %v3346 = vsel %vm3051, %v2623, -inf
      %v3347 = vsel %vm3051, %v2679, -inf
      %v3348 = vmax.f32 %v3346, %v3347
      %v3349 = vsel %vm3051, %v2630, -inf
      %v3350 = vsel %vm3051, %v2686, -inf
      %v3351 = vmax.f32 %v3349, %v3350
      %v3352 = vsel %vm3051, %v2637, -inf
      %v3353 = vsel %vm3051, %v2693, -inf
      %v3354 = vmax.f32 %v3352, %v3353
      %v3355 = vsel %vm3051, %v2644, -inf
      %v3356 = vsel %vm3051, %v2700, -inf
      %v3357 = vmax.f32 %v3355, %v3356
      %v3358 = vsel %vm3051, %v2651, -inf
      %v3359 = vsel %vm3051, %v2707, -inf
      %v3360 = vmax.f32 %v3358, %v3359
      %v3361 = vsel %vm3051, %v2658, -inf
      %v3362 = vsel %vm3051, %v2714, -inf
      %v3363 = vmax.f32 %v3361, %v3362
      %v3364 = vsel %vm3051, %v2721, -inf
      %v3365 = vsel %vm3051, %v2777, -inf
      %v3366 = vmax.f32 %v3364, %v3365
      %v3367 = vsel %vm3051, %v2728, -inf
      %v3368 = vsel %vm3051, %v2784, -inf
      %v3369 = vmax.f32 %v3367, %v3368
      %v3370 = vsel %vm3051, %v2735, -inf
      %v3371 = vsel %vm3051, %v2791, -inf
      %v3372 = vmax.f32 %v3370, %v3371
      %v3373 = vsel %vm3051, %v2742, -inf
      %v3374 = vsel %vm3051, %v2798, -inf
      %v3375 = vmax.f32 %v3373, %v3374
      %v3376 = vsel %vm3051, %v2749, -inf
      %v3377 = vsel %vm3051, %v2805, -inf
      %v3378 = vmax.f32 %v3376, %v3377
      %v3379 = vsel %vm3051, %v2756, -inf
      %v3380 = vsel %vm3051, %v2812, -inf
      %v3381 = vmax.f32 %v3379, %v3380
      %v3382 = vsel %vm3051, %v2763, -inf
      %v3383 = vsel %vm3051, %v2819, -inf
      %v3384 = vmax.f32 %v3382, %v3383
      %v3385 = vsel %vm3051, %v2770, -inf
      %v3386 = vsel %vm3051, %v2826, -inf
      %v3387 = vmax.f32 %v3385, %v3386
      %v3388 = vsel %vm3051, %v2833, -inf
      %v3389 = vsel %vm3051, %v2889, -inf
      %v3390 = vmax.f32 %v3388, %v3389
      %v3391 = vsel %vm3051, %v2840, -inf
      %v3392 = vsel %vm3051, %v2896, -inf
      %v3393 = vmax.f32 %v3391, %v3392
      %v3394 = vsel %vm3051, %v2847, -inf
      %v3395 = vsel %vm3051, %v2903, -inf
      %v3396 = vmax.f32 %v3394, %v3395
      %v3397 = vsel %vm3051, %v2854, -inf
      %v3398 = vsel %vm3051, %v2910, -inf
      %v3399 = vmax.f32 %v3397, %v3398
      %v3400 = vsel %vm3051, %v2861, -inf
      %v3401 = vsel %vm3051, %v2917, -inf
      %v3402 = vmax.f32 %v3400, %v3401
      %v3403 = vsel %vm3051, %v2868, -inf
      %v3404 = vsel %vm3051, %v2924, -inf
      %v3405 = vmax.f32 %v3403, %v3404
      %v3406 = vsel %vm3051, %v2875, -inf
      %v3407 = vsel %vm3051, %v2931, -inf
      %v3408 = vmax.f32 %v3406, %v3407
      %v3409 = vsel %vm3051, %v2882, -inf
      %v3410 = vsel %vm3051, %v2938, -inf
      %v3411 = vmax.f32 %v3409, %v3410
      %v3412 = vsel %vm3051, %v2945, -inf
      %v3413 = vsel %vm3051, %v3001, -inf
      %v3414 = vmax.f32 %v3412, %v3413
      %v3415 = vsel %vm3051, %v2952, -inf
      %v3416 = vsel %vm3051, %v3008, -inf
      %v3417 = vmax.f32 %v3415, %v3416
      %v3418 = vsel %vm3051, %v2959, -inf
      %v3419 = vsel %vm3051, %v3015, -inf
      %v3420 = vmax.f32 %v3418, %v3419
      %v3421 = vsel %vm3051, %v2966, -inf
      %v3422 = vsel %vm3051, %v3022, -inf
      %v3423 = vmax.f32 %v3421, %v3422
      %v3424 = vsel %vm3051, %v2973, -inf
      %v3425 = vsel %vm3051, %v3029, -inf
      %v3426 = vmax.f32 %v3424, %v3425
      %v3427 = vsel %vm3051, %v2980, -inf
      %v3428 = vsel %vm3051, %v3036, -inf
      %v3429 = vmax.f32 %v3427, %v3428
      %v3430 = vsel %vm3051, %v2987, -inf
      %v3431 = vsel %vm3051, %v3043, -inf
      %v3432 = vmax.f32 %v3430, %v3431
      %v3433 = vsel %vm3051, %v2994, -inf
      %v3434 = vsel %vm3051, %v3050, -inf
      %v3435 = vmax.f32 %v3433, %v3434
      %3436 = vst.msk [vmem:[#allocation2] sm:$0xff] %vm3051, 0.0
      %3437 = vst.msk [vmem:[#allocation2 + $0x8] sm:$0x3] %vm1258, 0.0
      %3438 = vst.msk [vmem:[#allocation2 + $0xa0] sm:$0xff] %vm3051, 0.0
      %3439 = vst.msk [vmem:[#allocation2 + $0xa8] sm:$0x3] %vm1258, 0.0
      %s3440 = scalar_lea.vmem [#allocation2], 144
      %3441 = vst.msk [vmem:[%s3440] sm:$0xff] %vm3051, 0.0
      %3442 = vst.msk [vmem:[%s3440 + $0x8] sm:$0x3] %vm1258, 0.0
      %3443 = vst.msk [vmem:[%s3440 + $0xa0] sm:$0xff] %vm3051, 0.0
      %3444 = vst.msk [vmem:[%s3440 + $0xa8] sm:$0x3] %vm1258, 0.0
      %vm3445 = vcmask 253952
      %3446 = vst.msk [vmem:[#allocation2] sm:$0x1] %vm3445, 0.0
      %3447 = vst.msk [vmem:[#allocation2 + $0x10] sm:$0x1] %vm3445, 0.0
      %3448 = vst.msk [vmem:[#allocation2 + $0x20] sm:$0x1] %vm3445, 0.0
      %3449 = vst.msk [vmem:[#allocation2 + $0x30] sm:$0x1] %vm3445, 0.0
      %3450 = vst.msk [vmem:[#allocation2 + $0x40] sm:$0x1] %vm3445, 0.0
      %3451 = vst.msk [vmem:[#allocation2 + $0x50] sm:$0x1] %vm3445, 0.0
      %3452 = vst.msk [vmem:[#allocation2 + $0x60] sm:$0x1] %vm3445, 0.0
      %3453 = vst.msk [vmem:[#allocation2 + $0x70] sm:$0x1] %vm3445, 0.0
      %3454 = vst.msk [vmem:[#allocation2 + $0x80] sm:$0x1] %vm3445, 0.0
      %3455 = vst.msk [vmem:[#allocation2 + $0x90] sm:$0x1] %vm3445, 0.0
      %3456 = vst.msk [vmem:[#allocation2 + $0xa0] sm:$0x1] %vm3445, 0.0
      %3457 = vst.msk [vmem:[#allocation2 + $0xb0] sm:$0x1] %vm3445, 0.0
      %3458 = vst.msk [vmem:[#allocation2 + $0xc0] sm:$0x1] %vm3445, 0.0
      %3459 = vst.msk [vmem:[#allocation2 + $0xd0] sm:$0x1] %vm3445, 0.0
      %3460 = vst.msk [vmem:[#allocation2 + $0xe0] sm:$0x1] %vm3445, 0.0
      %3461 = vst.msk [vmem:[#allocation2 + $0xf0] sm:$0x1] %vm3445, 0.0
      %3462 = vst.msk [vmem:[#allocation2 + $0x100] sm:$0x1] %vm3445, 0.0
      %3463 = vst.msk [vmem:[#allocation2 + $0x110] sm:$0x1] %vm3445, 0.0
      %3464 = vst.msk [vmem:[#allocation2 + $0x120] sm:$0x1] %vm3445, 0.0
      %3465 = vst.msk [vmem:[#allocation2 + $0x130] sm:$0x1] %vm3445, 0.0
      %3466 = vst.msk [vmem:[#allocation2 + $0x9] sm:$0x1] %vm3445, 0.0
      %3467 = vst.msk [vmem:[#allocation2 + $0x19] sm:$0x1] %vm3445, 0.0
      %3468 = vst.msk [vmem:[#allocation2 + $0x29] sm:$0x1] %vm3445, 0.0
      %3469 = vst.msk [vmem:[#allocation2 + $0x39] sm:$0x1] %vm3445, 0.0
      %3470 = vst.msk [vmem:[#allocation2 + $0x49] sm:$0x1] %vm3445, 0.0
      %3471 = vst.msk [vmem:[#allocation2 + $0x59] sm:$0x1] %vm3445, 0.0
      %3472 = vst.msk [vmem:[#allocation2 + $0x69] sm:$0x1] %vm3445, 0.0
      %3473 = vst.msk [vmem:[#allocation2 + $0x79] sm:$0x1] %vm3445, 0.0
      %3474 = vst.msk [vmem:[#allocation2 + $0x89] sm:$0x1] %vm3445, 0.0
      %3475 = vst.msk [vmem:[#allocation2 + $0x99] sm:$0x1] %vm3445, 0.0
      %3476 = vst.msk [vmem:[#allocation2 + $0xa9] sm:$0x1] %vm3445, 0.0
      %3477 = vst.msk [vmem:[#allocation2 + $0xb9] sm:$0x1] %vm3445, 0.0
      %3478 = vst.msk [vmem:[#allocation2 + $0xc9] sm:$0x1] %vm3445, 0.0
      %3479 = vst.msk [vmem:[#allocation2 + $0xd9] sm:$0x1] %vm3445, 0.0
      %3480 = vst.msk [vmem:[#allocation2 + $0xe9] sm:$0x1] %vm3445, 0.0
      %3481 = vst.msk [vmem:[#allocation2 + $0xf9] sm:$0x1] %vm3445, 0.0
      %3482 = vst.msk [vmem:[#allocation2 + $0x109] sm:$0x1] %vm3445, 0.0
      %3483 = vst.msk [vmem:[#allocation2 + $0x119] sm:$0x1] %vm3445, 0.0
      %3484 = vst.msk [vmem:[#allocation2 + $0x129] sm:$0x1] %vm3445, 0.0
      %3485 = vst.msk [vmem:[#allocation2 + $0x139] sm:$0x1] %vm3445, 0.0
      %vm3614 = vcmask 1041409
      %v3615 = vsel %vm3614, %v3057, %v3054
      %vm3616 = vcmask 1042434
      %v3617 = vsel %vm3616, %v3060, %v3615
      %vm3618 = vcmask 1043459
      %v3619 = vsel %vm3618, %v3063, %v3617
      %vm3620 = vcmask 1044484
      %v3621 = vsel %vm3620, %v3066, %v3619
      %vm3622 = vcmask 1045509
      %v3623 = vsel %vm3622, %v3069, %v3621
      %vm3624 = vcmask 1046534
      %v3625 = vsel %vm3624, %v3072, %v3623
      %vm3626 = vcmask 1047559
      %v3627 = vsel %vm3626, %v3075, %v3625
      %v3628 = vsel %vm3614, %v3081, %v3078
      %v3629 = vsel %vm3616, %v3084, %v3628
      %v3630 = vsel %vm3618, %v3087, %v3629
      %v3631 = vsel %vm3620, %v3090, %v3630
      %v3632 = vsel %vm3622, %v3093, %v3631
      %v3633 = vsel %vm3624, %v3096, %v3632
      %v3634 = vsel %vm3626, %v3099, %v3633
      %v3635 = vsel %vm3614, %v3105, %v3102
      %v3636 = vsel %vm3616, %v3108, %v3635
      %v3637 = vsel %vm3618, %v3111, %v3636
      %v3638 = vsel %vm3620, %v3114, %v3637
      %v3639 = vsel %vm3622, %v3117, %v3638
      %v3640 = vsel %vm3624, %v3120, %v3639
      %v3641 = vsel %vm3626, %v3123, %v3640
      %v3642 = vsel %vm3614, %v3129, %v3126
      %v3643 = vsel %vm3616, %v3132, %v3642
      %v3644 = vsel %vm3618, %v3135, %v3643
      %v3645 = vsel %vm3620, %v3138, %v3644
      %v3646 = vsel %vm3622, %v3141, %v3645
      %v3647 = vsel %vm3624, %v3144, %v3646
      %v3648 = vsel %vm3626, %v3147, %v3647
      %v3649 = vsel %vm3614, %v3153, %v3150
      %v3650 = vsel %vm3616, %v3156, %v3649
      %v3651 = vsel %vm3618, %v3159, %v3650
      %v3652 = vsel %vm3620, %v3162, %v3651
      %v3653 = vsel %vm3622, %v3165, %v3652
      %v3654 = vsel %vm3624, %v3168, %v3653
      %v3655 = vsel %vm3626, %v3171, %v3654
      %v3656 = vsel %vm3614, %v3177, %v3174
      %v3657 = vsel %vm3616, %v3180, %v3656
      %v3658 = vsel %vm3618, %v3183, %v3657
      %v3659 = vsel %vm3620, %v3186, %v3658
      %v3660 = vsel %vm3622, %v3189, %v3659
      %v3661 = vsel %vm3624, %v3192, %v3660
      %v3662 = vsel %vm3626, %v3195, %v3661
      %v3663 = vsel %vm3614, %v3201, %v3198
      %v3664 = vsel %vm3616, %v3204, %v3663
      %v3665 = vsel %vm3618, %v3207, %v3664
      %v3666 = vsel %vm3620, %v3210, %v3665
      %v3667 = vsel %vm3622, %v3213, %v3666
      %v3668 = vsel %vm3624, %v3216, %v3667
      %v3669 = vsel %vm3626, %v3219, %v3668
      %v3670 = vsel %vm3614, %v3225, %v3222
      %v3671 = vsel %vm3616, %v3228, %v3670
      %v3672 = vsel %vm3618, %v3231, %v3671
      %v3673 = vsel %vm3620, %v3234, %v3672
      %v3674 = vsel %vm3622, %v3237, %v3673
      %v3675 = vsel %vm3624, %v3240, %v3674
      %v3676 = vsel %vm3626, %v3243, %v3675
      %v3677 = vsel %vm3614, %v3249, %v3246
      %v3678 = vsel %vm3616, %v3252, %v3677
      %v3679 = vsel %vm3618, %v3255, %v3678
      %v3680 = vsel %vm3620, %v3258, %v3679
      %v3681 = vsel %vm3622, %v3261, %v3680
      %v3682 = vsel %vm3624, %v3264, %v3681
      %v3683 = vsel %vm3626, %v3267, %v3682
      %v3684 = vsel %vm3614, %v3273, %v3270
      %v3685 = vsel %vm3616, %v3276, %v3684
      %v3686 = vsel %vm3618, %v3279, %v3685
      %v3687 = vsel %vm3620, %v3282, %v3686
      %v3688 = vsel %vm3622, %v3285, %v3687
      %v3689 = vsel %vm3624, %v3288, %v3688
      %v3690 = vsel %vm3626, %v3291, %v3689
      %v3691 = vsel %vm3614, %v3297, %v3294
      %v3692 = vsel %vm3616, %v3300, %v3691
      %v3693 = vsel %vm3618, %v3303, %v3692
      %v3694 = vsel %vm3620, %v3306, %v3693
      %v3695 = vsel %vm3622, %v3309, %v3694
      %v3696 = vsel %vm3624, %v3312, %v3695
      %v3697 = vsel %vm3626, %v3315, %v3696
      %v3698 = vsel %vm3614, %v3321, %v3318
      %v3699 = vsel %vm3616, %v3324, %v3698
      %v3700 = vsel %vm3618, %v3327, %v3699
      %v3701 = vsel %vm3620, %v3330, %v3700
      %v3702 = vsel %vm3622, %v3333, %v3701
      %v3703 = vsel %vm3624, %v3336, %v3702
      %v3704 = vsel %vm3626, %v3339, %v3703
      %v3705 = vsel %vm3614, %v3345, %v3342
      %v3706 = vsel %vm3616, %v3348, %v3705
      %v3707 = vsel %vm3618, %v3351, %v3706
      %v3708 = vsel %vm3620, %v3354, %v3707
      %v3709 = vsel %vm3622, %v3357, %v3708
      %v3710 = vsel %vm3624, %v3360, %v3709
      %v3711 = vsel %vm3626, %v3363, %v3710
      %v3712 = vsel %vm3614, %v3369, %v3366
      %v3713 = vsel %vm3616, %v3372, %v3712
      %v3714 = vsel %vm3618, %v3375, %v3713
      %v3715 = vsel %vm3620, %v3378, %v3714
      %v3716 = vsel %vm3622, %v3381, %v3715
      %v3717 = vsel %vm3624, %v3384, %v3716
      %v3718 = vsel %vm3626, %v3387, %v3717
      %v3719 = vsel %vm3614, %v3393, %v3390
      %v3720 = vsel %vm3616, %v3396, %v3719
      %v3721 = vsel %vm3618, %v3399, %v3720
      %v3722 = vsel %vm3620, %v3402, %v3721
      %v3723 = vsel %vm3622, %v3405, %v3722
      %v3724 = vsel %vm3624, %v3408, %v3723
      %v3725 = vsel %vm3626, %v3411, %v3724
      %v3726 = vsel %vm3614, %v3417, %v3414
      %v3727 = vsel %vm3616, %v3420, %v3726
      %v3728 = vsel %vm3618, %v3423, %v3727
      %v3729 = vsel %vm3620, %v3426, %v3728
      %v3730 = vsel %vm3622, %v3429, %v3729
      %v3731 = vsel %vm3624, %v3432, %v3730
      %v3732 = vsel %vm3626, %v3435, %v3731
      %s3749 = scalar_lea.vmem [#allocation2], 16
      %3750 = vst.msk [vmem:[%s3749 + $0x1] sm:$0xff] %vm3051, %v3627
      %3751 = vst.msk [vmem:[%s3749 + $0x11] sm:$0xff] %vm3051, %v3634
      %3752 = vst.msk [vmem:[%s3749 + $0x21] sm:$0xff] %vm3051, %v3641
      %3753 = vst.msk [vmem:[%s3749 + $0x31] sm:$0xff] %vm3051, %v3648
      %3754 = vst.msk [vmem:[%s3749 + $0x41] sm:$0xff] %vm3051, %v3655
      %3755 = vst.msk [vmem:[%s3749 + $0x51] sm:$0xff] %vm3051, %v3662
      %3756 = vst.msk [vmem:[%s3749 + $0x61] sm:$0xff] %vm3051, %v3669
      %3757 = vst.msk [vmem:[%s3749 + $0x71] sm:$0xff] %vm3051, %v3676
      %3758 = vst.msk [vmem:[%s3749 + $0xa1] sm:$0xff] %vm3051, %v3683
      %3759 = vst.msk [vmem:[%s3749 + $0xb1] sm:$0xff] %vm3051, %v3690
      %3760 = vst.msk [vmem:[%s3749 + $0xc1] sm:$0xff] %vm3051, %v3697
      %3761 = vst.msk [vmem:[%s3749 + $0xd1] sm:$0xff] %vm3051, %v3704
      %3762 = vst.msk [vmem:[%s3749 + $0xe1] sm:$0xff] %vm3051, %v3711
      %3763 = vst.msk [vmem:[%s3749 + $0xf1] sm:$0xff] %vm3051, %v3718
      %3764 = vst.msk [vmem:[%s3749 + $0x101] sm:$0xff] %vm3051, %v3725
      %3765 = vst.msk [vmem:[%s3749 + $0x111] sm:$0xff] %vm3051, %v3732
      %v3766 = vld [vmem:[#allocation2] sm:$0xff]
      %v3767 = vld [vmem:[#allocation2 + $0x10] sm:$0xff]
      %v3768 = vld [vmem:[#allocation2 + $0x20] sm:$0xff]
      %v3769 = vld [vmem:[#allocation2 + $0x30] sm:$0xff]
      %v3770 = vld [vmem:[#allocation2 + $0x40] sm:$0xff]
      %v3771 = vld [vmem:[#allocation2 + $0x50] sm:$0xff]
      %v3772 = vld [vmem:[#allocation2 + $0x60] sm:$0xff]
      %v3773 = vld [vmem:[#allocation2 + $0x70] sm:$0xff]
      %v3774 = vld [vmem:[#allocation2 + $0xa0] sm:$0xff]
      %v3775 = vld [vmem:[#allocation2 + $0xb0] sm:$0xff]
      %v3776 = vld [vmem:[#allocation2 + $0xc0] sm:$0xff]
      %v3777 = vld [vmem:[#allocation2 + $0xd0] sm:$0xff]
      %v3778 = vld [vmem:[#allocation2 + $0xe0] sm:$0xff]
      %v3779 = vld [vmem:[#allocation2 + $0xf0] sm:$0xff]
      %v3780 = vld [vmem:[#allocation2 + $0x100] sm:$0xff]
      %v3781 = vld [vmem:[#allocation2 + $0x110] sm:$0xff]
      %v3782 = vpack.c.bf16 %v3767, %v3766
      %v3783 = vpack.c.bf16 %v3769, %v3768
      %v3784 = vpack.c.bf16 %v3771, %v3770
      %v3785 = vpack.c.bf16 %v3773, %v3772
      %v3786 = vpack.c.bf16 %v3775, %v3774
      %v3787 = vpack.c.bf16 %v3777, %v3776
      %v3788 = vpack.c.bf16 %v3779, %v3778
      %v3789 = vpack.c.bf16 %v3781, %v3780
      %v3790 = vld [vmem:[%s3] sm:$0xff]
      %v3791 = vld [vmem:[%s3 + $0x8] sm:$0xff]
      %v3792 = vld [vmem:[%s3 + $0x10] sm:$0xff]
      %v3793 = vld [vmem:[%s3 + $0x18] sm:$0xff]
      %v3794 = vld [vmem:[#allocation2 + $0x1] sm:$0xff]
      %v3795 = vld [vmem:[#allocation2 + $0x11] sm:$0xff]
      %v3796 = vld [vmem:[#allocation2 + $0x21] sm:$0xff]
      %v3797 = vld [vmem:[#allocation2 + $0x31] sm:$0xff]
      %v3798 = vld [vmem:[#allocation2 + $0x41] sm:$0xff]
      %v3799 = vld [vmem:[#allocation2 + $0x51] sm:$0xff]
      %v3800 = vld [vmem:[#allocation2 + $0x61] sm:$0xff]
      %v3801 = vld [vmem:[#allocation2 + $0x71] sm:$0xff]
      %v3802 = vld [vmem:[#allocation2 + $0xa1] sm:$0xff]
      %v3803 = vld [vmem:[#allocation2 + $0xb1] sm:$0xff]
      %v3804 = vld [vmem:[#allocation2 + $0xc1] sm:$0xff]
      %v3805 = vld [vmem:[#allocation2 + $0xd1] sm:$0xff]
      %v3806 = vld [vmem:[#allocation2 + $0xe1] sm:$0xff]
      %v3807 = vld [vmem:[#allocation2 + $0xf1] sm:$0xff]
      %v3808 = vld [vmem:[#allocation2 + $0x101] sm:$0xff]
      %v3809 = vld [vmem:[#allocation2 + $0x111] sm:$0xff]
      %v3810 = vpack.c.bf16 %v3795, %v3794
      %v3811 = vpack.c.bf16 %v3797, %v3796
      %v3812 = vpack.c.bf16 %v3799, %v3798
      %v3813 = vpack.c.bf16 %v3801, %v3800
      %v3814 = vpack.c.bf16 %v3803, %v3802
      %v3815 = vpack.c.bf16 %v3805, %v3804
      %v3816 = vpack.c.bf16 %v3807, %v3806
      %v3817 = vpack.c.bf16 %v3809, %v3808
      %v3818 = vld [vmem:[%s3 + $0x20] sm:$0xff]
      %v3819 = vld [vmem:[%s3 + $0x28] sm:$0xff]
      %v3820 = vld [vmem:[%s3 + $0x30] sm:$0xff]
      %v3821 = vld [vmem:[%s3 + $0x38] sm:$0xff]
      %v3826 = vunpack.c.l.b16 %v3818
      %v3827 = vunpack.c.h.b16 %v3818
      %v3828 = vunpack.c.l.b16 %v3819
      %v3829 = vunpack.c.h.b16 %v3819
      %v3830 = vunpack.c.l.b16 %v3820
      %v3831 = vunpack.c.h.b16 %v3820
      %v3832 = vunpack.c.l.b16 %v3821
      %v3833 = vunpack.c.h.b16 %v3821
      %v3834 = vpack.c.b16 %v3828, %v3826
      %v3835 = vpack.c.b16 %v3829, %v3827
      %v3836 = vpack.c.b16 %v3832, %v3830
      %v3837 = vpack.c.b16 %v3833, %v3831
      %v3843 = vsel %vm3051, %v3810, 0
      %v3846 = vsel %vm3051, %v3811, 0
      %v3849 = vsel %vm3051, %v3812, 0
      %v3852 = vsel %vm3051, %v3813, 0
      %v3855 = vsel %vm3051, %v3814, 0
      %v3858 = vsel %vm3051, %v3815, 0
      %v3861 = vsel %vm3051, %v3816, 0
      %v3864 = vsel %vm3051, %v3817, 0
      %3866 = vmatpush.bf16.msra.mxu0 0
      %3867 = vmatpush.bf16.msra.mxu0 0
      %3868 = vmatpush.bf16.msra.mxu0 0
      %3869 = vmatpush.bf16.msra.mxu0 0
      %3870 = vmatpush.bf16.msra.mxu0 0
      %3871 = vmatpush.bf16.msra.mxu0 0
      %3872 = vmatpush.bf16.msra.mxu0 %v3836
      %3873 = vmatpush.bf16.msra.mxu0 %v3834
      %3874 = vmatmul.bf16.gmra.mxu0 %v3843
      %v3875 = vpop.f32.mrf.mxu0
      %v3876 = vadd.f32 0.0, %v3875
      %v3877 = vpop.f32.mrf.mxu0
      %v3878 = vadd.f32 0.0, %v3877
      %3879 = vmatmul.bf16.gmra.mxu0 %v3846
      %v3880 = vpop.f32.mrf.mxu0
      %v3881 = vadd.f32 0.0, %v3880
      %v3882 = vpop.f32.mrf.mxu0
      %v3883 = vadd.f32 0.0, %v3882
      %3884 = vmatmul.bf16.gmra.mxu0 %v3849
      %v3885 = vpop.f32.mrf.mxu0
      %v3886 = vadd.f32 0.0, %v3885
      %v3887 = vpop.f32.mrf.mxu0
      %v3888 = vadd.f32 0.0, %v3887
      %3889 = vmatmul.bf16.gmra.mxu0 %v3852
      %v3890 = vpop.f32.mrf.mxu0
      %v3891 = vadd.f32 0.0, %v3890
      %v3892 = vpop.f32.mrf.mxu0
      %v3893 = vadd.f32 0.0, %v3892
      %3894 = vmatmul.bf16.gmra.mxu0 %v3855
      %v3895 = vpop.f32.mrf.mxu0
      %v3896 = vadd.f32 0.0, %v3895
      %v3897 = vpop.f32.mrf.mxu0
      %v3898 = vadd.f32 0.0, %v3897
      %3899 = vmatmul.bf16.gmra.mxu0 %v3858
      %v3900 = vpop.f32.mrf.mxu0
      %v3901 = vadd.f32 0.0, %v3900
      %v3902 = vpop.f32.mrf.mxu0
      %v3903 = vadd.f32 0.0, %v3902
      %3904 = vmatmul.bf16.gmra.mxu0 %v3861
      %v3905 = vpop.f32.mrf.mxu0
      %v3906 = vadd.f32 0.0, %v3905
      %v3907 = vpop.f32.mrf.mxu0
      %v3908 = vadd.f32 0.0, %v3907
      %3909 = vmatmul.bf16.gmra.mxu0 %v3864
      %v3910 = vpop.f32.mrf.mxu0
      %v3911 = vadd.f32 0.0, %v3910
      %v3912 = vpop.f32.mrf.mxu0
      %v3913 = vadd.f32 0.0, %v3912
      %3914 = vdwg.mxu0
      %3915 = vmatpush.bf16.msra.mxu0 0
      %3916 = vmatpush.bf16.msra.mxu0 0
      %3917 = vmatpush.bf16.msra.mxu0 0
      %3918 = vmatpush.bf16.msra.mxu0 0
      %3919 = vmatpush.bf16.msra.mxu0 0
      %3920 = vmatpush.bf16.msra.mxu0 0
      %3921 = vmatpush.bf16.msra.mxu0 %v3837
      %3922 = vmatpush.bf16.msra.mxu0 %v3835
      %3923 = vmatmul.bf16.gmra.mxu0 %v3843
      %v3924 = vpop.f32.mrf.mxu0
      %v3925 = vadd.f32 0.0, %v3924
      %v3926 = vpop.f32.mrf.mxu0
      %v3927 = vadd.f32 0.0, %v3926
      %3928 = vmatmul.bf16.gmra.mxu0 %v3846
      %v3929 = vpop.f32.mrf.mxu0
      %v3930 = vadd.f32 0.0, %v3929
      %v3931 = vpop.f32.mrf.mxu0
      %v3932 = vadd.f32 0.0, %v3931
      %3933 = vmatmul.bf16.gmra.mxu0 %v3849
      %v3934 = vpop.f32.mrf.mxu0
      %v3935 = vadd.f32 0.0, %v3934
      %v3936 = vpop.f32.mrf.mxu0
      %v3937 = vadd.f32 0.0, %v3936
      %3938 = vmatmul.bf16.gmra.mxu0 %v3852
      %v3939 = vpop.f32.mrf.mxu0
      %v3940 = vadd.f32 0.0, %v3939
      %v3941 = vpop.f32.mrf.mxu0
      %v3942 = vadd.f32 0.0, %v3941
      %3943 = vmatmul.bf16.gmra.mxu0 %v3855
      %v3944 = vpop.f32.mrf.mxu0
      %v3945 = vadd.f32 0.0, %v3944
      %v3946 = vpop.f32.mrf.mxu0
      %v3947 = vadd.f32 0.0, %v3946
      %3948 = vmatmul.bf16.gmra.mxu0 %v3858
      %v3949 = vpop.f32.mrf.mxu0
      %v3950 = vadd.f32 0.0, %v3949
      %v3951 = vpop.f32.mrf.mxu0
      %v3952 = vadd.f32 0.0, %v3951
      %3953 = vmatmul.bf16.gmra.mxu0 %v3861
      %v3954 = vpop.f32.mrf.mxu0
      %v3955 = vadd.f32 0.0, %v3954
      %v3956 = vpop.f32.mrf.mxu0
      %v3957 = vadd.f32 0.0, %v3956
      %3958 = vmatmul.bf16.gmra.mxu0 %v3864
      %v3959 = vpop.f32.mrf.mxu0
      %v3960 = vadd.f32 0.0, %v3959
      %v3961 = vpop.f32.mrf.mxu0
      %v3962 = vadd.f32 0.0, %v3961
      %3963 = vdwg.mxu0
      %v3968 = vunpack.c.l.b16 %v3790
      %v3969 = vunpack.c.h.b16 %v3790
      %v3970 = vunpack.c.l.b16 %v3791
      %v3971 = vunpack.c.h.b16 %v3791
      %v3972 = vunpack.c.l.b16 %v3792
      %v3973 = vunpack.c.h.b16 %v3792
      %v3974 = vunpack.c.l.b16 %v3793
      %v3975 = vunpack.c.h.b16 %v3793
      %v3976 = vpack.c.b16 %v3970, %v3968
      %v3977 = vpack.c.b16 %v3971, %v3969
      %v3978 = vpack.c.b16 %v3974, %v3972
      %v3979 = vpack.c.b16 %v3975, %v3973
      %v3985 = vsel %vm3051, %v3782, 0
      %v3988 = vsel %vm3051, %v3783, 0
      %v3991 = vsel %vm3051, %v3784, 0
      %v3994 = vsel %vm3051, %v3785, 0
      %v3997 = vsel %vm3051, %v3786, 0
      %v4000 = vsel %vm3051, %v3787, 0
      %v4003 = vsel %vm3051, %v3788, 0
      %v4006 = vsel %vm3051, %v3789, 0
      %4008 = vmatpush.bf16.msra.mxu0 0
      %4009 = vmatpush.bf16.msra.mxu0 0
      %4010 = vmatpush.bf16.msra.mxu0 0
      %4011 = vmatpush.bf16.msra.mxu0 0
      %4012 = vmatpush.bf16.msra.mxu0 0
      %4013 = vmatpush.bf16.msra.mxu0 0
      %4014 = vmatpush.bf16.msra.mxu0 %v3978
      %4015 = vmatpush.bf16.msra.mxu0 %v3976
      %4016 = vmatmul.bf16.gmra.mxu0 %v3985
      %v4017 = vpop.f32.mrf.mxu0
      %v4018 = vadd.f32 %v3876, %v4017
      %v4019 = vpop.f32.mrf.mxu0
      %v4020 = vadd.f32 %v3878, %v4019
      %4021 = vmatmul.bf16.gmra.mxu0 %v3988
      %v4022 = vpop.f32.mrf.mxu0
      %v4023 = vadd.f32 %v3881, %v4022
      %v4024 = vpop.f32.mrf.mxu0
      %v4025 = vadd.f32 %v3883, %v4024
      %4026 = vmatmul.bf16.gmra.mxu0 %v3991
      %v4027 = vpop.f32.mrf.mxu0
      %v4028 = vadd.f32 %v3886, %v4027
      %v4029 = vpop.f32.mrf.mxu0
      %v4030 = vadd.f32 %v3888, %v4029
      %4031 = vmatmul.bf16.gmra.mxu0 %v3994
      %v4032 = vpop.f32.mrf.mxu0
      %v4033 = vadd.f32 %v3891, %v4032
      %v4034 = vpop.f32.mrf.mxu0
      %v4035 = vadd.f32 %v3893, %v4034
      %4036 = vmatmul.bf16.gmra.mxu0 %v3997
      %v4037 = vpop.f32.mrf.mxu0
      %v4038 = vadd.f32 %v3896, %v4037
      %v4039 = vpop.f32.mrf.mxu0
      %v4040 = vadd.f32 %v3898, %v4039
      %4041 = vmatmul.bf16.gmra.mxu0 %v4000
      %v4042 = vpop.f32.mrf.mxu0
      %v4043 = vadd.f32 %v3901, %v4042
      %v4044 = vpop.f32.mrf.mxu0
      %v4045 = vadd.f32 %v3903, %v4044
      %4046 = vmatmul.bf16.gmra.mxu0 %v4003
      %v4047 = vpop.f32.mrf.mxu0
      %v4048 = vadd.f32 %v3906, %v4047
      %v4049 = vpop.f32.mrf.mxu0
      %v4050 = vadd.f32 %v3908, %v4049
      %4051 = vmatmul.bf16.gmra.mxu0 %v4006
      %v4052 = vpop.f32.mrf.mxu0
      %v4053 = vadd.f32 %v3911, %v4052
      %v4054 = vpop.f32.mrf.mxu0
      %v4055 = vadd.f32 %v3913, %v4054
      %4056 = vdwg.mxu0
      %4057 = vmatpush.bf16.msra.mxu0 0
      %4058 = vmatpush.bf16.msra.mxu0 0
      %4059 = vmatpush.bf16.msra.mxu0 0
      %4060 = vmatpush.bf16.msra.mxu0 0
      %4061 = vmatpush.bf16.msra.mxu0 0
      %4062 = vmatpush.bf16.msra.mxu0 0
      %4063 = vmatpush.bf16.msra.mxu0 %v3979
      %4064 = vmatpush.bf16.msra.mxu0 %v3977
      %4065 = vmatmul.bf16.gmra.mxu0 %v3985
      %v4066 = vpop.f32.mrf.mxu0
      %v4067 = vadd.f32 %v3925, %v4066
      %v4068 = vpop.f32.mrf.mxu0
      %v4069 = vadd.f32 %v3927, %v4068
      %4070 = vmatmul.bf16.gmra.mxu0 %v3988
      %v4071 = vpop.f32.mrf.mxu0
      %v4072 = vadd.f32 %v3930, %v4071
      %v4073 = vpop.f32.mrf.mxu0
      %v4074 = vadd.f32 %v3932, %v4073
      %4075 = vmatmul.bf16.gmra.mxu0 %v3991
      %v4076 = vpop.f32.mrf.mxu0
      %v4077 = vadd.f32 %v3935, %v4076
      %v4078 = vpop.f32.mrf.mxu0
      %v4079 = vadd.f32 %v3937, %v4078
      %4080 = vmatmul.bf16.gmra.mxu0 %v3994
      %v4081 = vpop.f32.mrf.mxu0
      %v4082 = vadd.f32 %v3940, %v4081
      %v4083 = vpop.f32.mrf.mxu0
      %v4084 = vadd.f32 %v3942, %v4083
      %4085 = vmatmul.bf16.gmra.mxu0 %v3997
      %v4086 = vpop.f32.mrf.mxu0
      %v4087 = vadd.f32 %v3945, %v4086
      %v4088 = vpop.f32.mrf.mxu0
      %v4089 = vadd.f32 %v3947, %v4088
      %4090 = vmatmul.bf16.gmra.mxu0 %v4000
      %v4091 = vpop.f32.mrf.mxu0
      %v4092 = vadd.f32 %v3950, %v4091
      %v4093 = vpop.f32.mrf.mxu0
      %v4094 = vadd.f32 %v3952, %v4093
      %4095 = vmatmul.bf16.gmra.mxu0 %v4003
      %v4096 = vpop.f32.mrf.mxu0
      %v4097 = vadd.f32 %v3955, %v4096
      %v4098 = vpop.f32.mrf.mxu0
      %v4099 = vadd.f32 %v3957, %v4098
      %4100 = vmatmul.bf16.gmra.mxu0 %v4006
      %v4101 = vpop.f32.mrf.mxu0
      %v4102 = vadd.f32 %v3960, %v4101
      %v4103 = vpop.f32.mrf.mxu0
      %v4104 = vadd.f32 %v3962, %v4103
      %4105 = vdwg.mxu0
      %v4106 = vld [vmem:[#allocation2 + $0x2] sm:$0xff]
      %v4107 = vld [vmem:[#allocation2 + $0x12] sm:$0xff]
      %v4108 = vld [vmem:[#allocation2 + $0x22] sm:$0xff]
      %v4109 = vld [vmem:[#allocation2 + $0x32] sm:$0xff]
      %v4110 = vld [vmem:[#allocation2 + $0x42] sm:$0xff]
      %v4111 = vld [vmem:[#allocation2 + $0x52] sm:$0xff]
      %v4112 = vld [vmem:[#allocation2 + $0x62] sm:$0xff]
      %v4113 = vld [vmem:[#allocation2 + $0x72] sm:$0xff]
      %v4114 = vld [vmem:[#allocation2 + $0xa2] sm:$0xff]
      %v4115 = vld [vmem:[#allocation2 + $0xb2] sm:$0xff]
      %v4116 = vld [vmem:[#allocation2 + $0xc2] sm:$0xff]
      %v4117 = vld [vmem:[#allocation2 + $0xd2] sm:$0xff]
      %v4118 = vld [vmem:[#allocation2 + $0xe2] sm:$0xff]
      %v4119 = vld [vmem:[#allocation2 + $0xf2] sm:$0xff]
      %v4120 = vld [vmem:[#allocation2 + $0x102] sm:$0xff]
      %v4121 = vld [vmem:[#allocation2 + $0x112] sm:$0xff]
      %v4122 = vpack.c.bf16 %v4107, %v4106
      %v4123 = vpack.c.bf16 %v4109, %v4108
      %v4124 = vpack.c.bf16 %v4111, %v4110
      %v4125 = vpack.c.bf16 %v4113, %v4112
      %v4126 = vpack.c.bf16 %v4115, %v4114
      %v4127 = vpack.c.bf16 %v4117, %v4116
      %v4128 = vpack.c.bf16 %v4119, %v4118
      %v4129 = vpack.c.bf16 %v4121, %v4120
      %v4130 = vld [vmem:[%s3 + $0x40] sm:$0xff]
      %v4131 = vld [vmem:[%s3 + $0x48] sm:$0xff]
      %v4132 = vld [vmem:[%s3 + $0x50] sm:$0xff]
      %v4133 = vld [vmem:[%s3 + $0x58] sm:$0xff]
      %v4138 = vunpack.c.l.b16 %v4130
      %v4139 = vunpack.c.h.b16 %v4130
      %v4140 = vunpack.c.l.b16 %v4131
      %v4141 = vunpack.c.h.b16 %v4131
      %v4142 = vunpack.c.l.b16 %v4132
      %v4143 = vunpack.c.h.b16 %v4132
      %v4144 = vunpack.c.l.b16 %v4133
      %v4145 = vunpack.c.h.b16 %v4133
      %v4146 = vpack.c.b16 %v4140, %v4138
      %v4147 = vpack.c.b16 %v4141, %v4139
      %v4148 = vpack.c.b16 %v4144, %v4142
      %v4149 = vpack.c.b16 %v4145, %v4143
      %v4155 = vsel %vm3051, %v4122, 0
      %v4158 = vsel %vm3051, %v4123, 0
      %v4161 = vsel %vm3051, %v4124, 0
      %v4164 = vsel %vm3051, %v4125, 0
      %v4167 = vsel %vm3051, %v4126, 0
      %v4170 = vsel %vm3051, %v4127, 0
      %v4173 = vsel %vm3051, %v4128, 0
      %v4176 = vsel %vm3051, %v4129, 0
      %4178 = vmatpush.bf16.msra.mxu0 0
      %4179 = vmatpush.bf16.msra.mxu0 0
      %4180 = vmatpush.bf16.msra.mxu0 0
      %4181 = vmatpush.bf16.msra.mxu0 0
      %4182 = vmatpush.bf16.msra.mxu0 0
      %4183 = vmatpush.bf16.msra.mxu0 0
      %4184 = vmatpush.bf16.msra.mxu0 %v4148
      %4185 = vmatpush.bf16.msra.mxu0 %v4146
      %4186 = vmatmul.bf16.gmra.mxu0 %v4155
      %v4187 = vpop.f32.mrf.mxu0
      %v4188 = vadd.f32 0.0, %v4187
      %v4189 = vpop.f32.mrf.mxu0
      %v4190 = vadd.f32 0.0, %v4189
      %4191 = vmatmul.bf16.gmra.mxu0 %v4158
      %v4192 = vpop.f32.mrf.mxu0
      %v4193 = vadd.f32 0.0, %v4192
      %v4194 = vpop.f32.mrf.mxu0
      %v4195 = vadd.f32 0.0, %v4194
      %4196 = vmatmul.bf16.gmra.mxu0 %v4161
      %v4197 = vpop.f32.mrf.mxu0
      %v4198 = vadd.f32 0.0, %v4197
      %v4199 = vpop.f32.mrf.mxu0
      %v4200 = vadd.f32 0.0, %v4199
      %4201 = vmatmul.bf16.gmra.mxu0 %v4164
      %v4202 = vpop.f32.mrf.mxu0
      %v4203 = vadd.f32 0.0, %v4202
      %v4204 = vpop.f32.mrf.mxu0
      %v4205 = vadd.f32 0.0, %v4204
      %4206 = vmatmul.bf16.gmra.mxu0 %v4167
      %v4207 = vpop.f32.mrf.mxu0
      %v4208 = vadd.f32 0.0, %v4207
      %v4209 = vpop.f32.mrf.mxu0
      %v4210 = vadd.f32 0.0, %v4209
      %4211 = vmatmul.bf16.gmra.mxu0 %v4170
      %v4212 = vpop.f32.mrf.mxu0
      %v4213 = vadd.f32 0.0, %v4212
      %v4214 = vpop.f32.mrf.mxu0
      %v4215 = vadd.f32 0.0, %v4214
      %4216 = vmatmul.bf16.gmra.mxu0 %v4173
      %v4217 = vpop.f32.mrf.mxu0
      %v4218 = vadd.f32 0.0, %v4217
      %v4219 = vpop.f32.mrf.mxu0
      %v4220 = vadd.f32 0.0, %v4219
      %4221 = vmatmul.bf16.gmra.mxu0 %v4176
      %v4222 = vpop.f32.mrf.mxu0
      %v4223 = vadd.f32 0.0, %v4222
      %v4224 = vpop.f32.mrf.mxu0
      %v4225 = vadd.f32 0.0, %v4224
      %4226 = vdwg.mxu0
      %4227 = vmatpush.bf16.msra.mxu0 0
      %4228 = vmatpush.bf16.msra.mxu0 0
      %4229 = vmatpush.bf16.msra.mxu0 0
      %4230 = vmatpush.bf16.msra.mxu0 0
      %4231 = vmatpush.bf16.msra.mxu0 0
      %4232 = vmatpush.bf16.msra.mxu0 0
      %4233 = vmatpush.bf16.msra.mxu0 %v4149
      %4234 = vmatpush.bf16.msra.mxu0 %v4147
      %4235 = vmatmul.bf16.gmra.mxu0 %v4155
      %v4236 = vpop.f32.mrf.mxu0
      %v4237 = vadd.f32 0.0, %v4236
      %v4238 = vpop.f32.mrf.mxu0
      %v4239 = vadd.f32 0.0, %v4238
      %4240 = vmatmul.bf16.gmra.mxu0 %v4158
      %v4241 = vpop.f32.mrf.mxu0
      %v4242 = vadd.f32 0.0, %v4241
      %v4243 = vpop.f32.mrf.mxu0
      %v4244 = vadd.f32 0.0, %v4243
      %4245 = vmatmul.bf16.gmra.mxu0 %v4161
      %v4246 = vpop.f32.mrf.mxu0
      %v4247 = vadd.f32 0.0, %v4246
      %v4248 = vpop.f32.mrf.mxu0
      %v4249 = vadd.f32 0.0, %v4248
      %4250 = vmatmul.bf16.gmra.mxu0 %v4164
      %v4251 = vpop.f32.mrf.mxu0
      %v4252 = vadd.f32 0.0, %v4251
      %v4253 = vpop.f32.mrf.mxu0
      %v4254 = vadd.f32 0.0, %v4253
      %4255 = vmatmul.bf16.gmra.mxu0 %v4167
      %v4256 = vpop.f32.mrf.mxu0
      %v4257 = vadd.f32 0.0, %v4256
      %v4258 = vpop.f32.mrf.mxu0
      %v4259 = vadd.f32 0.0, %v4258
      %4260 = vmatmul.bf16.gmra.mxu0 %v4170
      %v4261 = vpop.f32.mrf.mxu0
      %v4262 = vadd.f32 0.0, %v4261
      %v4263 = vpop.f32.mrf.mxu0
      %v4264 = vadd.f32 0.0, %v4263
      %4265 = vmatmul.bf16.gmra.mxu0 %v4173
      %v4266 = vpop.f32.mrf.mxu0
      %v4267 = vadd.f32 0.0, %v4266
      %v4268 = vpop.f32.mrf.mxu0
      %v4269 = vadd.f32 0.0, %v4268
      %4270 = vmatmul.bf16.gmra.mxu0 %v4176
      %v4271 = vpop.f32.mrf.mxu0
      %v4272 = vadd.f32 0.0, %v4271
      %v4273 = vpop.f32.mrf.mxu0
      %v4274 = vadd.f32 0.0, %v4273
      %4275 = vdwg.mxu0
      %v4276 = vadd.f32 %v4018, %v4188
      %v4277 = vadd.f32 %v4067, %v4237
      %v4278 = vadd.f32 %v4020, %v4190
      %v4279 = vadd.f32 %v4069, %v4239
      %v4280 = vadd.f32 %v4023, %v4193
      %v4281 = vadd.f32 %v4072, %v4242
      %v4282 = vadd.f32 %v4025, %v4195
      %v4283 = vadd.f32 %v4074, %v4244
      %v4284 = vadd.f32 %v4028, %v4198
      %v4285 = vadd.f32 %v4077, %v4247
      %v4286 = vadd.f32 %v4030, %v4200
      %v4287 = vadd.f32 %v4079, %v4249
      %v4288 = vadd.f32 %v4033, %v4203
      %v4289 = vadd.f32 %v4082, %v4252
      %v4290 = vadd.f32 %v4035, %v4205
      %v4291 = vadd.f32 %v4084, %v4254
      %v4292 = vadd.f32 %v4038, %v4208
      %v4293 = vadd.f32 %v4087, %v4257
      %v4294 = vadd.f32 %v4040, %v4210
      %v4295 = vadd.f32 %v4089, %v4259
      %v4296 = vadd.f32 %v4043, %v4213
      %v4297 = vadd.f32 %v4092, %v4262
      %v4298 = vadd.f32 %v4045, %v4215
      %v4299 = vadd.f32 %v4094, %v4264
      %v4300 = vadd.f32 %v4048, %v4218
      %v4301 = vadd.f32 %v4097, %v4267
      %v4302 = vadd.f32 %v4050, %v4220
      %v4303 = vadd.f32 %v4099, %v4269
      %v4304 = vadd.f32 %v4053, %v4223
      %v4305 = vadd.f32 %v4102, %v4272
      %v4306 = vadd.f32 %v4055, %v4225
      %v4307 = vadd.f32 %v4104, %v4274
      %v4308 = vld [vmem:[%s3749] sm:$0xff]
      %v4309 = vld [vmem:[%s3749 + $0x10] sm:$0xff]
      %v4310 = vld [vmem:[%s3749 + $0x20] sm:$0xff]
      %v4311 = vld [vmem:[%s3749 + $0x30] sm:$0xff]
      %v4312 = vld [vmem:[%s3749 + $0x40] sm:$0xff]
      %v4313 = vld [vmem:[%s3749 + $0x50] sm:$0xff]
      %v4314 = vld [vmem:[%s3749 + $0x60] sm:$0xff]
      %v4315 = vld [vmem:[%s3749 + $0x70] sm:$0xff]
      %v4316 = vld [vmem:[%s3749 + $0xa0] sm:$0xff]
      %v4317 = vld [vmem:[%s3749 + $0xb0] sm:$0xff]
      %v4318 = vld [vmem:[%s3749 + $0xc0] sm:$0xff]
      %v4319 = vld [vmem:[%s3749 + $0xd0] sm:$0xff]
      %v4320 = vld [vmem:[%s3749 + $0xe0] sm:$0xff]
      %v4321 = vld [vmem:[%s3749 + $0xf0] sm:$0xff]
      %v4322 = vld [vmem:[%s3749 + $0x100] sm:$0xff]
      %v4323 = vld [vmem:[%s3749 + $0x110] sm:$0xff]
      %v4324 = vpack.c.bf16 %v4309, %v4308
      %v4325 = vpack.c.bf16 %v4311, %v4310
      %v4326 = vpack.c.bf16 %v4313, %v4312
      %v4327 = vpack.c.bf16 %v4315, %v4314
      %v4328 = vpack.c.bf16 %v4317, %v4316
      %v4329 = vpack.c.bf16 %v4319, %v4318
      %v4330 = vpack.c.bf16 %v4321, %v4320
      %v4331 = vpack.c.bf16 %v4323, %v4322
      %v4332 = vld [vmem:[%s3 + $0x60] sm:$0xff]
      %v4333 = vld [vmem:[%s3 + $0x68] sm:$0xff]
      %v4334 = vld [vmem:[%s3 + $0x70] sm:$0xff]
      %v4335 = vld [vmem:[%s3 + $0x78] sm:$0xff]
      %v4340 = vunpack.c.l.b16 %v4332
      %v4341 = vunpack.c.h.b16 %v4332
      %v4342 = vunpack.c.l.b16 %v4333
      %v4343 = vunpack.c.h.b16 %v4333
      %v4344 = vunpack.c.l.b16 %v4334
      %v4345 = vunpack.c.h.b16 %v4334
      %v4346 = vunpack.c.l.b16 %v4335
      %v4347 = vunpack.c.h.b16 %v4335
      %v4348 = vpack.c.b16 %v4342, %v4340
      %v4349 = vpack.c.b16 %v4343, %v4341
      %v4350 = vpack.c.b16 %v4346, %v4344
      %v4351 = vpack.c.b16 %v4347, %v4345
      %v4357 = vsel %vm3051, %v4324, 0
      %v4360 = vsel %vm3051, %v4325, 0
      %v4363 = vsel %vm3051, %v4326, 0
      %v4366 = vsel %vm3051, %v4327, 0
      %v4369 = vsel %vm3051, %v4328, 0
      %v4372 = vsel %vm3051, %v4329, 0
      %v4375 = vsel %vm3051, %v4330, 0
      %v4378 = vsel %vm3051, %v4331, 0
      %4380 = vmatpush.bf16.msra.mxu0 0
      %4381 = vmatpush.bf16.msra.mxu0 0
      %4382 = vmatpush.bf16.msra.mxu0 0
      %4383 = vmatpush.bf16.msra.mxu0 0
      %4384 = vmatpush.bf16.msra.mxu0 0
      %4385 = vmatpush.bf16.msra.mxu0 0
      %4386 = vmatpush.bf16.msra.mxu0 %v4350
      %4387 = vmatpush.bf16.msra.mxu0 %v4348
      %4388 = vmatmul.bf16.gmra.mxu0 %v4357
      %v4389 = vpop.f32.mrf.mxu0
      %v4390 = vadd.f32 0.0, %v4389
      %v4391 = vpop.f32.mrf.mxu0
      %v4392 = vadd.f32 0.0, %v4391
      %4393 = vmatmul.bf16.gmra.mxu0 %v4360
      %v4394 = vpop.f32.mrf.mxu0
      %v4395 = vadd.f32 0.0, %v4394
      %v4396 = vpop.f32.mrf.mxu0
      %v4397 = vadd.f32 0.0, %v4396
      %4398 = vmatmul.bf16.gmra.mxu0 %v4363
      %v4399 = vpop.f32.mrf.mxu0
      %v4400 = vadd.f32 0.0, %v4399
      %v4401 = vpop.f32.mrf.mxu0
      %v4402 = vadd.f32 0.0, %v4401
      %4403 = vmatmul.bf16.gmra.mxu0 %v4366
      %v4404 = vpop.f32.mrf.mxu0
      %v4405 = vadd.f32 0.0, %v4404
      %v4406 = vpop.f32.mrf.mxu0
      %v4407 = vadd.f32 0.0, %v4406
      %4408 = vmatmul.bf16.gmra.mxu0 %v4369
      %v4409 = vpop.f32.mrf.mxu0
      %v4410 = vadd.f32 0.0, %v4409
      %v4411 = vpop.f32.mrf.mxu0
      %v4412 = vadd.f32 0.0, %v4411
      %4413 = vmatmul.bf16.gmra.mxu0 %v4372
      %v4414 = vpop.f32.mrf.mxu0
      %v4415 = vadd.f32 0.0, %v4414
      %v4416 = vpop.f32.mrf.mxu0
      %v4417 = vadd.f32 0.0, %v4416
      %4418 = vmatmul.bf16.gmra.mxu0 %v4375
      %v4419 = vpop.f32.mrf.mxu0
      %v4420 = vadd.f32 0.0, %v4419
      %v4421 = vpop.f32.mrf.mxu0
      %v4422 = vadd.f32 0.0, %v4421
      %4423 = vmatmul.bf16.gmra.mxu0 %v4378
      %v4424 = vpop.f32.mrf.mxu0
      %v4425 = vadd.f32 0.0, %v4424
      %v4426 = vpop.f32.mrf.mxu0
      %v4427 = vadd.f32 0.0, %v4426
      %4428 = vdwg.mxu0
      %4429 = vmatpush.bf16.msra.mxu0 0
      %4430 = vmatpush.bf16.msra.mxu0 0
      %4431 = vmatpush.bf16.msra.mxu0 0
      %4432 = vmatpush.bf16.msra.mxu0 0
      %4433 = vmatpush.bf16.msra.mxu0 0
      %4434 = vmatpush.bf16.msra.mxu0 0
      %4435 = vmatpush.bf16.msra.mxu0 %v4351
      %4436 = vmatpush.bf16.msra.mxu0 %v4349
      %4437 = vmatmul.bf16.gmra.mxu0 %v4357
      %v4438 = vpop.f32.mrf.mxu0
      %v4439 = vadd.f32 0.0, %v4438
      %v4440 = vpop.f32.mrf.mxu0
      %v4441 = vadd.f32 0.0, %v4440
      %4442 = vmatmul.bf16.gmra.mxu0 %v4360
      %v4443 = vpop.f32.mrf.mxu0
      %v4444 = vadd.f32 0.0, %v4443
      %v4445 = vpop.f32.mrf.mxu0
      %v4446 = vadd.f32 0.0, %v4445
      %4447 = vmatmul.bf16.gmra.mxu0 %v4363
      %v4448 = vpop.f32.mrf.mxu0
      %v4449 = vadd.f32 0.0, %v4448
      %v4450 = vpop.f32.mrf.mxu0
      %v4451 = vadd.f32 0.0, %v4450
      %4452 = vmatmul.bf16.gmra.mxu0 %v4366
      %v4453 = vpop.f32.mrf.mxu0
      %v4454 = vadd.f32 0.0, %v4453
      %v4455 = vpop.f32.mrf.mxu0
      %v4456 = vadd.f32 0.0, %v4455
      %4457 = vmatmul.bf16.gmra.mxu0 %v4369
      %v4458 = vpop.f32.mrf.mxu0
      %v4459 = vadd.f32 0.0, %v4458
      %v4460 = vpop.f32.mrf.mxu0
      %v4461 = vadd.f32 0.0, %v4460
      %4462 = vmatmul.bf16.gmra.mxu0 %v4372
      %v4463 = vpop.f32.mrf.mxu0
      %v4464 = vadd.f32 0.0, %v4463
      %v4465 = vpop.f32.mrf.mxu0
      %v4466 = vadd.f32 0.0, %v4465
      %4467 = vmatmul.bf16.gmra.mxu0 %v4375
      %v4468 = vpop.f32.mrf.mxu0
      %v4469 = vadd.f32 0.0, %v4468
      %v4470 = vpop.f32.mrf.mxu0
      %v4471 = vadd.f32 0.0, %v4470
      %4472 = vmatmul.bf16.gmra.mxu0 %v4378
      %v4473 = vpop.f32.mrf.mxu0
      %v4474 = vadd.f32 0.0, %v4473
      %v4475 = vpop.f32.mrf.mxu0
      %v4476 = vadd.f32 0.0, %v4475
      %4477 = vdwg.mxu0
      %v4478 = vadd.f32 %v4276, %v4390
      %v4479 = vadd.f32 %v4277, %v4439
      %v4480 = vadd.f32 %v4278, %v4392
      %v4481 = vadd.f32 %v4279, %v4441
      %v4482 = vadd.f32 %v4280, %v4395
      %v4483 = vadd.f32 %v4281, %v4444
      %v4484 = vadd.f32 %v4282, %v4397
      %v4485 = vadd.f32 %v4283, %v4446
      %v4486 = vadd.f32 %v4284, %v4400
      %v4487 = vadd.f32 %v4285, %v4449
      %v4488 = vadd.f32 %v4286, %v4402
      %v4489 = vadd.f32 %v4287, %v4451
      %v4490 = vadd.f32 %v4288, %v4405
      %v4491 = vadd.f32 %v4289, %v4454
      %v4492 = vadd.f32 %v4290, %v4407
      %v4493 = vadd.f32 %v4291, %v4456
      %v4494 = vadd.f32 %v4292, %v4410
      %v4495 = vadd.f32 %v4293, %v4459
      %v4496 = vadd.f32 %v4294, %v4412
      %v4497 = vadd.f32 %v4295, %v4461
      %v4498 = vadd.f32 %v4296, %v4415
      %v4499 = vadd.f32 %v4297, %v4464
      %v4500 = vadd.f32 %v4298, %v4417
      %v4501 = vadd.f32 %v4299, %v4466
      %v4502 = vadd.f32 %v4300, %v4420
      %v4503 = vadd.f32 %v4301, %v4469
      %v4504 = vadd.f32 %v4302, %v4422
      %v4505 = vadd.f32 %v4303, %v4471
      %v4506 = vadd.f32 %v4304, %v4425
      %v4507 = vadd.f32 %v4305, %v4474
      %v4508 = vadd.f32 %v4306, %v4427
      %v4509 = vadd.f32 %v4307, %v4476
      %v4510 = vld [vmem:[%s3749 + $0x1] sm:$0xff]
      %v4511 = vld [vmem:[%s3749 + $0x11] sm:$0xff]
      %v4512 = vld [vmem:[%s3749 + $0x21] sm:$0xff]
      %v4513 = vld [vmem:[%s3749 + $0x31] sm:$0xff]
      %v4514 = vld [vmem:[%s3749 + $0x41] sm:$0xff]
      %v4515 = vld [vmem:[%s3749 + $0x51] sm:$0xff]
      %v4516 = vld [vmem:[%s3749 + $0x61] sm:$0xff]
      %v4517 = vld [vmem:[%s3749 + $0x71] sm:$0xff]
      %v4518 = vld [vmem:[%s3749 + $0xa1] sm:$0xff]
      %v4519 = vld [vmem:[%s3749 + $0xb1] sm:$0xff]
      %v4520 = vld [vmem:[%s3749 + $0xc1] sm:$0xff]
      %v4521 = vld [vmem:[%s3749 + $0xd1] sm:$0xff]
      %v4522 = vld [vmem:[%s3749 + $0xe1] sm:$0xff]
      %v4523 = vld [vmem:[%s3749 + $0xf1] sm:$0xff]
      %v4524 = vld [vmem:[%s3749 + $0x101] sm:$0xff]
      %v4525 = vld [vmem:[%s3749 + $0x111] sm:$0xff]
      %v4526 = vpack.c.bf16 %v4511, %v4510
      %v4527 = vpack.c.bf16 %v4513, %v4512
      %v4528 = vpack.c.bf16 %v4515, %v4514
      %v4529 = vpack.c.bf16 %v4517, %v4516
      %v4530 = vpack.c.bf16 %v4519, %v4518
      %v4531 = vpack.c.bf16 %v4521, %v4520
      %v4532 = vpack.c.bf16 %v4523, %v4522
      %v4533 = vpack.c.bf16 %v4525, %v4524
      %v4534 = vld [vmem:[%s3 + $0x80] sm:$0xff]
      %v4535 = vld [vmem:[%s3 + $0x88] sm:$0xff]
      %v4536 = vld [vmem:[%s3 + $0x90] sm:$0xff]
      %v4537 = vld [vmem:[%s3 + $0x98] sm:$0xff]
      %v4542 = vunpack.c.l.b16 %v4534
      %v4543 = vunpack.c.h.b16 %v4534
      %v4544 = vunpack.c.l.b16 %v4535
      %v4545 = vunpack.c.h.b16 %v4535
      %v4546 = vunpack.c.l.b16 %v4536
      %v4547 = vunpack.c.h.b16 %v4536
      %v4548 = vunpack.c.l.b16 %v4537
      %v4549 = vunpack.c.h.b16 %v4537
      %v4550 = vpack.c.b16 %v4544, %v4542
      %v4551 = vpack.c.b16 %v4545, %v4543
      %v4552 = vpack.c.b16 %v4548, %v4546
      %v4553 = vpack.c.b16 %v4549, %v4547
      %v4559 = vsel %vm3051, %v4526, 0
      %v4562 = vsel %vm3051, %v4527, 0
      %v4565 = vsel %vm3051, %v4528, 0
      %v4568 = vsel %vm3051, %v4529, 0
      %v4571 = vsel %vm3051, %v4530, 0
      %v4574 = vsel %vm3051, %v4531, 0
      %v4577 = vsel %vm3051, %v4532, 0
      %v4580 = vsel %vm3051, %v4533, 0
      %4582 = vmatpush.bf16.msra.mxu0 0
      %4583 = vmatpush.bf16.msra.mxu0 0
      %4584 = vmatpush.bf16.msra.mxu0 0
      %4585 = vmatpush.bf16.msra.mxu0 0
      %4586 = vmatpush.bf16.msra.mxu0 0
      %4587 = vmatpush.bf16.msra.mxu0 0
      %4588 = vmatpush.bf16.msra.mxu0 %v4552
      %4589 = vmatpush.bf16.msra.mxu0 %v4550
      %4590 = vmatmul.bf16.gmra.mxu0 %v4559
      %v4591 = vpop.f32.mrf.mxu0
      %v4592 = vadd.f32 0.0, %v4591
      %v4593 = vpop.f32.mrf.mxu0
      %v4594 = vadd.f32 0.0, %v4593
      %4595 = vmatmul.bf16.gmra.mxu0 %v4562
      %v4596 = vpop.f32.mrf.mxu0
      %v4597 = vadd.f32 0.0, %v4596
      %v4598 = vpop.f32.mrf.mxu0
      %v4599 = vadd.f32 0.0, %v4598
      %4600 = vmatmul.bf16.gmra.mxu0 %v4565
      %v4601 = vpop.f32.mrf.mxu0
      %v4602 = vadd.f32 0.0, %v4601
      %v4603 = vpop.f32.mrf.mxu0
      %v4604 = vadd.f32 0.0, %v4603
      %4605 = vmatmul.bf16.gmra.mxu0 %v4568
      %v4606 = vpop.f32.mrf.mxu0
      %v4607 = vadd.f32 0.0, %v4606
      %v4608 = vpop.f32.mrf.mxu0
      %v4609 = vadd.f32 0.0, %v4608
      %4610 = vmatmul.bf16.gmra.mxu0 %v4571
      %v4611 = vpop.f32.mrf.mxu0
      %v4612 = vadd.f32 0.0, %v4611
      %v4613 = vpop.f32.mrf.mxu0
      %v4614 = vadd.f32 0.0, %v4613
      %4615 = vmatmul.bf16.gmra.mxu0 %v4574
      %v4616 = vpop.f32.mrf.mxu0
      %v4617 = vadd.f32 0.0, %v4616
      %v4618 = vpop.f32.mrf.mxu0
      %v4619 = vadd.f32 0.0, %v4618
      %4620 = vmatmul.bf16.gmra.mxu0 %v4577
      %v4621 = vpop.f32.mrf.mxu0
      %v4622 = vadd.f32 0.0, %v4621
      %v4623 = vpop.f32.mrf.mxu0
      %v4624 = vadd.f32 0.0, %v4623
      %4625 = vmatmul.bf16.gmra.mxu0 %v4580
      %v4626 = vpop.f32.mrf.mxu0
      %v4627 = vadd.f32 0.0, %v4626
      %v4628 = vpop.f32.mrf.mxu0
      %v4629 = vadd.f32 0.0, %v4628
      %4630 = vdwg.mxu0
      %4631 = vmatpush.bf16.msra.mxu0 0
      %4632 = vmatpush.bf16.msra.mxu0 0
      %4633 = vmatpush.bf16.msra.mxu0 0
      %4634 = vmatpush.bf16.msra.mxu0 0
      %4635 = vmatpush.bf16.msra.mxu0 0
      %4636 = vmatpush.bf16.msra.mxu0 0
      %4637 = vmatpush.bf16.msra.mxu0 %v4553
      %4638 = vmatpush.bf16.msra.mxu0 %v4551
      %4639 = vmatmul.bf16.gmra.mxu0 %v4559
      %v4640 = vpop.f32.mrf.mxu0
      %v4641 = vadd.f32 0.0, %v4640
      %v4642 = vpop.f32.mrf.mxu0
      %v4643 = vadd.f32 0.0, %v4642
      %4644 = vmatmul.bf16.gmra.mxu0 %v4562
      %v4645 = vpop.f32.mrf.mxu0
      %v4646 = vadd.f32 0.0, %v4645
      %v4647 = vpop.f32.mrf.mxu0
      %v4648 = vadd.f32 0.0, %v4647
      %4649 = vmatmul.bf16.gmra.mxu0 %v4565
      %v4650 = vpop.f32.mrf.mxu0
      %v4651 = vadd.f32 0.0, %v4650
      %v4652 = vpop.f32.mrf.mxu0
      %v4653 = vadd.f32 0.0, %v4652
      %4654 = vmatmul.bf16.gmra.mxu0 %v4568
      %v4655 = vpop.f32.mrf.mxu0
      %v4656 = vadd.f32 0.0, %v4655
      %v4657 = vpop.f32.mrf.mxu0
      %v4658 = vadd.f32 0.0, %v4657
      %4659 = vmatmul.bf16.gmra.mxu0 %v4571
      %v4660 = vpop.f32.mrf.mxu0
      %v4661 = vadd.f32 0.0, %v4660
      %v4662 = vpop.f32.mrf.mxu0
      %v4663 = vadd.f32 0.0, %v4662
      %4664 = vmatmul.bf16.gmra.mxu0 %v4574
      %v4665 = vpop.f32.mrf.mxu0
      %v4666 = vadd.f32 0.0, %v4665
      %v4667 = vpop.f32.mrf.mxu0
      %v4668 = vadd.f32 0.0, %v4667
      %4669 = vmatmul.bf16.gmra.mxu0 %v4577
      %v4670 = vpop.f32.mrf.mxu0
      %v4671 = vadd.f32 0.0, %v4670
      %v4672 = vpop.f32.mrf.mxu0
      %v4673 = vadd.f32 0.0, %v4672
      %4674 = vmatmul.bf16.gmra.mxu0 %v4580
      %v4675 = vpop.f32.mrf.mxu0
      %v4676 = vadd.f32 0.0, %v4675
      %v4677 = vpop.f32.mrf.mxu0
      %v4678 = vadd.f32 0.0, %v4677
      %4679 = vdwg.mxu0
      %v4680 = vadd.f32 %v4478, %v4592
      %v4681 = vadd.f32 %v4479, %v4641
      %v4682 = vadd.f32 %v4480, %v4594
      %v4683 = vadd.f32 %v4481, %v4643
      %v4684 = vadd.f32 %v4482, %v4597
      %v4685 = vadd.f32 %v4483, %v4646
      %v4686 = vadd.f32 %v4484, %v4599
      %v4687 = vadd.f32 %v4485, %v4648
      %v4688 = vadd.f32 %v4486, %v4602
      %v4689 = vadd.f32 %v4487, %v4651
      %v4690 = vadd.f32 %v4488, %v4604
      %v4691 = vadd.f32 %v4489, %v4653
      %v4692 = vadd.f32 %v4490, %v4607
      %v4693 = vadd.f32 %v4491, %v4656
      %v4694 = vadd.f32 %v4492, %v4609
      %v4695 = vadd.f32 %v4493, %v4658
      %v4696 = vadd.f32 %v4494, %v4612
      %v4697 = vadd.f32 %v4495, %v4661
      %v4698 = vadd.f32 %v4496, %v4614
      %v4699 = vadd.f32 %v4497, %v4663
      %v4700 = vadd.f32 %v4498, %v4617
      %v4701 = vadd.f32 %v4499, %v4666
      %v4702 = vadd.f32 %v4500, %v4619
      %v4703 = vadd.f32 %v4501, %v4668
      %v4704 = vadd.f32 %v4502, %v4622
      %v4705 = vadd.f32 %v4503, %v4671
      %v4706 = vadd.f32 %v4504, %v4624
      %v4707 = vadd.f32 %v4505, %v4673
      %v4708 = vadd.f32 %v4506, %v4627
      %v4709 = vadd.f32 %v4507, %v4676
      %v4710 = vadd.f32 %v4508, %v4629
      %v4711 = vadd.f32 %v4509, %v4678
      %v4712 = vld [vmem:[%s3749 + $0x2] sm:$0xff]
      %v4713 = vld [vmem:[%s3749 + $0x12] sm:$0xff]
      %v4714 = vld [vmem:[%s3749 + $0x22] sm:$0xff]
      %v4715 = vld [vmem:[%s3749 + $0x32] sm:$0xff]
      %v4716 = vld [vmem:[%s3749 + $0x42] sm:$0xff]
      %v4717 = vld [vmem:[%s3749 + $0x52] sm:$0xff]
      %v4718 = vld [vmem:[%s3749 + $0x62] sm:$0xff]
      %v4719 = vld [vmem:[%s3749 + $0x72] sm:$0xff]
      %v4720 = vld [vmem:[%s3749 + $0xa2] sm:$0xff]
      %v4721 = vld [vmem:[%s3749 + $0xb2] sm:$0xff]
      %v4722 = vld [vmem:[%s3749 + $0xc2] sm:$0xff]
      %v4723 = vld [vmem:[%s3749 + $0xd2] sm:$0xff]
      %v4724 = vld [vmem:[%s3749 + $0xe2] sm:$0xff]
      %v4725 = vld [vmem:[%s3749 + $0xf2] sm:$0xff]
      %v4726 = vld [vmem:[%s3749 + $0x102] sm:$0xff]
      %v4727 = vld [vmem:[%s3749 + $0x112] sm:$0xff]
      %v4728 = vpack.c.bf16 %v4713, %v4712
      %v4729 = vpack.c.bf16 %v4715, %v4714
      %v4730 = vpack.c.bf16 %v4717, %v4716
      %v4731 = vpack.c.bf16 %v4719, %v4718
      %v4732 = vpack.c.bf16 %v4721, %v4720
      %v4733 = vpack.c.bf16 %v4723, %v4722
      %v4734 = vpack.c.bf16 %v4725, %v4724
      %v4735 = vpack.c.bf16 %v4727, %v4726
      %v4736 = vld [vmem:[%s3 + $0xa0] sm:$0xff]
      %v4737 = vld [vmem:[%s3 + $0xa8] sm:$0xff]
      %v4738 = vld [vmem:[%s3 + $0xb0] sm:$0xff]
      %v4739 = vld [vmem:[%s3 + $0xb8] sm:$0xff]
      %v4744 = vunpack.c.l.b16 %v4736
      %v4745 = vunpack.c.h.b16 %v4736
      %v4746 = vunpack.c.l.b16 %v4737
      %v4747 = vunpack.c.h.b16 %v4737
      %v4748 = vunpack.c.l.b16 %v4738
      %v4749 = vunpack.c.h.b16 %v4738
      %v4750 = vunpack.c.l.b16 %v4739
      %v4751 = vunpack.c.h.b16 %v4739
      %v4752 = vpack.c.b16 %v4746, %v4744
      %v4753 = vpack.c.b16 %v4747, %v4745
      %v4754 = vpack.c.b16 %v4750, %v4748
      %v4755 = vpack.c.b16 %v4751, %v4749
      %v4761 = vsel %vm3051, %v4728, 0
      %v4764 = vsel %vm3051, %v4729, 0
      %v4767 = vsel %vm3051, %v4730, 0
      %v4770 = vsel %vm3051, %v4731, 0
      %v4773 = vsel %vm3051, %v4732, 0
      %v4776 = vsel %vm3051, %v4733, 0
      %v4779 = vsel %vm3051, %v4734, 0
      %v4782 = vsel %vm3051, %v4735, 0
      %4784 = vmatpush.bf16.msra.mxu0 0
      %4785 = vmatpush.bf16.msra.mxu0 0
      %4786 = vmatpush.bf16.msra.mxu0 0
      %4787 = vmatpush.bf16.msra.mxu0 0
      %4788 = vmatpush.bf16.msra.mxu0 0
      %4789 = vmatpush.bf16.msra.mxu0 0
      %4790 = vmatpush.bf16.msra.mxu0 %v4754
      %4791 = vmatpush.bf16.msra.mxu0 %v4752
      %4792 = vmatmul.bf16.gmra.mxu0 %v4761
      %v4793 = vpop.f32.mrf.mxu0
      %v4794 = vadd.f32 0.0, %v4793
      %v4795 = vpop.f32.mrf.mxu0
      %v4796 = vadd.f32 0.0, %v4795
      %4797 = vmatmul.bf16.gmra.mxu0 %v4764
      %v4798 = vpop.f32.mrf.mxu0
      %v4799 = vadd.f32 0.0, %v4798
      %v4800 = vpop.f32.mrf.mxu0
      %v4801 = vadd.f32 0.0, %v4800
      %4802 = vmatmul.bf16.gmra.mxu0 %v4767
      %v4803 = vpop.f32.mrf.mxu0
      %v4804 = vadd.f32 0.0, %v4803
      %v4805 = vpop.f32.mrf.mxu0
      %v4806 = vadd.f32 0.0, %v4805
      %4807 = vmatmul.bf16.gmra.mxu0 %v4770
      %v4808 = vpop.f32.mrf.mxu0
      %v4809 = vadd.f32 0.0, %v4808
      %v4810 = vpop.f32.mrf.mxu0
      %v4811 = vadd.f32 0.0, %v4810
      %4812 = vmatmul.bf16.gmra.mxu0 %v4773
      %v4813 = vpop.f32.mrf.mxu0
      %v4814 = vadd.f32 0.0, %v4813
      %v4815 = vpop.f32.mrf.mxu0
      %v4816 = vadd.f32 0.0, %v4815
      %4817 = vmatmul.bf16.gmra.mxu0 %v4776
      %v4818 = vpop.f32.mrf.mxu0
      %v4819 = vadd.f32 0.0, %v4818
      %v4820 = vpop.f32.mrf.mxu0
      %v4821 = vadd.f32 0.0, %v4820
      %4822 = vmatmul.bf16.gmra.mxu0 %v4779
      %v4823 = vpop.f32.mrf.mxu0
      %v4824 = vadd.f32 0.0, %v4823
      %v4825 = vpop.f32.mrf.mxu0
      %v4826 = vadd.f32 0.0, %v4825
      %4827 = vmatmul.bf16.gmra.mxu0 %v4782
      %v4828 = vpop.f32.mrf.mxu0
      %v4829 = vadd.f32 0.0, %v4828
      %v4830 = vpop.f32.mrf.mxu0
      %v4831 = vadd.f32 0.0, %v4830
      %4832 = vdwg.mxu0
      %4833 = vmatpush.bf16.msra.mxu0 0
      %4834 = vmatpush.bf16.msra.mxu0 0
      %4835 = vmatpush.bf16.msra.mxu0 0
      %4836 = vmatpush.bf16.msra.mxu0 0
      %4837 = vmatpush.bf16.msra.mxu0 0
      %4838 = vmatpush.bf16.msra.mxu0 0
      %4839 = vmatpush.bf16.msra.mxu0 %v4755
      %4840 = vmatpush.bf16.msra.mxu0 %v4753
      %4841 = vmatmul.bf16.gmra.mxu0 %v4761
      %v4842 = vpop.f32.mrf.mxu0
      %v4843 = vadd.f32 0.0, %v4842
      %v4844 = vpop.f32.mrf.mxu0
      %v4845 = vadd.f32 0.0, %v4844
      %4846 = vmatmul.bf16.gmra.mxu0 %v4764
      %v4847 = vpop.f32.mrf.mxu0
      %v4848 = vadd.f32 0.0, %v4847
      %v4849 = vpop.f32.mrf.mxu0
      %v4850 = vadd.f32 0.0, %v4849
      %4851 = vmatmul.bf16.gmra.mxu0 %v4767
      %v4852 = vpop.f32.mrf.mxu0
      %v4853 = vadd.f32 0.0, %v4852
      %v4854 = vpop.f32.mrf.mxu0
      %v4855 = vadd.f32 0.0, %v4854
      %4856 = vmatmul.bf16.gmra.mxu0 %v4770
      %v4857 = vpop.f32.mrf.mxu0
      %v4858 = vadd.f32 0.0, %v4857
      %v4859 = vpop.f32.mrf.mxu0
      %v4860 = vadd.f32 0.0, %v4859
      %4861 = vmatmul.bf16.gmra.mxu0 %v4773
      %v4862 = vpop.f32.mrf.mxu0
      %v4863 = vadd.f32 0.0, %v4862
      %v4864 = vpop.f32.mrf.mxu0
      %v4865 = vadd.f32 0.0, %v4864
      %4866 = vmatmul.bf16.gmra.mxu0 %v4776
      %v4867 = vpop.f32.mrf.mxu0
      %v4868 = vadd.f32 0.0, %v4867
      %v4869 = vpop.f32.mrf.mxu0
      %v4870 = vadd.f32 0.0, %v4869
      %4871 = vmatmul.bf16.gmra.mxu0 %v4779
      %v4872 = vpop.f32.mrf.mxu0
      %v4873 = vadd.f32 0.0, %v4872
      %v4874 = vpop.f32.mrf.mxu0
      %v4875 = vadd.f32 0.0, %v4874
      %4876 = vmatmul.bf16.gmra.mxu0 %v4782
      %v4877 = vpop.f32.mrf.mxu0
      %v4878 = vadd.f32 0.0, %v4877
      %v4879 = vpop.f32.mrf.mxu0
      %v4880 = vadd.f32 0.0, %v4879
      %4881 = vdwg.mxu0
      %v4882 = vadd.f32 %v4680, %v4794
      %v4883 = vadd.f32 %v4681, %v4843
      %v4884 = vadd.f32 %v4682, %v4796
      %v4885 = vadd.f32 %v4683, %v4845
      %v4886 = vadd.f32 %v4684, %v4799
      %v4887 = vadd.f32 %v4685, %v4848
      %v4888 = vadd.f32 %v4686, %v4801
      %v4889 = vadd.f32 %v4687, %v4850
      %v4890 = vadd.f32 %v4688, %v4804
      %v4891 = vadd.f32 %v4689, %v4853
      %v4892 = vadd.f32 %v4690, %v4806
      %v4893 = vadd.f32 %v4691, %v4855
      %v4894 = vadd.f32 %v4692, %v4809
      %v4895 = vadd.f32 %v4693, %v4858
      %v4896 = vadd.f32 %v4694, %v4811
      %v4897 = vadd.f32 %v4695, %v4860
      %v4898 = vadd.f32 %v4696, %v4814
      %v4899 = vadd.f32 %v4697, %v4863
      %v4900 = vadd.f32 %v4698, %v4816
      %v4901 = vadd.f32 %v4699, %v4865
      %v4902 = vadd.f32 %v4700, %v4819
      %v4903 = vadd.f32 %v4701, %v4868
      %v4904 = vadd.f32 %v4702, %v4821
      %v4905 = vadd.f32 %v4703, %v4870
      %v4906 = vadd.f32 %v4704, %v4824
      %v4907 = vadd.f32 %v4705, %v4873
      %v4908 = vadd.f32 %v4706, %v4826
      %v4909 = vadd.f32 %v4707, %v4875
      %v4910 = vadd.f32 %v4708, %v4829
      %v4911 = vadd.f32 %v4709, %v4878
      %v4912 = vadd.f32 %v4710, %v4831
      %v4913 = vadd.f32 %v4711, %v4880
      %s4914 = scalar_lea.vmem [#allocation2], 32
      %v4915 = vld [vmem:[%s4914] sm:$0xff]
      %v4916 = vld [vmem:[%s4914 + $0x10] sm:$0xff]
      %v4917 = vld [vmem:[%s4914 + $0x20] sm:$0xff]
      %v4918 = vld [vmem:[%s4914 + $0x30] sm:$0xff]
      %v4919 = vld [vmem:[%s4914 + $0x40] sm:$0xff]
      %v4920 = vld [vmem:[%s4914 + $0x50] sm:$0xff]
      %v4921 = vld [vmem:[%s4914 + $0x60] sm:$0xff]
      %v4922 = vld [vmem:[%s4914 + $0x70] sm:$0xff]
      %v4923 = vld [vmem:[%s4914 + $0xa0] sm:$0xff]
      %v4924 = vld [vmem:[%s4914 + $0xb0] sm:$0xff]
      %v4925 = vld [vmem:[%s4914 + $0xc0] sm:$0xff]
      %v4926 = vld [vmem:[%s4914 + $0xd0] sm:$0xff]
      %v4927 = vld [vmem:[%s4914 + $0xe0] sm:$0xff]
      %v4928 = vld [vmem:[%s4914 + $0xf0] sm:$0xff]
      %v4929 = vld [vmem:[%s4914 + $0x100] sm:$0xff]
      %v4930 = vld [vmem:[%s4914 + $0x110] sm:$0xff]
      %v4931 = vpack.c.bf16 %v4916, %v4915
      %v4932 = vpack.c.bf16 %v4918, %v4917
      %v4933 = vpack.c.bf16 %v4920, %v4919
      %v4934 = vpack.c.bf16 %v4922, %v4921
      %v4935 = vpack.c.bf16 %v4924, %v4923
      %v4936 = vpack.c.bf16 %v4926, %v4925
      %v4937 = vpack.c.bf16 %v4928, %v4927
      %v4938 = vpack.c.bf16 %v4930, %v4929
      %v4939 = vld [vmem:[%s3 + $0xc0] sm:$0xff]
      %v4940 = vld [vmem:[%s3 + $0xc8] sm:$0xff]
      %v4941 = vld [vmem:[%s3 + $0xd0] sm:$0xff]
      %v4942 = vld [vmem:[%s3 + $0xd8] sm:$0xff]
      %v4947 = vunpack.c.l.b16 %v4939
      %v4948 = vunpack.c.h.b16 %v4939
      %v4949 = vunpack.c.l.b16 %v4940
      %v4950 = vunpack.c.h.b16 %v4940
      %v4951 = vunpack.c.l.b16 %v4941
      %v4952 = vunpack.c.h.b16 %v4941
      %v4953 = vunpack.c.l.b16 %v4942
      %v4954 = vunpack.c.h.b16 %v4942
      %v4955 = vpack.c.b16 %v4949, %v4947
      %v4956 = vpack.c.b16 %v4950, %v4948
      %v4957 = vpack.c.b16 %v4953, %v4951
      %v4958 = vpack.c.b16 %v4954, %v4952
      %v4964 = vsel %vm3051, %v4931, 0
      %v4967 = vsel %vm3051, %v4932, 0
      %v4970 = vsel %vm3051, %v4933, 0
      %v4973 = vsel %vm3051, %v4934, 0
      %v4976 = vsel %vm3051, %v4935, 0
      %v4979 = vsel %vm3051, %v4936, 0
      %v4982 = vsel %vm3051, %v4937, 0
      %v4985 = vsel %vm3051, %v4938, 0
      %4987 = vmatpush.bf16.msra.mxu0 0
      %4988 = vmatpush.bf16.msra.mxu0 0
      %4989 = vmatpush.bf16.msra.mxu0 0
      %4990 = vmatpush.bf16.msra.mxu0 0
      %4991 = vmatpush.bf16.msra.mxu0 0
      %4992 = vmatpush.bf16.msra.mxu0 0
      %4993 = vmatpush.bf16.msra.mxu0 %v4957
      %4994 = vmatpush.bf16.msra.mxu0 %v4955
      %4995 = vmatmul.bf16.gmra.mxu0 %v4964
      %v4996 = vpop.f32.mrf.mxu0
      %v4997 = vadd.f32 0.0, %v4996
      %v4998 = vpop.f32.mrf.mxu0
      %v4999 = vadd.f32 0.0, %v4998
      %5000 = vmatmul.bf16.gmra.mxu0 %v4967
      %v5001 = vpop.f32.mrf.mxu0
      %v5002 = vadd.f32 0.0, %v5001
      %v5003 = vpop.f32.mrf.mxu0
      %v5004 = vadd.f32 0.0, %v5003
      %5005 = vmatmul.bf16.gmra.mxu0 %v4970
      %v5006 = vpop.f32.mrf.mxu0
      %v5007 = vadd.f32 0.0, %v5006
      %v5008 = vpop.f32.mrf.mxu0
      %v5009 = vadd.f32 0.0, %v5008
      %5010 = vmatmul.bf16.gmra.mxu0 %v4973
      %v5011 = vpop.f32.mrf.mxu0
      %v5012 = vadd.f32 0.0, %v5011
      %v5013 = vpop.f32.mrf.mxu0
      %v5014 = vadd.f32 0.0, %v5013
      %5015 = vmatmul.bf16.gmra.mxu0 %v4976
      %v5016 = vpop.f32.mrf.mxu0
      %v5017 = vadd.f32 0.0, %v5016
      %v5018 = vpop.f32.mrf.mxu0
      %v5019 = vadd.f32 0.0, %v5018
      %5020 = vmatmul.bf16.gmra.mxu0 %v4979
      %v5021 = vpop.f32.mrf.mxu0
      %v5022 = vadd.f32 0.0, %v5021
      %v5023 = vpop.f32.mrf.mxu0
      %v5024 = vadd.f32 0.0, %v5023
      %5025 = vmatmul.bf16.gmra.mxu0 %v4982
      %v5026 = vpop.f32.mrf.mxu0
      %v5027 = vadd.f32 0.0, %v5026
      %v5028 = vpop.f32.mrf.mxu0
      %v5029 = vadd.f32 0.0, %v5028
      %5030 = vmatmul.bf16.gmra.mxu0 %v4985
      %v5031 = vpop.f32.mrf.mxu0
      %v5032 = vadd.f32 0.0, %v5031
      %v5033 = vpop.f32.mrf.mxu0
      %v5034 = vadd.f32 0.0, %v5033
      %5035 = vdwg.mxu0
      %5036 = vmatpush.bf16.msra.mxu0 0
      %5037 = vmatpush.bf16.msra.mxu0 0
      %5038 = vmatpush.bf16.msra.mxu0 0
      %5039 = vmatpush.bf16.msra.mxu0 0
      %5040 = vmatpush.bf16.msra.mxu0 0
      %5041 = vmatpush.bf16.msra.mxu0 0
      %5042 = vmatpush.bf16.msra.mxu0 %v4958
      %5043 = vmatpush.bf16.msra.mxu0 %v4956
      %5044 = vmatmul.bf16.gmra.mxu0 %v4964
      %v5045 = vpop.f32.mrf.mxu0
      %v5046 = vadd.f32 0.0, %v5045
      %v5047 = vpop.f32.mrf.mxu0
      %v5048 = vadd.f32 0.0, %v5047
      %5049 = vmatmul.bf16.gmra.mxu0 %v4967
      %v5050 = vpop.f32.mrf.mxu0
      %v5051 = vadd.f32 0.0, %v5050
      %v5052 = vpop.f32.mrf.mxu0
      %v5053 = vadd.f32 0.0, %v5052
      %5054 = vmatmul.bf16.gmra.mxu0 %v4970
      %v5055 = vpop.f32.mrf.mxu0
      %v5056 = vadd.f32 0.0, %v5055
      %v5057 = vpop.f32.mrf.mxu0
      %v5058 = vadd.f32 0.0, %v5057
      %5059 = vmatmul.bf16.gmra.mxu0 %v4973
      %v5060 = vpop.f32.mrf.mxu0
      %v5061 = vadd.f32 0.0, %v5060
      %v5062 = vpop.f32.mrf.mxu0
      %v5063 = vadd.f32 0.0, %v5062
      %5064 = vmatmul.bf16.gmra.mxu0 %v4976
      %v5065 = vpop.f32.mrf.mxu0
      %v5066 = vadd.f32 0.0, %v5065
      %v5067 = vpop.f32.mrf.mxu0
      %v5068 = vadd.f32 0.0, %v5067
      %5069 = vmatmul.bf16.gmra.mxu0 %v4979
      %v5070 = vpop.f32.mrf.mxu0
      %v5071 = vadd.f32 0.0, %v5070
      %v5072 = vpop.f32.mrf.mxu0
      %v5073 = vadd.f32 0.0, %v5072
      %5074 = vmatmul.bf16.gmra.mxu0 %v4982
      %v5075 = vpop.f32.mrf.mxu0
      %v5076 = vadd.f32 0.0, %v5075
      %v5077 = vpop.f32.mrf.mxu0
      %v5078 = vadd.f32 0.0, %v5077
      %5079 = vmatmul.bf16.gmra.mxu0 %v4985
      %v5080 = vpop.f32.mrf.mxu0
      %v5081 = vadd.f32 0.0, %v5080
      %v5082 = vpop.f32.mrf.mxu0
      %v5083 = vadd.f32 0.0, %v5082
      %5084 = vdwg.mxu0
      %v5085 = vadd.f32 %v4882, %v4997
      %v5086 = vadd.f32 %v4883, %v5046
      %v5087 = vadd.f32 %v4884, %v4999
      %v5088 = vadd.f32 %v4885, %v5048
      %v5089 = vadd.f32 %v4886, %v5002
      %v5090 = vadd.f32 %v4887, %v5051
      %v5091 = vadd.f32 %v4888, %v5004
      %v5092 = vadd.f32 %v4889, %v5053
      %v5093 = vadd.f32 %v4890, %v5007
      %v5094 = vadd.f32 %v4891, %v5056
      %v5095 = vadd.f32 %v4892, %v5009
      %v5096 = vadd.f32 %v4893, %v5058
      %v5097 = vadd.f32 %v4894, %v5012
      %v5098 = vadd.f32 %v4895, %v5061
      %v5099 = vadd.f32 %v4896, %v5014
      %v5100 = vadd.f32 %v4897, %v5063
      %v5101 = vadd.f32 %v4898, %v5017
      %v5102 = vadd.f32 %v4899, %v5066
      %v5103 = vadd.f32 %v4900, %v5019
      %v5104 = vadd.f32 %v4901, %v5068
      %v5105 = vadd.f32 %v4902, %v5022
      %v5106 = vadd.f32 %v4903, %v5071
      %v5107 = vadd.f32 %v4904, %v5024
      %v5108 = vadd.f32 %v4905, %v5073
      %v5109 = vadd.f32 %v4906, %v5027
      %v5110 = vadd.f32 %v4907, %v5076
      %v5111 = vadd.f32 %v4908, %v5029
      %v5112 = vadd.f32 %v4909, %v5078
      %v5113 = vadd.f32 %v4910, %v5032
      %v5114 = vadd.f32 %v4911, %v5081
      %v5115 = vadd.f32 %v4912, %v5034
      %v5116 = vadd.f32 %v4913, %v5083
      %v5117 = vld [vmem:[%s4914 + $0x1] sm:$0xff]
      %v5118 = vld [vmem:[%s4914 + $0x11] sm:$0xff]
      %v5119 = vld [vmem:[%s4914 + $0x21] sm:$0xff]
      %v5120 = vld [vmem:[%s4914 + $0x31] sm:$0xff]
      %v5121 = vld [vmem:[%s4914 + $0x41] sm:$0xff]
      %v5122 = vld [vmem:[%s4914 + $0x51] sm:$0xff]
      %v5123 = vld [vmem:[%s4914 + $0x61] sm:$0xff]
      %v5124 = vld [vmem:[%s4914 + $0x71] sm:$0xff]
      %v5125 = vld [vmem:[%s4914 + $0xa1] sm:$0xff]
      %v5126 = vld [vmem:[%s4914 + $0xb1] sm:$0xff]
      %v5127 = vld [vmem:[%s4914 + $0xc1] sm:$0xff]
      %v5128 = vld [vmem:[%s4914 + $0xd1] sm:$0xff]
      %v5129 = vld [vmem:[%s4914 + $0xe1] sm:$0xff]
      %v5130 = vld [vmem:[%s4914 + $0xf1] sm:$0xff]
      %v5131 = vld [vmem:[%s4914 + $0x101] sm:$0xff]
      %v5132 = vld [vmem:[%s4914 + $0x111] sm:$0xff]
      %v5133 = vpack.c.bf16 %v5118, %v5117
      %v5134 = vpack.c.bf16 %v5120, %v5119
      %v5135 = vpack.c.bf16 %v5122, %v5121
      %v5136 = vpack.c.bf16 %v5124, %v5123
      %v5137 = vpack.c.bf16 %v5126, %v5125
      %v5138 = vpack.c.bf16 %v5128, %v5127
      %v5139 = vpack.c.bf16 %v5130, %v5129
      %v5140 = vpack.c.bf16 %v5132, %v5131
      %v5141 = vld [vmem:[%s3 + $0xe0] sm:$0xff]
      %v5142 = vld [vmem:[%s3 + $0xe8] sm:$0xff]
      %v5143 = vld [vmem:[%s3 + $0xf0] sm:$0xff]
      %v5144 = vld [vmem:[%s3 + $0xf8] sm:$0xff]
      %v5149 = vunpack.c.l.b16 %v5141
      %v5150 = vunpack.c.h.b16 %v5141
      %v5151 = vunpack.c.l.b16 %v5142
      %v5152 = vunpack.c.h.b16 %v5142
      %v5153 = vunpack.c.l.b16 %v5143
      %v5154 = vunpack.c.h.b16 %v5143
      %v5155 = vunpack.c.l.b16 %v5144
      %v5156 = vunpack.c.h.b16 %v5144
      %v5157 = vpack.c.b16 %v5151, %v5149
      %v5158 = vpack.c.b16 %v5152, %v5150
      %v5159 = vpack.c.b16 %v5155, %v5153
      %v5160 = vpack.c.b16 %v5156, %v5154
      %v5166 = vsel %vm3051, %v5133, 0
      %v5169 = vsel %vm3051, %v5134, 0
      %v5172 = vsel %vm3051, %v5135, 0
      %v5175 = vsel %vm3051, %v5136, 0
      %v5178 = vsel %vm3051, %v5137, 0
      %v5181 = vsel %vm3051, %v5138, 0
      %v5184 = vsel %vm3051, %v5139, 0
      %v5187 = vsel %vm3051, %v5140, 0
      %5189 = vmatpush.bf16.msra.mxu0 0
      %5190 = vmatpush.bf16.msra.mxu0 0
      %5191 = vmatpush.bf16.msra.mxu0 0
      %5192 = vmatpush.bf16.msra.mxu0 0
      %5193 = vmatpush.bf16.msra.mxu0 0
      %5194 = vmatpush.bf16.msra.mxu0 0
      %5195 = vmatpush.bf16.msra.mxu0 %v5159
      %5196 = vmatpush.bf16.msra.mxu0 %v5157
      %5197 = vmatmul.bf16.gmra.mxu0 %v5166
      %v5198 = vpop.f32.mrf.mxu0
      %v5199 = vadd.f32 0.0, %v5198
      %v5200 = vpop.f32.mrf.mxu0
      %v5201 = vadd.f32 0.0, %v5200
      %5202 = vmatmul.bf16.gmra.mxu0 %v5169
      %v5203 = vpop.f32.mrf.mxu0
      %v5204 = vadd.f32 0.0, %v5203
      %v5205 = vpop.f32.mrf.mxu0
      %v5206 = vadd.f32 0.0, %v5205
      %5207 = vmatmul.bf16.gmra.mxu0 %v5172
      %v5208 = vpop.f32.mrf.mxu0
      %v5209 = vadd.f32 0.0, %v5208
      %v5210 = vpop.f32.mrf.mxu0
      %v5211 = vadd.f32 0.0, %v5210
      %5212 = vmatmul.bf16.gmra.mxu0 %v5175
      %v5213 = vpop.f32.mrf.mxu0
      %v5214 = vadd.f32 0.0, %v5213
      %v5215 = vpop.f32.mrf.mxu0
      %v5216 = vadd.f32 0.0, %v5215
      %5217 = vmatmul.bf16.gmra.mxu0 %v5178
      %v5218 = vpop.f32.mrf.mxu0
      %v5219 = vadd.f32 0.0, %v5218
      %v5220 = vpop.f32.mrf.mxu0
      %v5221 = vadd.f32 0.0, %v5220
      %5222 = vmatmul.bf16.gmra.mxu0 %v5181
      %v5223 = vpop.f32.mrf.mxu0
      %v5224 = vadd.f32 0.0, %v5223
      %v5225 = vpop.f32.mrf.mxu0
      %v5226 = vadd.f32 0.0, %v5225
      %5227 = vmatmul.bf16.gmra.mxu0 %v5184
      %v5228 = vpop.f32.mrf.mxu0
      %v5229 = vadd.f32 0.0, %v5228
      %v5230 = vpop.f32.mrf.mxu0
      %v5231 = vadd.f32 0.0, %v5230
      %5232 = vmatmul.bf16.gmra.mxu0 %v5187
      %v5233 = vpop.f32.mrf.mxu0
      %v5234 = vadd.f32 0.0, %v5233
      %v5235 = vpop.f32.mrf.mxu0
      %v5236 = vadd.f32 0.0, %v5235
      %5237 = vdwg.mxu0
      %5238 = vmatpush.bf16.msra.mxu0 0
      %5239 = vmatpush.bf16.msra.mxu0 0
      %5240 = vmatpush.bf16.msra.mxu0 0
      %5241 = vmatpush.bf16.msra.mxu0 0
      %5242 = vmatpush.bf16.msra.mxu0 0
      %5243 = vmatpush.bf16.msra.mxu0 0
      %5244 = vmatpush.bf16.msra.mxu0 %v5160
      %5245 = vmatpush.bf16.msra.mxu0 %v5158
      %5246 = vmatmul.bf16.gmra.mxu0 %v5166
      %v5247 = vpop.f32.mrf.mxu0
      %v5248 = vadd.f32 0.0, %v5247
      %v5249 = vpop.f32.mrf.mxu0
      %v5250 = vadd.f32 0.0, %v5249
      %5251 = vmatmul.bf16.gmra.mxu0 %v5169
      %v5252 = vpop.f32.mrf.mxu0
      %v5253 = vadd.f32 0.0, %v5252
      %v5254 = vpop.f32.mrf.mxu0
      %v5255 = vadd.f32 0.0, %v5254
      %5256 = vmatmul.bf16.gmra.mxu0 %v5172
      %v5257 = vpop.f32.mrf.mxu0
      %v5258 = vadd.f32 0.0, %v5257
      %v5259 = vpop.f32.mrf.mxu0
      %v5260 = vadd.f32 0.0, %v5259
      %5261 = vmatmul.bf16.gmra.mxu0 %v5175
      %v5262 = vpop.f32.mrf.mxu0
      %v5263 = vadd.f32 0.0, %v5262
      %v5264 = vpop.f32.mrf.mxu0
      %v5265 = vadd.f32 0.0, %v5264
      %5266 = vmatmul.bf16.gmra.mxu0 %v5178
      %v5267 = vpop.f32.mrf.mxu0
      %v5268 = vadd.f32 0.0, %v5267
      %v5269 = vpop.f32.mrf.mxu0
      %v5270 = vadd.f32 0.0, %v5269
      %5271 = vmatmul.bf16.gmra.mxu0 %v5181
      %v5272 = vpop.f32.mrf.mxu0
      %v5273 = vadd.f32 0.0, %v5272
      %v5274 = vpop.f32.mrf.mxu0
      %v5275 = vadd.f32 0.0, %v5274
      %5276 = vmatmul.bf16.gmra.mxu0 %v5184
      %v5277 = vpop.f32.mrf.mxu0
      %v5278 = vadd.f32 0.0, %v5277
      %v5279 = vpop.f32.mrf.mxu0
      %v5280 = vadd.f32 0.0, %v5279
      %5281 = vmatmul.bf16.gmra.mxu0 %v5187
      %v5282 = vpop.f32.mrf.mxu0
      %v5283 = vadd.f32 0.0, %v5282
      %v5284 = vpop.f32.mrf.mxu0
      %v5285 = vadd.f32 0.0, %v5284
      %5286 = vdwg.mxu0
      %v5287 = vadd.f32 %v5085, %v5199
      %v5288 = vadd.f32 %v5086, %v5248
      %v5289 = vadd.f32 %v5087, %v5201
      %v5290 = vadd.f32 %v5088, %v5250
      %v5291 = vadd.f32 %v5089, %v5204
      %v5292 = vadd.f32 %v5090, %v5253
      %v5293 = vadd.f32 %v5091, %v5206
      %v5294 = vadd.f32 %v5092, %v5255
      %v5295 = vadd.f32 %v5093, %v5209
      %v5296 = vadd.f32 %v5094, %v5258
      %v5297 = vadd.f32 %v5095, %v5211
      %v5298 = vadd.f32 %v5096, %v5260
      %v5299 = vadd.f32 %v5097, %v5214
      %v5300 = vadd.f32 %v5098, %v5263
      %v5301 = vadd.f32 %v5099, %v5216
      %v5302 = vadd.f32 %v5100, %v5265
      %v5303 = vadd.f32 %v5101, %v5219
      %v5304 = vadd.f32 %v5102, %v5268
      %v5305 = vadd.f32 %v5103, %v5221
      %v5306 = vadd.f32 %v5104, %v5270
      %v5307 = vadd.f32 %v5105, %v5224
      %v5308 = vadd.f32 %v5106, %v5273
      %v5309 = vadd.f32 %v5107, %v5226
      %v5310 = vadd.f32 %v5108, %v5275
      %v5311 = vadd.f32 %v5109, %v5229
      %v5312 = vadd.f32 %v5110, %v5278
      %v5313 = vadd.f32 %v5111, %v5231
      %v5314 = vadd.f32 %v5112, %v5280
      %v5315 = vadd.f32 %v5113, %v5234
      %v5316 = vadd.f32 %v5114, %v5283
      %v5317 = vadd.f32 %v5115, %v5236
      %v5318 = vadd.f32 %v5116, %v5285
      %v5319 = vld [vmem:[%s4914 + $0x2] sm:$0xff]
      %v5320 = vld [vmem:[%s4914 + $0x12] sm:$0xff]
      %v5321 = vld [vmem:[%s4914 + $0x22] sm:$0xff]
      %v5322 = vld [vmem:[%s4914 + $0x32] sm:$0xff]
      %v5323 = vld [vmem:[%s4914 + $0x42] sm:$0xff]
      %v5324 = vld [vmem:[%s4914 + $0x52] sm:$0xff]
      %v5325 = vld [vmem:[%s4914 + $0x62] sm:$0xff]
      %v5326 = vld [vmem:[%s4914 + $0x72] sm:$0xff]
      %v5327 = vld [vmem:[%s4914 + $0xa2] sm:$0xff]
      %v5328 = vld [vmem:[%s4914 + $0xb2] sm:$0xff]
      %v5329 = vld [vmem:[%s4914 + $0xc2] sm:$0xff]
      %v5330 = vld [vmem:[%s4914 + $0xd2] sm:$0xff]
      %v5331 = vld [vmem:[%s4914 + $0xe2] sm:$0xff]
      %v5332 = vld [vmem:[%s4914 + $0xf2] sm:$0xff]
      %v5333 = vld [vmem:[%s4914 + $0x102] sm:$0xff]
      %v5334 = vld [vmem:[%s4914 + $0x112] sm:$0xff]
      %v5335 = vpack.c.bf16 %v5320, %v5319
      %v5336 = vpack.c.bf16 %v5322, %v5321
      %v5337 = vpack.c.bf16 %v5324, %v5323
      %v5338 = vpack.c.bf16 %v5326, %v5325
      %v5339 = vpack.c.bf16 %v5328, %v5327
      %v5340 = vpack.c.bf16 %v5330, %v5329
      %v5341 = vpack.c.bf16 %v5332, %v5331
      %v5342 = vpack.c.bf16 %v5334, %v5333
      %v5343 = vld [vmem:[%s3 + $0x100] sm:$0xff]
      %v5344 = vld [vmem:[%s3 + $0x108] sm:$0xff]
      %v5345 = vld [vmem:[%s3 + $0x110] sm:$0xff]
      %v5346 = vld [vmem:[%s3 + $0x118] sm:$0xff]
      %v5351 = vunpack.c.l.b16 %v5343
      %v5352 = vunpack.c.h.b16 %v5343
      %v5353 = vunpack.c.l.b16 %v5344
      %v5354 = vunpack.c.h.b16 %v5344
      %v5355 = vunpack.c.l.b16 %v5345
      %v5356 = vunpack.c.h.b16 %v5345
      %v5357 = vunpack.c.l.b16 %v5346
      %v5358 = vunpack.c.h.b16 %v5346
      %v5359 = vpack.c.b16 %v5353, %v5351
      %v5360 = vpack.c.b16 %v5354, %v5352
      %v5361 = vpack.c.b16 %v5357, %v5355
      %v5362 = vpack.c.b16 %v5358, %v5356
      %v5368 = vsel %vm3051, %v5335, 0
      %v5371 = vsel %vm3051, %v5336, 0
      %v5374 = vsel %vm3051, %v5337, 0
      %v5377 = vsel %vm3051, %v5338, 0
      %v5380 = vsel %vm3051, %v5339, 0
      %v5383 = vsel %vm3051, %v5340, 0
      %v5386 = vsel %vm3051, %v5341, 0
      %v5389 = vsel %vm3051, %v5342, 0
      %5391 = vmatpush.bf16.msra.mxu0 0
      %5392 = vmatpush.bf16.msra.mxu0 0
      %5393 = vmatpush.bf16.msra.mxu0 0
      %5394 = vmatpush.bf16.msra.mxu0 0
      %5395 = vmatpush.bf16.msra.mxu0 0
      %5396 = vmatpush.bf16.msra.mxu0 0
      %5397 = vmatpush.bf16.msra.mxu0 %v5361
      %5398 = vmatpush.bf16.msra.mxu0 %v5359
      %5399 = vmatmul.bf16.gmra.mxu0 %v5368
      %v5400 = vpop.f32.mrf.mxu0
      %v5401 = vadd.f32 0.0, %v5400
      %v5402 = vpop.f32.mrf.mxu0
      %v5403 = vadd.f32 0.0, %v5402
      %5404 = vmatmul.bf16.gmra.mxu0 %v5371
      %v5405 = vpop.f32.mrf.mxu0
      %v5406 = vadd.f32 0.0, %v5405
      %v5407 = vpop.f32.mrf.mxu0
      %v5408 = vadd.f32 0.0, %v5407
      %5409 = vmatmul.bf16.gmra.mxu0 %v5374
      %v5410 = vpop.f32.mrf.mxu0
      %v5411 = vadd.f32 0.0, %v5410
      %v5412 = vpop.f32.mrf.mxu0
      %v5413 = vadd.f32 0.0, %v5412
      %5414 = vmatmul.bf16.gmra.mxu0 %v5377
      %v5415 = vpop.f32.mrf.mxu0
      %v5416 = vadd.f32 0.0, %v5415
      %v5417 = vpop.f32.mrf.mxu0
      %v5418 = vadd.f32 0.0, %v5417
      %5419 = vmatmul.bf16.gmra.mxu0 %v5380
      %v5420 = vpop.f32.mrf.mxu0
      %v5421 = vadd.f32 0.0, %v5420
      %v5422 = vpop.f32.mrf.mxu0
      %v5423 = vadd.f32 0.0, %v5422
      %5424 = vmatmul.bf16.gmra.mxu0 %v5383
      %v5425 = vpop.f32.mrf.mxu0
      %v5426 = vadd.f32 0.0, %v5425
      %v5427 = vpop.f32.mrf.mxu0
      %v5428 = vadd.f32 0.0, %v5427
      %5429 = vmatmul.bf16.gmra.mxu0 %v5386
      %v5430 = vpop.f32.mrf.mxu0
      %v5431 = vadd.f32 0.0, %v5430
      %v5432 = vpop.f32.mrf.mxu0
      %v5433 = vadd.f32 0.0, %v5432
      %5434 = vmatmul.bf16.gmra.mxu0 %v5389
      %v5435 = vpop.f32.mrf.mxu0
      %v5436 = vadd.f32 0.0, %v5435
      %v5437 = vpop.f32.mrf.mxu0
      %v5438 = vadd.f32 0.0, %v5437
      %5439 = vdwg.mxu0
      %5440 = vmatpush.bf16.msra.mxu0 0
      %5441 = vmatpush.bf16.msra.mxu0 0
      %5442 = vmatpush.bf16.msra.mxu0 0
      %5443 = vmatpush.bf16.msra.mxu0 0
      %5444 = vmatpush.bf16.msra.mxu0 0
      %5445 = vmatpush.bf16.msra.mxu0 0
      %5446 = vmatpush.bf16.msra.mxu0 %v5362
      %5447 = vmatpush.bf16.msra.mxu0 %v5360
      %5448 = vmatmul.bf16.gmra.mxu0 %v5368
      %v5449 = vpop.f32.mrf.mxu0
      %v5450 = vadd.f32 0.0, %v5449
      %v5451 = vpop.f32.mrf.mxu0
      %v5452 = vadd.f32 0.0, %v5451
      %5453 = vmatmul.bf16.gmra.mxu0 %v5371
      %v5454 = vpop.f32.mrf.mxu0
      %v5455 = vadd.f32 0.0, %v5454
      %v5456 = vpop.f32.mrf.mxu0
      %v5457 = vadd.f32 0.0, %v5456
      %5458 = vmatmul.bf16.gmra.mxu0 %v5374
      %v5459 = vpop.f32.mrf.mxu0
      %v5460 = vadd.f32 0.0, %v5459
      %v5461 = vpop.f32.mrf.mxu0
      %v5462 = vadd.f32 0.0, %v5461
      %5463 = vmatmul.bf16.gmra.mxu0 %v5377
      %v5464 = vpop.f32.mrf.mxu0
      %v5465 = vadd.f32 0.0, %v5464
      %v5466 = vpop.f32.mrf.mxu0
      %v5467 = vadd.f32 0.0, %v5466
      %5468 = vmatmul.bf16.gmra.mxu0 %v5380
      %v5469 = vpop.f32.mrf.mxu0
      %v5470 = vadd.f32 0.0, %v5469
      %v5471 = vpop.f32.mrf.mxu0
      %v5472 = vadd.f32 0.0, %v5471
      %5473 = vmatmul.bf16.gmra.mxu0 %v5383
      %v5474 = vpop.f32.mrf.mxu0
      %v5475 = vadd.f32 0.0, %v5474
      %v5476 = vpop.f32.mrf.mxu0
      %v5477 = vadd.f32 0.0, %v5476
      %5478 = vmatmul.bf16.gmra.mxu0 %v5386
      %v5479 = vpop.f32.mrf.mxu0
      %v5480 = vadd.f32 0.0, %v5479
      %v5481 = vpop.f32.mrf.mxu0
      %v5482 = vadd.f32 0.0, %v5481
      %5483 = vmatmul.bf16.gmra.mxu0 %v5389
      %v5484 = vpop.f32.mrf.mxu0
      %v5485 = vadd.f32 0.0, %v5484
      %v5486 = vpop.f32.mrf.mxu0
      %v5487 = vadd.f32 0.0, %v5486
      %5488 = vdwg.mxu0
      %v5489 = vadd.f32 %v5287, %v5401
      %v5490 = vadd.f32 %v5288, %v5450
      %v5491 = vadd.f32 %v5289, %v5403
      %v5492 = vadd.f32 %v5290, %v5452
      %v5493 = vadd.f32 %v5291, %v5406
      %v5494 = vadd.f32 %v5292, %v5455
      %v5495 = vadd.f32 %v5293, %v5408
      %v5496 = vadd.f32 %v5294, %v5457
      %v5497 = vadd.f32 %v5295, %v5411
      %v5498 = vadd.f32 %v5296, %v5460
      %v5499 = vadd.f32 %v5297, %v5413
      %v5500 = vadd.f32 %v5298, %v5462
      %v5501 = vadd.f32 %v5299, %v5416
      %v5502 = vadd.f32 %v5300, %v5465
      %v5503 = vadd.f32 %v5301, %v5418
      %v5504 = vadd.f32 %v5302, %v5467
      %v5505 = vadd.f32 %v5303, %v5421
      %v5506 = vadd.f32 %v5304, %v5470
      %v5507 = vadd.f32 %v5305, %v5423
      %v5508 = vadd.f32 %v5306, %v5472
      %v5509 = vadd.f32 %v5307, %v5426
      %v5510 = vadd.f32 %v5308, %v5475
      %v5511 = vadd.f32 %v5309, %v5428
      %v5512 = vadd.f32 %v5310, %v5477
      %v5513 = vadd.f32 %v5311, %v5431
      %v5514 = vadd.f32 %v5312, %v5480
      %v5515 = vadd.f32 %v5313, %v5433
      %v5516 = vadd.f32 %v5314, %v5482
      %v5517 = vadd.f32 %v5315, %v5436
      %v5518 = vadd.f32 %v5316, %v5485
      %v5519 = vadd.f32 %v5317, %v5438
      %v5520 = vadd.f32 %v5318, %v5487
      %v5521 = vld [vmem:[%s4] sm:$0x3]
      %v5523 = vperm.slane %v5521, 0
      %v5524 = vperm.slane %v5521, 1
      %v5527 = vadd.f32 %v5489, %v5523
      %v5528 = vadd.f32 %v5490, %v5524
      %v5529 = vadd.f32 %v5491, %v5523
      %v5530 = vadd.f32 %v5492, %v5524
      %v5531 = vadd.f32 %v5493, %v5523
      %v5532 = vadd.f32 %v5494, %v5524
      %v5533 = vadd.f32 %v5495, %v5523
      %v5534 = vadd.f32 %v5496, %v5524
      %v5535 = vadd.f32 %v5497, %v5523
      %v5536 = vadd.f32 %v5498, %v5524
      %v5537 = vadd.f32 %v5499, %v5523
      %v5538 = vadd.f32 %v5500, %v5524
      %v5539 = vadd.f32 %v5501, %v5523
      %v5540 = vadd.f32 %v5502, %v5524
      %v5541 = vadd.f32 %v5503, %v5523
      %v5542 = vadd.f32 %v5504, %v5524
      %v5543 = vadd.f32 %v5505, %v5523
      %v5544 = vadd.f32 %v5506, %v5524
      %v5545 = vadd.f32 %v5507, %v5523
      %v5546 = vadd.f32 %v5508, %v5524
      %v5547 = vadd.f32 %v5509, %v5523
      %v5548 = vadd.f32 %v5510, %v5524
      %v5549 = vadd.f32 %v5511, %v5523
      %v5550 = vadd.f32 %v5512, %v5524
      %v5551 = vadd.f32 %v5513, %v5523
      %v5552 = vadd.f32 %v5514, %v5524
      %v5553 = vadd.f32 %v5515, %v5523
      %v5554 = vadd.f32 %v5516, %v5524
      %v5555 = vadd.f32 %v5517, %v5523
      %v5556 = vadd.f32 %v5518, %v5524
      %v5557 = vadd.f32 %v5519, %v5523
      %v5558 = vadd.f32 %v5520, %v5524
      %v5559 = vmax.f32 %v5527, 0.0
      %v5560 = vmax.f32 %v5528, 0.0
      %v5561 = vmax.f32 %v5529, 0.0
      %v5562 = vmax.f32 %v5530, 0.0
      %v5563 = vmax.f32 %v5531, 0.0
      %v5564 = vmax.f32 %v5532, 0.0
      %v5565 = vmax.f32 %v5533, 0.0
      %v5566 = vmax.f32 %v5534, 0.0
      %v5567 = vmax.f32 %v5535, 0.0
      %v5568 = vmax.f32 %v5536, 0.0
      %v5569 = vmax.f32 %v5537, 0.0
      %v5570 = vmax.f32 %v5538, 0.0
      %v5571 = vmax.f32 %v5539, 0.0
      %v5572 = vmax.f32 %v5540, 0.0
      %v5573 = vmax.f32 %v5541, 0.0
      %v5574 = vmax.f32 %v5542, 0.0
      %v5575 = vmax.f32 %v5543, 0.0
      %v5576 = vmax.f32 %v5544, 0.0
      %v5577 = vmax.f32 %v5545, 0.0
      %v5578 = vmax.f32 %v5546, 0.0
      %v5579 = vmax.f32 %v5547, 0.0
      %v5580 = vmax.f32 %v5548, 0.0
      %v5581 = vmax.f32 %v5549, 0.0
      %v5582 = vmax.f32 %v5550, 0.0
      %v5583 = vmax.f32 %v5551, 0.0
      %v5584 = vmax.f32 %v5552, 0.0
      %v5585 = vmax.f32 %v5553, 0.0
      %v5586 = vmax.f32 %v5554, 0.0
      %v5587 = vmax.f32 %v5555, 0.0
      %v5588 = vmax.f32 %v5556, 0.0
      %v5589 = vmax.f32 %v5557, 0.0
      %v5590 = vmax.f32 %v5558, 0.0
      %v5591 = vadd.f32 %v5559, %v5561
      %v5592 = vadd.f32 %v5591, %v5563
      %v5593 = vadd.f32 %v5592, %v5565
      %v5594 = vadd.f32 %v5593, %v5567
      %v5595 = vadd.f32 %v5594, %v5569
      %v5596 = vadd.f32 %v5595, %v5571
      %v5597 = vadd.f32 %v5596, %v5573
      %v5598 = vrot.slane %v5597, 4
      %v5599 = vadd.f32 %v5597, %v5598
      %v5600 = vrot.slane %v5599, 2
      %v5601 = vadd.f32 %v5599, %v5600
      %v5602 = vrot.slane %v5601, 1
      %v5603 = vadd.f32 %v5601, %v5602
      %v5604 = vadd.f32 %v5560, %v5562
      %v5605 = vadd.f32 %v5604, %v5564
      %v5606 = vadd.f32 %v5605, %v5566
      %v5607 = vadd.f32 %v5606, %v5568
      %v5608 = vadd.f32 %v5607, %v5570
      %v5609 = vadd.f32 %v5608, %v5572
      %v5610 = vadd.f32 %v5609, %v5574
      %v5611 = vrot.slane %v5610, 4
      %v5612 = vadd.f32 %v5610, %v5611
      %v5613 = vrot.slane %v5612, 2
      %v5614 = vadd.f32 %v5612, %v5613
      %v5615 = vrot.slane %v5614, 1
      %v5616 = vadd.f32 %v5614, %v5615
      %v5617 = vadd.f32 %v5575, %v5577
      %v5618 = vadd.f32 %v5617, %v5579
      %v5619 = vadd.f32 %v5618, %v5581
      %v5620 = vadd.f32 %v5619, %v5583
      %v5621 = vadd.f32 %v5620, %v5585
      %v5622 = vadd.f32 %v5621, %v5587
      %v5623 = vadd.f32 %v5622, %v5589
      %v5624 = vrot.slane %v5623, 4
      %v5625 = vadd.f32 %v5623, %v5624
      %v5626 = vrot.slane %v5625, 2
      %v5627 = vadd.f32 %v5625, %v5626
      %v5628 = vrot.slane %v5627, 1
      %v5629 = vadd.f32 %v5627, %v5628
      %v5630 = vadd.f32 %v5576, %v5578
      %v5631 = vadd.f32 %v5630, %v5580
      %v5632 = vadd.f32 %v5631, %v5582
      %v5633 = vadd.f32 %v5632, %v5584
      %v5634 = vadd.f32 %v5633, %v5586
      %v5635 = vadd.f32 %v5634, %v5588
      %v5636 = vadd.f32 %v5635, %v5590
      %v5637 = vrot.slane %v5636, 4
      %v5638 = vadd.f32 %v5636, %v5637
      %v5639 = vrot.slane %v5638, 2
      %v5640 = vadd.f32 %v5638, %v5639
      %v5641 = vrot.slane %v5640, 1
      %v5642 = vadd.f32 %v5640, %v5641
      %v5643 = vrcp.pop 64.0
      %v5644 = vmul.f32 64.0, %v5643
      %v5645 = vsub.f32 1.0, %v5644
      %v5646 = vmul.f32 %v5643, %v5645
      %v5647 = vadd.f32 %v5643, %v5646
      %vm5648 = vweird.f32 %v5643
      %v5649 = vsel %vm5648, %v5643, %v5647
      %v5650 = vmul.f32 %v5603, %v5649
      %v5651 = vmul.f32 %v5616, %v5649
      %v5652 = vmul.f32 %v5629, %v5649
      %v5653 = vmul.f32 %v5642, %v5649
      %v5658 = vrot.slane %v5651, 6
      %v5659 = vrot.slane %v5653, 6
      %v5660 = vsel %vm573, %v5650, %v5658
      %v5661 = vsel %vm573, %v5652, %v5659
      %v5662 = vsel %vm3620, %v5660, %v5660
      %v5663 = vsel %vm3624, %v5660, %v5662
      %v5664 = vrot.slane %v5661, 7
      %v5665 = vsel %vm3614, %v5664, %v5663
      %v5666 = vsel %vm3618, %v5664, %v5665
      %v5667 = vsel %vm3622, %v5664, %v5666
      %v5668 = vsel %vm3626, %v5664, %v5667
      %5670 = vst [vmem:[%s226] sm:$0xf] %v5668
      %p5671 = scmp.lt.s32.totalorder %s16, 1
      %s5672 = scalar_select %p5671, %s16, 1
      %s5673 = smul.addr %s5672, 2
      %s5674 = smul.addr %s5673, 2
      %s5675 = scalar_lea.vmem %s5, %s5674
      // Predicated region
      $region41: #{_lambda_.2} parent=39 // pred_check
        %p5676 = pneg %p144
      $region42: #{_lambda_.2} parent=39 // pred_check_branch
        %5678 = sbr.rel (%p5676) target = $region44
      $region43: #{_lambda_.2} parent=39 // pred_region
        _
      $region44: #{_lambda_.2} parent=39 // pred_fallthru
        _
    $region40: #{_lambda_.2} parent=5 // pred_fallthru
      _
    %p5679 = scmp.le.s32.totalorder 2, %s11
    // Predicated region
    $region45: #{_lambda_.2} parent=5 // pred_check
      %p5680 = pneg %p5679
    $region46: #{_lambda_.2} parent=5 // pred_check_branch
      %5682 = sbr.rel (%p5680) target = $region48
    $region47: #{_lambda_.2} parent=5 // pred_region
      %s5683 = ssub.s32 %s11, 2
      // Predicated region
      $region49: #{_lambda_.2} parent=47 // pred_check
        %p5684 = pneg %p150
      $region50: #{_lambda_.2} parent=47 // pred_check_branch
        %5686 = sbr.rel (%p5684) target = $region52
      $region51: #{_lambda_.2} parent=47 // pred_region
        %p5687 = scmp.lt.s32.totalorder %s17, 1
        %s5688 = scalar_select %p5687, %s17, 1
        %s5689 = smul.addr %s5688, 2
        %s5690 = smul.addr %s5689, 2
        %s5691 = scalar_lea.vmem %s5, %s5690
      $region52: #{_lambda_.2} parent=47 // pred_fallthru
        _
    $region48: #{_lambda_.2} parent=5 // pred_fallthru
      _
  $region6: #{_lambda_.2} parent=0 // loop_footer
    %s15 = sadd.s32 1, %s11
  $region7: #{_lambda_.2} parent=0 // loop_footer_branch
    %10 = sbr.rel target = $region3
  $region8: #{_lambda_.2} parent=0 // loop_exit
    _

</llo_original>
